<compile_context>
chip_gen: v5e
topology: v5e:2x2
jax: 0.10.0
libtpu: 0.0.40
codegen_flags: <defaults>
</compile_context>

<pallas_src>
import functools

import jax
import jax.numpy as jnp
from jax.experimental import pallas as pl
from jax.experimental.pallas import tpu as pltpu


ENC_STACK_KEYS = ("wqkv", "bqkv", "wo", "bo",
                  "g1", "be1", "w1", "b1", "w2", "b2", "g2", "be2")
DEC_STACK_KEYS = ("sa_wqkv", "sa_bqkv", "sa_wo", "sa_bo", "g0", "be0",
                  "ca_wq", "ca_bq", "ca_wkv", "ca_bkv", "ca_wo", "ca_bo",
                  "g1", "be1", "w1", "b1", "w2", "b2", "g2", "be2")

# Safe across v5e/v6e (128 MiB physical) and v7x (64 MiB physical).
_VMEM_LIMIT = 48 * 1024 * 1024


# ---------------------------------------------------------------------------
# In-kernel helpers
# ---------------------------------------------------------------------------
def _layer_norm(x, g, b, eps=1e-5):
    mu = jnp.mean(x, axis=-1, keepdims=True)
    var = jnp.mean((x - mu) ** 2, axis=-1, keepdims=True)
    return (x - mu) * jax.lax.rsqrt(var + eps) * g + b


def _attention(q, k, v, num_heads, scale):
    """q:(Sq,E) k,v:(Sk,E) f32 -> (Sq,E) f32 for one batch element.

    Head-batched einsums; no Python batch loop / concat (one batch element per grid
    step).  Kept in f32: head_dim is tiny here, so these are not the MXU-relevant
    matmuls at these shapes.
    """
    Sq, E = q.shape
    Sk = k.shape[0]
    D = E // num_heads
    qh = q.reshape(Sq, num_heads, D)
    kh = k.reshape(Sk, num_heads, D)
    vh = v.reshape(Sk, num_heads, D)
    s = jnp.einsum("qhd,khd->hqk", qh, kh, preferred_element_type=jnp.float32) * scale
    s = s - jnp.max(s, axis=-1, keepdims=True)
    p = jnp.exp(s)
    att = p * pl.reciprocal(jnp.sum(p, axis=-1, keepdims=True), approx=True)
    ctx = jnp.einsum("hqk,khd->qhd", att, vh, preferred_element_type=jnp.float32)
    return ctx.reshape(Sq, E)


def _proj(x_bf16, w_bf16, b_f32):
    """bf16 x bf16 matmul with f32 accumulation + f32 bias."""
    return jnp.dot(x_bf16, w_bf16, preferred_element_type=jnp.float32) + b_f32


# ---------------------------------------------------------------------------
# Fused encoder-stack kernel: all layers in one kernel, one batch element/step.
# ---------------------------------------------------------------------------
def encoder_stack_kernel(x_ref,
                         wqkv, bqkv, wo, bo, g1, be1, w1, b1, w2, b2, g2, be2,
                         o_ref, *, num_heads, eps=1e-5):
    _, S, E = x_ref.shape
    L = wqkv.shape[0]
    H = num_heads
    scale = 1.0 / float(E) ** 0.5

    x = x_ref[0]                                   # (S, E) f32 activations, stay in VMEM
    for l in range(L):                             # static unroll: L is small (LLO visibility)
        xb = x.astype(jnp.bfloat16)
        # Q/K/V split on a leading axis of the stacked weight -> no lane slices.
        q = _proj(xb, wqkv[l, 0], bqkv[l, 0])
        k = _proj(xb, wqkv[l, 1], bqkv[l, 1])
        v = _proj(xb, wqkv[l, 2], bqkv[l, 2])
        ctx = _attention(q, k, v, H, scale)
        a = _proj(ctx.astype(jnp.bfloat16), wo[l], bo[l])
        z = _layer_norm(a + x, g1[l], be1[l], eps)                     # dropout == identity
        h = jnp.maximum(_proj(z.astype(jnp.bfloat16), w1[l], b1[l]), 0.0)
        ff = _proj(h.astype(jnp.bfloat16), w2[l], b2[l])
        x = _layer_norm(ff + z, g2[l], be2[l], eps)                    # dropout == identity
    o_ref[0] = x.astype(o_ref.dtype)               # bf16 inter-kernel activation


# ---------------------------------------------------------------------------
# Fused decoder-stack kernel (self-attn + cross-attn + FFN, all layers).
# ---------------------------------------------------------------------------
def decoder_stack_kernel(y_ref, enc_ref,
                         sa_wqkv, sa_bqkv, sa_wo, sa_bo, g0, be0,
                         ca_wq, ca_bq, ca_wkv, ca_bkv, ca_wo, ca_bo,
                         g1, be1, w1, b1, w2, b2, g2, be2,
                         o_ref, *, num_heads, eps=1e-5):
    _, St, E = y_ref.shape
    Ss = enc_ref.shape[1]
    L = sa_wqkv.shape[0]
    H = num_heads
    scale = 1.0 / float(E) ** 0.5

    x = y_ref[0]                                   # (St, E) f32
    enc = enc_ref[0]                               # (Ss, E) bf16, only used as matmul operand

    for l in range(L):
        # ---- decoder self-attention (trg_mask never applied in reference) ----
        xb = x.astype(jnp.bfloat16)
        q = _proj(xb, sa_wqkv[l, 0], sa_bqkv[l, 0])
        k = _proj(xb, sa_wqkv[l, 1], sa_bqkv[l, 1])
        v = _proj(xb, sa_wqkv[l, 2], sa_bqkv[l, 2])
        sa_ctx = _attention(q, k, v, H, scale)
        sa_out = _proj(sa_ctx.astype(jnp.bfloat16), sa_wo[l], sa_bo[l])
        query = _layer_norm(sa_out + x, g0[l], be0[l], eps)            # dropout == identity

        # ---- cross attention: Q from decoder query, K/V from encoder output ----
        qc = _proj(query.astype(jnp.bfloat16), ca_wq[l], ca_bq[l])
        kc = _proj(enc, ca_wkv[l, 0], ca_bkv[l, 0])
        vc = _proj(enc, ca_wkv[l, 1], ca_bkv[l, 1])
        ca_ctx = _attention(qc, kc, vc, H, scale)
        ca_out = _proj(ca_ctx.astype(jnp.bfloat16), ca_wo[l], ca_bo[l])

        z = _layer_norm(ca_out + query, g1[l], be1[l], eps)
        h = jnp.maximum(_proj(z.astype(jnp.bfloat16), w1[l], b1[l]), 0.0)
        ff = _proj(h.astype(jnp.bfloat16), w2[l], b2[l])
        x = _layer_norm(ff + z, g2[l], be2[l], eps)
    o_ref[0] = x.astype(o_ref.dtype)               # bf16 inter-kernel activation


def linear_kernel(x_ref, w_ref, b_ref, o_ref):
    o_ref[...] = jnp.dot(x_ref[...].astype(jnp.bfloat16), w_ref[...],
                         preferred_element_type=jnp.float32) + b_ref[...]


# ---------------------------------------------------------------------------
# pallas_call wrappers
# ---------------------------------------------------------------------------
def _param_bytes(arrays):
    return int(sum(int(a.size) * a.dtype.itemsize for a in arrays))


def _full_spec(a):
    """Whole array as one block; constant block index -> resident across grid steps."""
    return pl.BlockSpec(a.shape, lambda b, _nd=a.ndim: (0,) * _nd)


def encoder_stack(x, p, num_heads):
    N, S, E = x.shape
    L = int(p["wqkv"].shape[0])
    F = int(p["w1"].shape[-1])
    plist = [p[k] for k in ENC_STACK_KEYS]

    flops = N * L * (8 * S * E * E + 4 * S * E * F + 4 * S * S * E)
    transc = N * L * (num_heads * S * S + 2 * S)
    bytes_acc = N * S * E * (4 + 2) + _param_bytes(plist)

    return pl.pallas_call(
        functools.partial(encoder_stack_kernel, num_heads=num_heads),
        out_shape=jax.ShapeDtypeStruct((N, S, E), jnp.bfloat16),
        grid_spec=pltpu.PrefetchScalarGridSpec(
            num_scalar_prefetch=0,
            grid=(N,),                                    # one batch element per step
            in_specs=[pl.BlockSpec((1, S, E), lambda b: (b, 0, 0))]
                     + [_full_spec(a) for a in plist],
            out_specs=pl.BlockSpec((1, S, E), lambda b: (b, 0, 0)),
        ),
        compiler_params=pltpu.CompilerParams(
            dimension_semantics=("parallel",),            # >=2 parallel steps -> both v7x TCs
            vmem_limit_bytes=_VMEM_LIMIT,
        ),
        cost_estimate=pl.CostEstimate(flops=int(flops), transcendentals=int(transc),
                                      bytes_accessed=int(bytes_acc)),
    )(x, *plist)


def decoder_stack(y, enc_out, p, num_heads):
    N, St, E = y.shape
    Ss = enc_out.shape[1]
    L = int(p["sa_wqkv"].shape[0])
    F = int(p["w1"].shape[-1])
    plist = [p[k] for k in DEC_STACK_KEYS]

    flops = N * L * (8 * St * E * E + 4 * St * St * E
                     + 4 * St * E * E + 4 * Ss * E * E + 4 * St * Ss * E
                     + 4 * St * E * F)
    transc = N * L * (num_heads * (St * St + St * Ss) + 3 * St)
    bytes_acc = N * (St * E * 4 + Ss * E * 2 + St * E * 2) + _param_bytes(plist)

    return pl.pallas_call(
        functools.partial(decoder_stack_kernel, num_heads=num_heads),
        out_shape=jax.ShapeDtypeStruct((N, St, E), jnp.bfloat16),
        grid_spec=pltpu.PrefetchScalarGridSpec(
            num_scalar_prefetch=0,
            grid=(N,),
            in_specs=[pl.BlockSpec((1, St, E), lambda b: (b, 0, 0)),
                      pl.BlockSpec((1, Ss, E), lambda b: (b, 0, 0))]
                     + [_full_spec(a) for a in plist],
            out_specs=pl.BlockSpec((1, St, E), lambda b: (b, 0, 0)),
        ),
        compiler_params=pltpu.CompilerParams(
            dimension_semantics=("parallel",),
            vmem_limit_bytes=_VMEM_LIMIT,
        ),
        cost_estimate=pl.CostEstimate(flops=int(flops), transcendentals=int(transc),
                                      bytes_accessed=int(bytes_acc)),
    )(y, enc_out, *plist)


def final_linear(x_rows, w, b, *, tn=128):
    """(R,E) bf16 @ (E,Vp) bf16 + (1,Vp) f32, tiled over the (128-padded) vocab axis.

    Output blocks are (R, 128): lane-dense, unmasked full-vreg stores.
    """
    R, E = x_rows.shape
    Vp = w.shape[1]
    assert Vp % tn == 0
    grid = (Vp // tn,)
    # TODO(synk): at realistic vocab / row counts also tile R (128-multiples) and add a
    #             K grid axis with a VMEM f32 accumulator (pl.when init/finalize).
    return pl.pallas_call(
        linear_kernel,
        out_shape=jax.ShapeDtypeStruct((R, Vp), jnp.float32),
        grid_spec=pltpu.PrefetchScalarGridSpec(
            num_scalar_prefetch=0,
            grid=grid,
            in_specs=[pl.BlockSpec((R, E), lambda j: (0, 0)),
                      pl.BlockSpec((E, tn), lambda j: (0, j)),
                      pl.BlockSpec((1, tn), lambda j: (0, j))],
            out_specs=pl.BlockSpec((R, tn), lambda j: (0, j)),
        ),
        compiler_params=pltpu.CompilerParams(
            dimension_semantics=("parallel",),
            vmem_limit_bytes=_VMEM_LIMIT,
        ),
        cost_estimate=pl.CostEstimate(
            flops=int(2 * R * E * Vp), transcendentals=0,
            bytes_accessed=int(R * E * 2 + E * Vp * 2 + R * Vp * 4 + Vp * 4)),
    )(x_rows, w, b)


# ---------------------------------------------------------------------------
# Full Transformer forward (embedding gathers are glue; stacks run in Pallas).
# ---------------------------------------------------------------------------
def transformer_forward(src, trg, params, num_heads, src_pad_idx=0, trg_pad_idx=0):
    N, Ss = src.shape
    _, St = trg.shape
    ep, dp = params["encoder"], params["decoder"]

    # API-parity masks; SelfAttention.forward never applies them in the reference.
    _src_mask = (src != src_pad_idx)[:, None, None, :]
    _trg_mask = jnp.broadcast_to(jnp.tril(jnp.ones((St, St), jnp.float32)), (N, 1, St, St))
    del _src_mask, _trg_mask  # TODO(synk): masks intentionally unused (matches reference).

    # encoder: embeddings (gather) + fused layer stack
    x = ep["word_emb"][src] + ep["pos_emb"][jnp.arange(Ss, dtype=jnp.int32)][None]
    enc_out = encoder_stack(x, ep["stack"], num_heads)            # (N, Ss, E) bf16

    # decoder: embeddings (gather) + fused layer stack
    y = dp["word_emb"][trg] + dp["pos_emb"][jnp.arange(St, dtype=jnp.int32)][None]
    dec_out = decoder_stack(y, enc_out, dp["stack"], num_heads)   # (N, St, E) bf16

    E = dec_out.shape[-1]
    V = dp["vocab_size"]
    logits_p = final_linear(dec_out.reshape(N * St, E), dp["fc_out_w"], dp["fc_out_b"])
    return logits_p[:, :V].reshape(N, St, V)


# ---------------------------------------------------------------------------
# Pure-JAX reference (mirrors kernel precision: bf16 matmul operands, f32 accum).
# ---------------------------------------------------------------------------
def _ref_linear(x, w, b):
    return jnp.dot(x.astype(jnp.bfloat16), w, preferred_element_type=jnp.float32) + b


def _ref_ln(x, g, b, eps=1e-5):
    mu = jnp.mean(x, axis=-1, keepdims=True)
    var = jnp.mean((x - mu) ** 2, axis=-1, keepdims=True)
    return (x - mu) * jax.lax.rsqrt(var + eps) * g + b


def _ref_mha(q, k, v, E):
    scale = 1.0 / float(E) ** 0.5
    energy = jnp.einsum("nqhd,nkhd->nhqk", q, k, preferred_element_type=jnp.float32)
    att = jax.nn.softmax(energy * scale, axis=-1)
    ctx = jnp.einsum("nhqk,nkhd->nqhd", att, v, preferred_element_type=jnp.float32)
    N, Sq, H, D = q.shape
    return ctx.reshape(N, Sq, H * D)


def _ref_encoder_stack(x, p, H):
    N, S, E = x.shape
    D = E // H
    L = p["wqkv"].shape[0]
    for l in range(L):
        rows = x.reshape(N * S, E)
        q = _ref_linear(rows, p["wqkv"][l, 0], p["bqkv"][l, 0]).reshape(N, S, H, D)
        k = _ref_linear(rows, p["wqkv"][l, 1], p["bqkv"][l, 1]).reshape(N, S, H, D)
        v = _ref_linear(rows, p["wqkv"][l, 2], p["bqkv"][l, 2]).reshape(N, S, H, D)
        ctx = _ref_mha(q, k, v, E).reshape(N * S, E)
        a = _ref_linear(ctx, p["wo"][l], p["bo"][l])
        z = _ref_ln(a + rows, p["g1"][l], p["be1"][l])
        h = jax.nn.relu(_ref_linear(z, p["w1"][l], p["b1"][l]))
        ff = _ref_linear(h, p["w2"][l], p["b2"][l])
        x = _ref_ln(ff + z, p["g2"][l], p["be2"][l]).reshape(N, S, E)
    return x


def _ref_decoder_stack(y, enc_out, p, H):
    N, St, E = y.shape
    Ss = enc_out.shape[1]
    D = E // H
    L = p["sa_wqkv"].shape[0]
    enc_rows = enc_out.reshape(N * Ss, E)
    x = y
    for l in range(L):
        rows = x.reshape(N * St, E)
        q = _ref_linear(rows, p["sa_wqkv"][l, 0], p["sa_bqkv"][l, 0]).reshape(N, St, H, D)
        k = _ref_linear(rows, p["sa_wqkv"][l, 1], p["sa_bqkv"][l, 1]).reshape(N, St, H, D)
        v = _ref_linear(rows, p["sa_wqkv"][l, 2], p["sa_bqkv"][l, 2]).reshape(N, St, H, D)
        sa_ctx = _ref_mha(q, k, v, E).reshape(N * St, E)
        sa_out = _ref_linear(sa_ctx, p["sa_wo"][l], p["sa_bo"][l])
        query = _ref_ln(sa_out + rows, p["g0"][l], p["be0"][l])

        qc = _ref_linear(query, p["ca_wq"][l], p["ca_bq"][l]).reshape(N, St, H, D)
        kc = _ref_linear(enc_rows, p["ca_wkv"][l, 0], p["ca_bkv"][l, 0]).reshape(N, Ss, H, D)
        vc = _ref_linear(enc_rows, p["ca_wkv"][l, 1], p["ca_bkv"][l, 1]).reshape(N, Ss, H, D)
        ca_ctx = _ref_mha(qc, kc, vc, E).reshape(N * St, E)
        ca_out = _ref_linear(ca_ctx, p["ca_wo"][l], p["ca_bo"][l])

        z = _ref_ln(ca_out + query, p["g1"][l], p["be1"][l])
        h = jax.nn.relu(_ref_linear(z, p["w1"][l], p["b1"][l]))
        ff = _ref_linear(h, p["w2"][l], p["b2"][l])
        x = _ref_ln(ff + z, p["g2"][l], p["be2"][l]).reshape(N, St, E)
    return x


def transformer_reference(src, trg, params, num_heads):
    ep, dp = params["encoder"], params["decoder"]
    N, Ss = src.shape
    _, St = trg.shape
    x = ep["word_emb"][src] + ep["pos_emb"][jnp.arange(Ss)][None]
    enc_out = _ref_encoder_stack(x, ep["stack"], num_heads)
    y = dp["word_emb"][trg] + dp["pos_emb"][jnp.arange(St)][None]
    dec_out = _ref_decoder_stack(y, enc_out, dp["stack"], num_heads)
    E = dec_out.shape[-1]
    V = dp["vocab_size"]
    logits_p = _ref_linear(dec_out.reshape(N * St, E), dp["fc_out_w"], dp["fc_out_b"])
    return logits_p[:, :V].reshape(N, St, V)


# ---------------------------------------------------------------------------
# Deterministic parameter init (shapes follow the nn.Module __init__; linear
# weights pre-transposed to (in,out), stacked per layer, stored in bf16;
# biases / LN params in f32; fc_out padded to a 128-multiple vocab).
# ---------------------------------------------------------------------------
def _init_linear(key, fan_in, fan_out):
    k1, k2 = jax.random.split(key)
    bound = 1.0 / float(fan_in) ** 0.5
    w = jax.random.uniform(k1, (fan_in, fan_out), jnp.float32, -bound, bound)
    b = jax.random.uniform(k2, (1, fan_out), jnp.float32, -bound, bound)
    return w.astype(jnp.bfloat16), b


def _init_ln(key, E):
    k1, k2 = jax.random.split(key)
    g = 1.0 + 0.1 * jax.random.normal(k1, (1, E), jnp.float32)
    be = 0.1 * jax.random.normal(k2, (1, E), jnp.float32)
    return g, be


def init_transformer_params(key, src_vocab, trg_vocab, max_len, E, num_layers, fwd_exp):
    F = fwd_exp * E
    keys = jax.random.split(key, 8)

    # ----- encoder -----
    enc_layers = []
    for li in range(num_layers):
        lk = jax.random.split(jax.random.fold_in(keys[2], li), 8)
        wq, bq = _init_linear(lk[0], E, E)
        wk, bk = _init_linear(lk[1], E, E)
        wv, bv = _init_linear(lk[2], E, E)
        wo, bo = _init_linear(lk[3], E, E)
        w1, b1 = _init_linear(lk[4], E, F)
        w2, b2 = _init_linear(lk[5], F, E)
        g1, be1 = _init_ln(lk[6], E)
        g2, be2 = _init_ln(lk[7], E)
        enc_layers.append(dict(
            wqkv=jnp.stack([wq, wk, wv]),          # (3,E,E) bf16
            bqkv=jnp.stack([bq, bk, bv]),          # (3,1,E) f32
            wo=wo, bo=bo, g1=g1, be1=be1,
            w1=w1, b1=b1, w2=w2, b2=b2, g2=g2, be2=be2))
    enc_stack = {k: jnp.stack([lyr[k] for lyr in enc_layers]) for k in ENC_STACK_KEYS}
    enc = {"word_emb": jax.random.normal(keys[0], (src_vocab, E), jnp.float32),
           "pos_emb": jax.random.normal(keys[1], (max_len, E), jnp.float32),
           "stack": enc_stack}

    # ----- decoder -----
    dec_layers = []
    for li in range(num_layers):
        lk = jax.random.split(jax.random.fold_in(keys[5], li), 13)
        sa_wq, sa_bq = _init_linear(lk[0], E, E)
        sa_wk, sa_bk = _init_linear(lk[1], E, E)
        sa_wv, sa_bv = _init_linear(lk[2], E, E)
        sa_wo, sa_bo = _init_linear(lk[3], E, E)
        g0, be0 = _init_ln(lk[4], E)
        ca_wq, ca_bq = _init_linear(lk[5], E, E)
        ca_wk, ca_bk = _init_linear(lk[6], E, E)
        ca_wv, ca_bv = _init_linear(lk[7], E, E)
        ca_wo, ca_bo = _init_linear(lk[8], E, E)
        w1, b1 = _init_linear(lk[9], E, F)
        w2, b2 = _init_linear(lk[10], F, E)
        g1, be1 = _init_ln(lk[11], E)
        g2, be2 = _init_ln(lk[12], E)
        dec_layers.append(dict(
            sa_wqkv=jnp.stack([sa_wq, sa_wk, sa_wv]), sa_bqkv=jnp.stack([sa_bq, sa_bk, sa_bv]),
            sa_wo=sa_wo, sa_bo=sa_bo, g0=g0, be0=be0,
            ca_wq=ca_wq, ca_bq=ca_bq,
            ca_wkv=jnp.stack([ca_wk, ca_wv]), ca_bkv=jnp.stack([ca_bk, ca_bv]),
            ca_wo=ca_wo, ca_bo=ca_bo,
            g1=g1, be1=be1, w1=w1, b1=b1, w2=w2, b2=b2, g2=g2, be2=be2))
    dec_stack = {k: jnp.stack([lyr[k] for lyr in dec_layers]) for k in DEC_STACK_KEYS}

    fc_w, fc_b = _init_linear(keys[6], E, trg_vocab)
    Vp = -(-trg_vocab // 128) * 128                      # pad vocab to a 128-multiple
    fc_w = jnp.pad(fc_w, ((0, 0), (0, Vp - trg_vocab)))
    fc_b = jnp.pad(fc_b, ((0, 0), (0, Vp - trg_vocab)))

    dec = {"word_emb": jax.random.normal(keys[3], (trg_vocab, E), jnp.float32),
           "pos_emb": jax.random.normal(keys[4], (max_len, E), jnp.float32),
           "stack": dec_stack,
           "fc_out_w": fc_w, "fc_out_b": fc_b, "vocab_size": trg_vocab}

    return {"encoder": enc, "decoder": dec}


if __name__ == "__main__":
    # Small, module-consistent shapes.
    SRC_VOCAB, TRG_VOCAB = 50, 60
    SRC_PAD, TRG_PAD = 0, 0
    MAX_LEN = 16
    EMBED = 32
    NUM_HEADS = 4
    NUM_LAYERS = 2
    FWD_EXP = 4
    N, S_SRC, S_TRG = 2, 8, 8

    root = jax.random.PRNGKey(0)
    k_params, k_src, k_trg = jax.random.split(root, 3)

    params = init_transformer_params(k_params, SRC_VOCAB, TRG_VOCAB, MAX_LEN,
                                     EMBED, NUM_LAYERS, FWD_EXP)
    src = jax.random.randint(k_src, (N, S_SRC), 1, SRC_VOCAB, dtype=jnp.int32)
    trg = jax.random.randint(k_trg, (N, S_TRG), 1, TRG_VOCAB, dtype=jnp.int32)

    logits = transformer_forward(src, trg, params, NUM_HEADS,
                                 src_pad_idx=SRC_PAD, trg_pad_idx=TRG_PAD)
    logits = jax.block_until_ready(logits)

    ref = transformer_reference(src, trg, params, NUM_HEADS)
    assert logits.shape == (N, S_TRG, TRG_VOCAB)
    # Tolerance covers pl.reciprocal(approx=True) in the in-kernel softmax.
    assert jnp.allclose(logits, ref, atol=2e-2, rtol=2e-2), \
        "Pallas output mismatch vs JAX reference"

    print("KERNEL_OK")
</pallas_src>

<mosaic_0001>
module attributes {stable_mosaic.version = 11 : i64} {
  func.func @encoder_stack_kernel(%arg0: i32, %arg1: memref<1x8x32xf32, #tpu.memory_space<vmem>>, %arg2: memref<2x3x32x32xbf16, #tpu.memory_space<vmem>>, %arg3: memref<2x3x1x32xf32, #tpu.memory_space<vmem>>, %arg4: memref<2x32x32xbf16, #tpu.memory_space<vmem>>, %arg5: memref<2x1x32xf32, #tpu.memory_space<vmem>>, %arg6: memref<2x1x32xf32, #tpu.memory_space<vmem>>, %arg7: memref<2x1x32xf32, #tpu.memory_space<vmem>>, %arg8: memref<2x32x128xbf16, #tpu.memory_space<vmem>>, %arg9: memref<2x1x128xf32, #tpu.memory_space<vmem>>, %arg10: memref<2x128x32xbf16, #tpu.memory_space<vmem>>, %arg11: memref<2x1x32xf32, #tpu.memory_space<vmem>>, %arg12: memref<2x1x32xf32, #tpu.memory_space<vmem>>, %arg13: memref<2x1x32xf32, #tpu.memory_space<vmem>>, %arg14: memref<1x8x32xbf16, #tpu.memory_space<vmem>>) attributes {dimension_semantics = [#tpu.dimension_semantics<parallel>], iteration_bounds = array<i64: 2>, scalar_prefetch = 0 : i64, scratch_operands = 0 : i64, tpu.core_type = #tpu.core_type<tc>, window_params = [{transform_indices = @transform_0, window_bounds = array<i64: 1, 8, 32>}, {pipeline_mode = #tpu.pipeline_mode<synchronous>, transform_indices = @transform_1, window_bounds = array<i64: 2, 3, 32, 32>}, {pipeline_mode = #tpu.pipeline_mode<synchronous>, transform_indices = @transform_2, window_bounds = array<i64: 2, 3, 1, 32>}, {pipeline_mode = #tpu.pipeline_mode<synchronous>, transform_indices = @transform_3, window_bounds = array<i64: 2, 32, 32>}, {pipeline_mode = #tpu.pipeline_mode<synchronous>, transform_indices = @transform_4, window_bounds = array<i64: 2, 1, 32>}, {pipeline_mode = #tpu.pipeline_mode<synchronous>, transform_indices = @transform_5, window_bounds = array<i64: 2, 1, 32>}, {pipeline_mode = #tpu.pipeline_mode<synchronous>, transform_indices = @transform_6, window_bounds = array<i64: 2, 1, 32>}, {pipeline_mode = #tpu.pipeline_mode<synchronous>, transform_indices = @transform_7, window_bounds = array<i64: 2, 32, 128>}, {pipeline_mode = #tpu.pipeline_mode<synchronous>, transform_indices = @transform_8, window_bounds = array<i64: 2, 1, 128>}, {pipeline_mode = #tpu.pipeline_mode<synchronous>, transform_indices = @transform_9, window_bounds = array<i64: 2, 128, 32>}, {pipeline_mode = #tpu.pipeline_mode<synchronous>, transform_indices = @transform_10, window_bounds = array<i64: 2, 1, 32>}, {pipeline_mode = #tpu.pipeline_mode<synchronous>, transform_indices = @transform_11, window_bounds = array<i64: 2, 1, 32>}, {pipeline_mode = #tpu.pipeline_mode<synchronous>, transform_indices = @transform_12, window_bounds = array<i64: 2, 1, 32>}, {transform_indices = @transform_13, window_bounds = array<i64: 1, 8, 32>}]} {
    %c0 = arith.constant 0 : index
    %c0_0 = arith.constant 0 : index
    %c0_1 = arith.constant 0 : index
    %0 = vector.load %arg1[%c0, %c0_0, %c0_1] : memref<1x8x32xf32, #tpu.memory_space<vmem>>, vector<1x8x32xf32>
    %1 = vector.shape_cast %0 : vector<1x8x32xf32> to vector<8x32xf32>
    %2 = arith.truncf %1 : vector<8x32xf32> to vector<8x32xbf16>
    %c0_2 = arith.constant 0 : index
    %c0_3 = arith.constant 0 : index
    %c0_4 = arith.constant 0 : index
    %c0_5 = arith.constant 0 : index
    %3 = vector.load %arg2[%c0_2, %c0_3, %c0_4, %c0_5] : memref<2x3x32x32xbf16, #tpu.memory_space<vmem>>, vector<1x1x32x32xbf16>
    %4 = vector.shape_cast %3 : vector<1x1x32x32xbf16> to vector<32x32xbf16>
    %c0_6 = arith.constant 0 : index
    %c0_7 = arith.constant 0 : index
    %c0_8 = arith.constant 0 : index
    %c0_9 = arith.constant 0 : index
    %5 = vector.load %arg3[%c0_6, %c0_7, %c0_8, %c0_9] : memref<2x3x1x32xf32, #tpu.memory_space<vmem>>, vector<1x1x1x32xf32>
    %6 = vector.shape_cast %5 : vector<1x1x1x32xf32> to vector<1x32xf32>
    %cst = arith.constant dense<0.000000e+00> : vector<8x32xf32>
    %7 = tpu.matmul %2, %4, %cst {dimension_numbers = #tpu.dot_dimension_numbers<[1], [0], [0], [1], [0, 0, 1, 1], [], []>} : vector<8x32xbf16>, vector<32x32xbf16>, vector<8x32xf32> -> vector<8x32xf32>
    %8 = vector.broadcast %6 : vector<1x32xf32> to vector<8x32xf32>
    %9 = arith.addf %7, %8 : vector<8x32xf32>
    %c0_10 = arith.constant 0 : index
    %c1 = arith.constant 1 : index
    %c0_11 = arith.constant 0 : index
    %c0_12 = arith.constant 0 : index
    %10 = vector.load %arg2[%c0_10, %c1, %c0_11, %c0_12] : memref<2x3x32x32xbf16, #tpu.memory_space<vmem>>, vector<1x1x32x32xbf16>
    %11 = vector.shape_cast %10 : vector<1x1x32x32xbf16> to vector<32x32xbf16>
    %c0_13 = arith.constant 0 : index
    %c1_14 = arith.constant 1 : index
    %c0_15 = arith.constant 0 : index
    %c0_16 = arith.constant 0 : index
    %12 = vector.load %arg3[%c0_13, %c1_14, %c0_15, %c0_16] : memref<2x3x1x32xf32, #tpu.memory_space<vmem>>, vector<1x1x1x32xf32>
    %13 = vector.shape_cast %12 : vector<1x1x1x32xf32> to vector<1x32xf32>
    %cst_17 = arith.constant dense<0.000000e+00> : vector<8x32xf32>
    %14 = tpu.matmul %2, %11, %cst_17 {dimension_numbers = #tpu.dot_dimension_numbers<[1], [0], [0], [1], [0, 0, 1, 1], [], []>} : vector<8x32xbf16>, vector<32x32xbf16>, vector<8x32xf32> -> vector<8x32xf32>
    %15 = vector.broadcast %13 : vector<1x32xf32> to vector<8x32xf32>
    %16 = arith.addf %14, %15 : vector<8x32xf32>
    %c0_18 = arith.constant 0 : index
    %c2 = arith.constant 2 : index
    %c0_19 = arith.constant 0 : index
    %c0_20 = arith.constant 0 : index
    %17 = vector.load %arg2[%c0_18, %c2, %c0_19, %c0_20] : memref<2x3x32x32xbf16, #tpu.memory_space<vmem>>, vector<1x1x32x32xbf16>
    %18 = vector.shape_cast %17 : vector<1x1x32x32xbf16> to vector<32x32xbf16>
    %c0_21 = arith.constant 0 : index
    %c2_22 = arith.constant 2 : index
    %c0_23 = arith.constant 0 : index
    %c0_24 = arith.constant 0 : index
    %19 = vector.load %arg3[%c0_21, %c2_22, %c0_23, %c0_24] : memref<2x3x1x32xf32, #tpu.memory_space<vmem>>, vector<1x1x1x32xf32>
    %20 = vector.shape_cast %19 : vector<1x1x1x32xf32> to vector<1x32xf32>
    %cst_25 = arith.constant dense<0.000000e+00> : vector<8x32xf32>
    %21 = tpu.matmul %2, %18, %cst_25 {dimension_numbers = #tpu.dot_dimension_numbers<[1], [0], [0], [1], [0, 0, 1, 1], [], []>} : vector<8x32xbf16>, vector<32x32xbf16>, vector<8x32xf32> -> vector<8x32xf32>
    %22 = vector.broadcast %20 : vector<1x32xf32> to vector<8x32xf32>
    %23 = arith.addf %21, %22 : vector<8x32xf32>
    %24 = vector.shape_cast %9 : vector<8x32xf32> to vector<8x4x8xf32>
    %25 = vector.shape_cast %16 : vector<8x32xf32> to vector<8x4x8xf32>
    %26 = vector.shape_cast %23 : vector<8x32xf32> to vector<8x4x8xf32>
    "tpu.trace_start"() <{level = 10 : i32, message = "qhd,khd->hqk"}> : () -> ()
    %cst_26 = arith.constant dense<0.000000e+00> : vector<4x8x8xf32>
    %27 = tpu.matmul %24, %25, %cst_26 {dimension_numbers = #tpu.dot_dimension_numbers<[2], [2], [0], [0], [0, 1, 0, 0, 1, 0], [1], [1]>} : vector<8x4x8xf32>, vector<8x4x8xf32>, vector<4x8x8xf32> -> vector<4x8x8xf32>
    "tpu.trace_stop"() : () -> ()
    %cst_27 = arith.constant 0.176776692 : f32
    %28 = vector.broadcast %cst_27 : f32 to vector<4x8x8xf32>
    %29 = arith.mulf %27, %28 : vector<4x8x8xf32>
    %cst_28 = arith.constant dense<0xFF800000> : vector<4x8xf32>
    %30 = vector.multi_reduction <maximumf>, %29, %cst_28 [2] : vector<4x8x8xf32> to vector<4x8xf32>
    %31 = vector.shape_cast %30 : vector<4x8xf32> to vector<4x8x1xf32>
    %32 = vector.broadcast %31 : vector<4x8x1xf32> to vector<4x8x8xf32>
    %33 = arith.subf %29, %32 : vector<4x8x8xf32>
    %34 = math.exp %33 : vector<4x8x8xf32>
    %cst_29 = arith.constant dense<0.000000e+00> : vector<4x8xf32>
    %35 = vector.multi_reduction <add>, %34, %cst_29 [2] : vector<4x8x8xf32> to vector<4x8xf32>
    %36 = vector.shape_cast %35 : vector<4x8xf32> to vector<4x8x1xf32>
    %37 = tpu.reciprocal %36 {approx = true} : vector<4x8x1xf32> -> vector<4x8x1xf32>
    %38 = vector.broadcast %37 : vector<4x8x1xf32> to vector<4x8x8xf32>
    %39 = arith.mulf %34, %38 : vector<4x8x8xf32>
    "tpu.trace_start"() <{level = 10 : i32, message = "hqk,khd->qhd"}> : () -> ()
    %cst_30 = arith.constant dense<0.000000e+00> : vector<4x8x8xf32>
    %40 = tpu.matmul %26, %39, %cst_30 {dimension_numbers = #tpu.dot_dimension_numbers<[0], [2], [2], [1], [0, 1, 0, 2, 1, 1], [1], [0]>} : vector<8x4x8xf32>, vector<4x8x8xf32>, vector<4x8x8xf32> -> vector<4x8x8xf32>
    %41 = tpu.transpose %40, [2, 0, 1] : vector<4x8x8xf32> -> vector<8x4x8xf32>
    "tpu.trace_stop"() : () -> ()
    %42 = vector.shape_cast %41 : vector<8x4x8xf32> to vector<8x32xf32>
    %43 = arith.truncf %42 : vector<8x32xf32> to vector<8x32xbf16>
    %c0_31 = arith.constant 0 : index
    %c0_32 = arith.constant 0 : index
    %c0_33 = arith.constant 0 : index
    %44 = vector.load %arg4[%c0_31, %c0_32, %c0_33] : memref<2x32x32xbf16, #tpu.memory_space<vmem>>, vector<1x32x32xbf16>
    %45 = vector.shape_cast %44 : vector<1x32x32xbf16> to vector<32x32xbf16>
    %c0_34 = arith.constant 0 : index
    %c0_35 = arith.constant 0 : index
    %c0_36 = arith.constant 0 : index
    %46 = vector.load %arg5[%c0_34, %c0_35, %c0_36] : memref<2x1x32xf32, #tpu.memory_space<vmem>>, vector<1x1x32xf32>
    %47 = vector.shape_cast %46 : vector<1x1x32xf32> to vector<1x32xf32>
    %cst_37 = arith.constant dense<0.000000e+00> : vector<8x32xf32>
    %48 = tpu.matmul %43, %45, %cst_37 {dimension_numbers = #tpu.dot_dimension_numbers<[1], [0], [0], [1], [0, 0, 1, 1], [], []>} : vector<8x32xbf16>, vector<32x32xbf16>, vector<8x32xf32> -> vector<8x32xf32>
    %49 = vector.broadcast %47 : vector<1x32xf32> to vector<8x32xf32>
    %50 = arith.addf %48, %49 : vector<8x32xf32>
    %51 = arith.addf %50, %1 : vector<8x32xf32>
    %c0_38 = arith.constant 0 : index
    %c0_39 = arith.constant 0 : index
    %c0_40 = arith.constant 0 : index
    %52 = vector.load %arg6[%c0_38, %c0_39, %c0_40] : memref<2x1x32xf32, #tpu.memory_space<vmem>>, vector<1x1x32xf32>
    %53 = vector.shape_cast %52 : vector<1x1x32xf32> to vector<1x32xf32>
    %c0_41 = arith.constant 0 : index
    %c0_42 = arith.constant 0 : index
    %c0_43 = arith.constant 0 : index
    %54 = vector.load %arg7[%c0_41, %c0_42, %c0_43] : memref<2x1x32xf32, #tpu.memory_space<vmem>>, vector<1x1x32xf32>
    %55 = vector.shape_cast %54 : vector<1x1x32xf32> to vector<1x32xf32>
    %cst_44 = arith.constant dense<0.000000e+00> : vector<8xf32>
    %56 = vector.multi_reduction <add>, %51, %cst_44 [1] : vector<8x32xf32> to vector<8xf32>
    %57 = vector.shape_cast %56 : vector<8xf32> to vector<8x1xf32>
    %cst_45 = arith.constant 3.200000e+01 : f32
    %58 = vector.broadcast %cst_45 : f32 to vector<8x1xf32>
    %59 = arith.divf %57, %58 : vector<8x1xf32>
    %60 = vector.broadcast %59 : vector<8x1xf32> to vector<8x32xf32>
    %61 = arith.subf %51, %60 : vector<8x32xf32>
    %62 = arith.mulf %61, %61 : vector<8x32xf32>
    %cst_46 = arith.constant dense<0.000000e+00> : vector<8xf32>
    %63 = vector.multi_reduction <add>, %62, %cst_46 [1] : vector<8x32xf32> to vector<8xf32>
    %64 = vector.shape_cast %63 : vector<8xf32> to vector<8x1xf32>
    %cst_47 = arith.constant 3.200000e+01 : f32
    %65 = vector.broadcast %cst_47 : f32 to vector<8x1xf32>
    %66 = arith.divf %64, %65 : vector<8x1xf32>
    %67 = vector.broadcast %59 : vector<8x1xf32> to vector<8x32xf32>
    %68 = arith.subf %51, %67 : vector<8x32xf32>
    %cst_48 = arith.constant 9.99999974E-6 : f32
    %69 = vector.broadcast %cst_48 : f32 to vector<8x1xf32>
    %70 = arith.addf %66, %69 : vector<8x1xf32>
    %71 = math.rsqrt %70 : vector<8x1xf32>
    %72 = vector.broadcast %71 : vector<8x1xf32> to vector<8x32xf32>
    %73 = arith.mulf %68, %72 : vector<8x32xf32>
    %74 = vector.broadcast %53 : vector<1x32xf32> to vector<8x32xf32>
    %75 = arith.mulf %73, %74 : vector<8x32xf32>
    %76 = vector.broadcast %55 : vector<1x32xf32> to vector<8x32xf32>
    %77 = arith.addf %75, %76 : vector<8x32xf32>
    %78 = arith.truncf %77 : vector<8x32xf32> to vector<8x32xbf16>
    %c0_49 = arith.constant 0 : index
    %c0_50 = arith.constant 0 : index
    %c0_51 = arith.constant 0 : index
    %79 = vector.load %arg8[%c0_49, %c0_50, %c0_51] : memref<2x32x128xbf16, #tpu.memory_space<vmem>>, vector<1x32x128xbf16>
    %80 = vector.shape_cast %79 : vector<1x32x128xbf16> to vector<32x128xbf16>
    %c0_52 = arith.constant 0 : index
    %c0_53 = arith.constant 0 : index
    %c0_54 = arith.constant 0 : index
    %81 = vector.load %arg9[%c0_52, %c0_53, %c0_54] : memref<2x1x128xf32, #tpu.memory_space<vmem>>, vector<1x1x128xf32>
    %82 = vector.shape_cast %81 : vector<1x1x128xf32> to vector<1x128xf32>
    %cst_55 = arith.constant dense<0.000000e+00> : vector<8x128xf32>
    %83 = tpu.matmul %78, %80, %cst_55 {dimension_numbers = #tpu.dot_dimension_numbers<[1], [0], [0], [1], [0, 0, 1, 1], [], []>} : vector<8x32xbf16>, vector<32x128xbf16>, vector<8x128xf32> -> vector<8x128xf32>
    %84 = vector.broadcast %82 : vector<1x128xf32> to vector<8x128xf32>
    %85 = arith.addf %83, %84 : vector<8x128xf32>
    %cst_56 = arith.constant 0.000000e+00 : f32
    %86 = vector.broadcast %cst_56 : f32 to vector<8x128xf32>
    %87 = arith.maximumf %85, %86 : vector<8x128xf32>
    %88 = arith.truncf %87 : vector<8x128xf32> to vector<8x128xbf16>
    %c0_57 = arith.constant 0 : index
    %c0_58 = arith.constant 0 : index
    %c0_59 = arith.constant 0 : index
    %89 = vector.load %arg10[%c0_57, %c0_58, %c0_59] : memref<2x128x32xbf16, #tpu.memory_space<vmem>>, vector<1x128x32xbf16>
    %90 = vector.shape_cast %89 : vector<1x128x32xbf16> to vector<128x32xbf16>
    %c0_60 = arith.constant 0 : index
    %c0_61 = arith.constant 0 : index
    %c0_62 = arith.constant 0 : index
    %91 = vector.load %arg11[%c0_60, %c0_61, %c0_62] : memref<2x1x32xf32, #tpu.memory_space<vmem>>, vector<1x1x32xf32>
    %92 = vector.shape_cast %91 : vector<1x1x32xf32> to vector<1x32xf32>
    %cst_63 = arith.constant dense<0.000000e+00> : vector<8x32xf32>
    %93 = tpu.matmul %88, %90, %cst_63 {dimension_numbers = #tpu.dot_dimension_numbers<[1], [0], [0], [1], [0, 0, 1, 1], [], []>} : vector<8x128xbf16>, vector<128x32xbf16>, vector<8x32xf32> -> vector<8x32xf32>
    %94 = vector.broadcast %92 : vector<1x32xf32> to vector<8x32xf32>
    %95 = arith.addf %93, %94 : vector<8x32xf32>
    %96 = arith.addf %95, %77 : vector<8x32xf32>
    %c0_64 = arith.constant 0 : index
    %c0_65 = arith.constant 0 : index
    %c0_66 = arith.constant 0 : index
    %97 = vector.load %arg12[%c0_64, %c0_65, %c0_66] : memref<2x1x32xf32, #tpu.memory_space<vmem>>, vector<1x1x32xf32>
    %98 = vector.shape_cast %97 : vector<1x1x32xf32> to vector<1x32xf32>
    %c0_67 = arith.constant 0 : index
    %c0_68 = arith.constant 0 : index
    %c0_69 = arith.constant 0 : index
    %99 = vector.load %arg13[%c0_67, %c0_68, %c0_69] : memref<2x1x32xf32, #tpu.memory_space<vmem>>, vector<1x1x32xf32>
    %100 = vector.shape_cast %99 : vector<1x1x32xf32> to vector<1x32xf32>
    %cst_70 = arith.constant dense<0.000000e+00> : vector<8xf32>
    %101 = vector.multi_reduction <add>, %96, %cst_70 [1] : vector<8x32xf32> to vector<8xf32>
    %102 = vector.shape_cast %101 : vector<8xf32> to vector<8x1xf32>
    %cst_71 = arith.constant 3.200000e+01 : f32
    %103 = vector.broadcast %cst_71 : f32 to vector<8x1xf32>
    %104 = arith.divf %102, %103 : vector<8x1xf32>
    %105 = vector.broadcast %104 : vector<8x1xf32> to vector<8x32xf32>
    %106 = arith.subf %96, %105 : vector<8x32xf32>
    %107 = arith.mulf %106, %106 : vector<8x32xf32>
    %cst_72 = arith.constant dense<0.000000e+00> : vector<8xf32>
    %108 = vector.multi_reduction <add>, %107, %cst_72 [1] : vector<8x32xf32> to vector<8xf32>
    %109 = vector.shape_cast %108 : vector<8xf32> to vector<8x1xf32>
    %cst_73 = arith.constant 3.200000e+01 : f32
    %110 = vector.broadcast %cst_73 : f32 to vector<8x1xf32>
    %111 = arith.divf %109, %110 : vector<8x1xf32>
    %112 = vector.broadcast %104 : vector<8x1xf32> to vector<8x32xf32>
    %113 = arith.subf %96, %112 : vector<8x32xf32>
    %cst_74 = arith.constant 9.99999974E-6 : f32
    %114 = vector.broadcast %cst_74 : f32 to vector<8x1xf32>
    %115 = arith.addf %111, %114 : vector<8x1xf32>
    %116 = math.rsqrt %115 : vector<8x1xf32>
    %117 = vector.broadcast %116 : vector<8x1xf32> to vector<8x32xf32>
    %118 = arith.mulf %113, %117 : vector<8x32xf32>
    %119 = vector.broadcast %98 : vector<1x32xf32> to vector<8x32xf32>
    %120 = arith.mulf %118, %119 : vector<8x32xf32>
    %121 = vector.broadcast %100 : vector<1x32xf32> to vector<8x32xf32>
    %122 = arith.addf %120, %121 : vector<8x32xf32>
    %123 = arith.truncf %122 : vector<8x32xf32> to vector<8x32xbf16>
    %c1_75 = arith.constant 1 : index
    %c0_76 = arith.constant 0 : index
    %c0_77 = arith.constant 0 : index
    %c0_78 = arith.constant 0 : index
    %124 = vector.load %arg2[%c1_75, %c0_76, %c0_77, %c0_78] : memref<2x3x32x32xbf16, #tpu.memory_space<vmem>>, vector<1x1x32x32xbf16>
    %125 = vector.shape_cast %124 : vector<1x1x32x32xbf16> to vector<32x32xbf16>
    %c1_79 = arith.constant 1 : index
    %c0_80 = arith.constant 0 : index
    %c0_81 = arith.constant 0 : index
    %c0_82 = arith.constant 0 : index
    %126 = vector.load %arg3[%c1_79, %c0_80, %c0_81, %c0_82] : memref<2x3x1x32xf32, #tpu.memory_space<vmem>>, vector<1x1x1x32xf32>
    %127 = vector.shape_cast %126 : vector<1x1x1x32xf32> to vector<1x32xf32>
    %cst_83 = arith.constant dense<0.000000e+00> : vector<8x32xf32>
    %128 = tpu.matmul %123, %125, %cst_83 {dimension_numbers = #tpu.dot_dimension_numbers<[1], [0], [0], [1], [0, 0, 1, 1], [], []>} : vector<8x32xbf16>, vector<32x32xbf16>, vector<8x32xf32> -> vector<8x32xf32>
    %129 = vector.broadcast %127 : vector<1x32xf32> to vector<8x32xf32>
    %130 = arith.addf %128, %129 : vector<8x32xf32>
    %c1_84 = arith.constant 1 : index
    %c1_85 = arith.constant 1 : index
    %c0_86 = arith.constant 0 : index
    %c0_87 = arith.constant 0 : index
    %131 = vector.load %arg2[%c1_84, %c1_85, %c0_86, %c0_87] : memref<2x3x32x32xbf16, #tpu.memory_space<vmem>>, vector<1x1x32x32xbf16>
    %132 = vector.shape_cast %131 : vector<1x1x32x32xbf16> to vector<32x32xbf16>
    %c1_88 = arith.constant 1 : index
    %c1_89 = arith.constant 1 : index
    %c0_90 = arith.constant 0 : index
    %c0_91 = arith.constant 0 : index
    %133 = vector.load %arg3[%c1_88, %c1_89, %c0_90, %c0_91] : memref<2x3x1x32xf32, #tpu.memory_space<vmem>>, vector<1x1x1x32xf32>
    %134 = vector.shape_cast %133 : vector<1x1x1x32xf32> to vector<1x32xf32>
    %cst_92 = arith.constant dense<0.000000e+00> : vector<8x32xf32>
    %135 = tpu.matmul %123, %132, %cst_92 {dimension_numbers = #tpu.dot_dimension_numbers<[1], [0], [0], [1], [0, 0, 1, 1], [], []>} : vector<8x32xbf16>, vector<32x32xbf16>, vector<8x32xf32> -> vector<8x32xf32>
    %136 = vector.broadcast %134 : vector<1x32xf32> to vector<8x32xf32>
    %137 = arith.addf %135, %136 : vector<8x32xf32>
    %c1_93 = arith.constant 1 : index
    %c2_94 = arith.constant 2 : index
    %c0_95 = arith.constant 0 : index
    %c0_96 = arith.constant 0 : index
    %138 = vector.load %arg2[%c1_93, %c2_94, %c0_95, %c0_96] : memref<2x3x32x32xbf16, #tpu.memory_space<vmem>>, vector<1x1x32x32xbf16>
    %139 = vector.shape_cast %138 : vector<1x1x32x32xbf16> to vector<32x32xbf16>
    %c1_97 = arith.constant 1 : index
    %c2_98 = arith.constant 2 : index
    %c0_99 = arith.constant 0 : index
    %c0_100 = arith.constant 0 : index
    %140 = vector.load %arg3[%c1_97, %c2_98, %c0_99, %c0_100] : memref<2x3x1x32xf32, #tpu.memory_space<vmem>>, vector<1x1x1x32xf32>
    %141 = vector.shape_cast %140 : vector<1x1x1x32xf32> to vector<1x32xf32>
    %cst_101 = arith.constant dense<0.000000e+00> : vector<8x32xf32>
    %142 = tpu.matmul %123, %139, %cst_101 {dimension_numbers = #tpu.dot_dimension_numbers<[1], [0], [0], [1], [0, 0, 1, 1], [], []>} : vector<8x32xbf16>, vector<32x32xbf16>, vector<8x32xf32> -> vector<8x32xf32>
    %143 = vector.broadcast %141 : vector<1x32xf32> to vector<8x32xf32>
    %144 = arith.addf %142, %143 : vector<8x32xf32>
    %145 = vector.shape_cast %130 : vector<8x32xf32> to vector<8x4x8xf32>
    %146 = vector.shape_cast %137 : vector<8x32xf32> to vector<8x4x8xf32>
    %147 = vector.shape_cast %144 : vector<8x32xf32> to vector<8x4x8xf32>
    "tpu.trace_start"() <{level = 10 : i32, message = "qhd,khd->hqk"}> : () -> ()
    %cst_102 = arith.constant dense<0.000000e+00> : vector<4x8x8xf32>
    %148 = tpu.matmul %145, %146, %cst_102 {dimension_numbers = #tpu.dot_dimension_numbers<[2], [2], [0], [0], [0, 1, 0, 0, 1, 0], [1], [1]>} : vector<8x4x8xf32>, vector<8x4x8xf32>, vector<4x8x8xf32> -> vector<4x8x8xf32>
    "tpu.trace_stop"() : () -> ()
    %cst_103 = arith.constant 0.176776692 : f32
    %149 = vector.broadcast %cst_103 : f32 to vector<4x8x8xf32>
    %150 = arith.mulf %148, %149 : vector<4x8x8xf32>
    %cst_104 = arith.constant dense<0xFF800000> : vector<4x8xf32>
    %151 = vector.multi_reduction <maximumf>, %150, %cst_104 [2] : vector<4x8x8xf32> to vector<4x8xf32>
    %152 = vector.shape_cast %151 : vector<4x8xf32> to vector<4x8x1xf32>
    %153 = vector.broadcast %152 : vector<4x8x1xf32> to vector<4x8x8xf32>
    %154 = arith.subf %150, %153 : vector<4x8x8xf32>
    %155 = math.exp %154 : vector<4x8x8xf32>
    %cst_105 = arith.constant dense<0.000000e+00> : vector<4x8xf32>
    %156 = vector.multi_reduction <add>, %155, %cst_105 [2] : vector<4x8x8xf32> to vector<4x8xf32>
    %157 = vector.shape_cast %156 : vector<4x8xf32> to vector<4x8x1xf32>
    %158 = tpu.reciprocal %157 {approx = true} : vector<4x8x1xf32> -> vector<4x8x1xf32>
    %159 = vector.broadcast %158 : vector<4x8x1xf32> to vector<4x8x8xf32>
    %160 = arith.mulf %155, %159 : vector<4x8x8xf32>
    "tpu.trace_start"() <{level = 10 : i32, message = "hqk,khd->qhd"}> : () -> ()
    %cst_106 = arith.constant dense<0.000000e+00> : vector<4x8x8xf32>
    %161 = tpu.matmul %147, %160, %cst_106 {dimension_numbers = #tpu.dot_dimension_numbers<[0], [2], [2], [1], [0, 1, 0, 2, 1, 1], [1], [0]>} : vector<8x4x8xf32>, vector<4x8x8xf32>, vector<4x8x8xf32> -> vector<4x8x8xf32>
    %162 = tpu.transpose %161, [2, 0, 1] : vector<4x8x8xf32> -> vector<8x4x8xf32>
    "tpu.trace_stop"() : () -> ()
    %163 = vector.shape_cast %162 : vector<8x4x8xf32> to vector<8x32xf32>
    %164 = arith.truncf %163 : vector<8x32xf32> to vector<8x32xbf16>
    %c1_107 = arith.constant 1 : index
    %c0_108 = arith.constant 0 : index
    %c0_109 = arith.constant 0 : index
    %165 = vector.load %arg4[%c1_107, %c0_108, %c0_109] : memref<2x32x32xbf16, #tpu.memory_space<vmem>>, vector<1x32x32xbf16>
    %166 = vector.shape_cast %165 : vector<1x32x32xbf16> to vector<32x32xbf16>
    %c1_110 = arith.constant 1 : index
    %c0_111 = arith.constant 0 : index
    %c0_112 = arith.constant 0 : index
    %167 = vector.load %arg5[%c1_110, %c0_111, %c0_112] : memref<2x1x32xf32, #tpu.memory_space<vmem>>, vector<1x1x32xf32>
    %168 = vector.shape_cast %167 : vector<1x1x32xf32> to vector<1x32xf32>
    %cst_113 = arith.constant dense<0.000000e+00> : vector<8x32xf32>
    %169 = tpu.matmul %164, %166, %cst_113 {dimension_numbers = #tpu.dot_dimension_numbers<[1], [0], [0], [1], [0, 0, 1, 1], [], []>} : vector<8x32xbf16>, vector<32x32xbf16>, vector<8x32xf32> -> vector<8x32xf32>
    %170 = vector.broadcast %168 : vector<1x32xf32> to vector<8x32xf32>
    %171 = arith.addf %169, %170 : vector<8x32xf32>
    %172 = arith.addf %171, %122 : vector<8x32xf32>
    %c1_114 = arith.constant 1 : index
    %c0_115 = arith.constant 0 : index
    %c0_116 = arith.constant 0 : index
    %173 = vector.load %arg6[%c1_114, %c0_115, %c0_116] : memref<2x1x32xf32, #tpu.memory_space<vmem>>, vector<1x1x32xf32>
    %174 = vector.shape_cast %173 : vector<1x1x32xf32> to vector<1x32xf32>
    %c1_117 = arith.constant 1 : index
    %c0_118 = arith.constant 0 : index
    %c0_119 = arith.constant 0 : index
    %175 = vector.load %arg7[%c1_117, %c0_118, %c0_119] : memref<2x1x32xf32, #tpu.memory_space<vmem>>, vector<1x1x32xf32>
    %176 = vector.shape_cast %175 : vector<1x1x32xf32> to vector<1x32xf32>
    %cst_120 = arith.constant dense<0.000000e+00> : vector<8xf32>
    %177 = vector.multi_reduction <add>, %172, %cst_120 [1] : vector<8x32xf32> to vector<8xf32>
    %178 = vector.shape_cast %177 : vector<8xf32> to vector<8x1xf32>
    %cst_121 = arith.constant 3.200000e+01 : f32
    %179 = vector.broadcast %cst_121 : f32 to vector<8x1xf32>
    %180 = arith.divf %178, %179 : vector<8x1xf32>
    %181 = vector.broadcast %180 : vector<8x1xf32> to vector<8x32xf32>
    %182 = arith.subf %172, %181 : vector<8x32xf32>
    %183 = arith.mulf %182, %182 : vector<8x32xf32>
    %cst_122 = arith.constant dense<0.000000e+00> : vector<8xf32>
    %184 = vector.multi_reduction <add>, %183, %cst_122 [1] : vector<8x32xf32> to vector<8xf32>
    %185 = vector.shape_cast %184 : vector<8xf32> to vector<8x1xf32>
    %cst_123 = arith.constant 3.200000e+01 : f32
    %186 = vector.broadcast %cst_123 : f32 to vector<8x1xf32>
    %187 = arith.divf %185, %186 : vector<8x1xf32>
    %188 = vector.broadcast %180 : vector<8x1xf32> to vector<8x32xf32>
    %189 = arith.subf %172, %188 : vector<8x32xf32>
    %cst_124 = arith.constant 9.99999974E-6 : f32
    %190 = vector.broadcast %cst_124 : f32 to vector<8x1xf32>
    %191 = arith.addf %187, %190 : vector<8x1xf32>
    %192 = math.rsqrt %191 : vector<8x1xf32>
    %193 = vector.broadcast %192 : vector<8x1xf32> to vector<8x32xf32>
    %194 = arith.mulf %189, %193 : vector<8x32xf32>
    %195 = vector.broadcast %174 : vector<1x32xf32> to vector<8x32xf32>
    %196 = arith.mulf %194, %195 : vector<8x32xf32>
    %197 = vector.broadcast %176 : vector<1x32xf32> to vector<8x32xf32>
    %198 = arith.addf %196, %197 : vector<8x32xf32>
    %199 = arith.truncf %198 : vector<8x32xf32> to vector<8x32xbf16>
    %c1_125 = arith.constant 1 : index
    %c0_126 = arith.constant 0 : index
    %c0_127 = arith.constant 0 : index
    %200 = vector.load %arg8[%c1_125, %c0_126, %c0_127] : memref<2x32x128xbf16, #tpu.memory_space<vmem>>, vector<1x32x128xbf16>
    %201 = vector.shape_cast %200 : vector<1x32x128xbf16> to vector<32x128xbf16>
    %c1_128 = arith.constant 1 : index
    %c0_129 = arith.constant 0 : index
    %c0_130 = arith.constant 0 : index
    %202 = vector.load %arg9[%c1_128, %c0_129, %c0_130] : memref<2x1x128xf32, #tpu.memory_space<vmem>>, vector<1x1x128xf32>
    %203 = vector.shape_cast %202 : vector<1x1x128xf32> to vector<1x128xf32>
    %cst_131 = arith.constant dense<0.000000e+00> : vector<8x128xf32>
    %204 = tpu.matmul %199, %201, %cst_131 {dimension_numbers = #tpu.dot_dimension_numbers<[1], [0], [0], [1], [0, 0, 1, 1], [], []>} : vector<8x32xbf16>, vector<32x128xbf16>, vector<8x128xf32> -> vector<8x128xf32>
    %205 = vector.broadcast %203 : vector<1x128xf32> to vector<8x128xf32>
    %206 = arith.addf %204, %205 : vector<8x128xf32>
    %cst_132 = arith.constant 0.000000e+00 : f32
    %207 = vector.broadcast %cst_132 : f32 to vector<8x128xf32>
    %208 = arith.maximumf %206, %207 : vector<8x128xf32>
    %209 = arith.truncf %208 : vector<8x128xf32> to vector<8x128xbf16>
    %c1_133 = arith.constant 1 : index
    %c0_134 = arith.constant 0 : index
    %c0_135 = arith.constant 0 : index
    %210 = vector.load %arg10[%c1_133, %c0_134, %c0_135] : memref<2x128x32xbf16, #tpu.memory_space<vmem>>, vector<1x128x32xbf16>
    %211 = vector.shape_cast %210 : vector<1x128x32xbf16> to vector<128x32xbf16>
    %c1_136 = arith.constant 1 : index
    %c0_137 = arith.constant 0 : index
    %c0_138 = arith.constant 0 : index
    %212 = vector.load %arg11[%c1_136, %c0_137, %c0_138] : memref<2x1x32xf32, #tpu.memory_space<vmem>>, vector<1x1x32xf32>
    %213 = vector.shape_cast %212 : vector<1x1x32xf32> to vector<1x32xf32>
    %cst_139 = arith.constant dense<0.000000e+00> : vector<8x32xf32>
    %214 = tpu.matmul %209, %211, %cst_139 {dimension_numbers = #tpu.dot_dimension_numbers<[1], [0], [0], [1], [0, 0, 1, 1], [], []>} : vector<8x128xbf16>, vector<128x32xbf16>, vector<8x32xf32> -> vector<8x32xf32>
    %215 = vector.broadcast %213 : vector<1x32xf32> to vector<8x32xf32>
    %216 = arith.addf %214, %215 : vector<8x32xf32>
    %217 = arith.addf %216, %198 : vector<8x32xf32>
    %c1_140 = arith.constant 1 : index
    %c0_141 = arith.constant 0 : index
    %c0_142 = arith.constant 0 : index
    %218 = vector.load %arg12[%c1_140, %c0_141, %c0_142] : memref<2x1x32xf32, #tpu.memory_space<vmem>>, vector<1x1x32xf32>
    %219 = vector.shape_cast %218 : vector<1x1x32xf32> to vector<1x32xf32>
    %c1_143 = arith.constant 1 : index
    %c0_144 = arith.constant 0 : index
    %c0_145 = arith.constant 0 : index
    %220 = vector.load %arg13[%c1_143, %c0_144, %c0_145] : memref<2x1x32xf32, #tpu.memory_space<vmem>>, vector<1x1x32xf32>
    %221 = vector.shape_cast %220 : vector<1x1x32xf32> to vector<1x32xf32>
    %cst_146 = arith.constant dense<0.000000e+00> : vector<8xf32>
    %222 = vector.multi_reduction <add>, %217, %cst_146 [1] : vector<8x32xf32> to vector<8xf32>
    %223 = vector.shape_cast %222 : vector<8xf32> to vector<8x1xf32>
    %cst_147 = arith.constant 3.200000e+01 : f32
    %224 = vector.broadcast %cst_147 : f32 to vector<8x1xf32>
    %225 = arith.divf %223, %224 : vector<8x1xf32>
    %226 = vector.broadcast %225 : vector<8x1xf32> to vector<8x32xf32>
    %227 = arith.subf %217, %226 : vector<8x32xf32>
    %228 = arith.mulf %227, %227 : vector<8x32xf32>
    %cst_148 = arith.constant dense<0.000000e+00> : vector<8xf32>
    %229 = vector.multi_reduction <add>, %228, %cst_148 [1] : vector<8x32xf32> to vector<8xf32>
    %230 = vector.shape_cast %229 : vector<8xf32> to vector<8x1xf32>
    %cst_149 = arith.constant 3.200000e+01 : f32
    %231 = vector.broadcast %cst_149 : f32 to vector<8x1xf32>
    %232 = arith.divf %230, %231 : vector<8x1xf32>
    %233 = vector.broadcast %225 : vector<8x1xf32> to vector<8x32xf32>
    %234 = arith.subf %217, %233 : vector<8x32xf32>
    %cst_150 = arith.constant 9.99999974E-6 : f32
    %235 = vector.broadcast %cst_150 : f32 to vector<8x1xf32>
    %236 = arith.addf %232, %235 : vector<8x1xf32>
    %237 = math.rsqrt %236 : vector<8x1xf32>
    %238 = vector.broadcast %237 : vector<8x1xf32> to vector<8x32xf32>
    %239 = arith.mulf %234, %238 : vector<8x32xf32>
    %240 = vector.broadcast %219 : vector<1x32xf32> to vector<8x32xf32>
    %241 = arith.mulf %239, %240 : vector<8x32xf32>
    %242 = vector.broadcast %221 : vector<1x32xf32> to vector<8x32xf32>
    %243 = arith.addf %241, %242 : vector<8x32xf32>
    %244 = arith.truncf %243 : vector<8x32xf32> to vector<8x32xbf16>
    %c0_151 = arith.constant 0 : index
    %c0_152 = arith.constant 0 : index
    %c0_153 = arith.constant 0 : index
    %245 = vector.load %arg14[%c0_151, %c0_152, %c0_153] : memref<1x8x32xbf16, #tpu.memory_space<vmem>>, vector<1x8x32xbf16>
    %246 = vector.shape_cast %245 : vector<1x8x32xbf16> to vector<8x32xbf16>
    %247 = vector.shape_cast %244 : vector<8x32xbf16> to vector<1x8x32xbf16>
    tpu.vector_store %arg14[%c0_151, %c0_152, %c0_153], %247 {strides = array<i32>} : memref<1x8x32xbf16, #tpu.memory_space<vmem>>, vector<1x8x32xbf16>,
    return
  }
  func.func @transform_0(%arg0: i32) -> (i32, i32, i32) {
    %c0_i32 = arith.constant 0 : i32
    %c0_i32_0 = arith.constant 0 : i32
    %c0_i32_1 = arith.constant 0 : i32
    return %arg0, %c0_i32, %c0_i32_0 : i32, i32, i32
  }
  func.func @transform_1(%arg0: i32) -> (i32, i32, i32, i32) {
    %c0_i32 = arith.constant 0 : i32
    %c0_i32_0 = arith.constant 0 : i32
    %c0_i32_1 = arith.constant 0 : i32
    %c0_i32_2 = arith.constant 0 : i32
    %c0_i32_3 = arith.constant 0 : i32
    return %c0_i32, %c0_i32_0, %c0_i32_1, %c0_i32_2 : i32, i32, i32, i32
  }
  func.func @transform_2(%arg0: i32) -> (i32, i32, i32, i32) {
    %c0_i32 = arith.constant 0 : i32
    %c0_i32_0 = arith.constant 0 : i32
    %c0_i32_1 = arith.constant 0 : i32
    %c0_i32_2 = arith.constant 0 : i32
    %c0_i32_3 = arith.constant 0 : i32
    return %c0_i32, %c0_i32_0, %c0_i32_1, %c0_i32_2 : i32, i32, i32, i32
  }
  func.func @transform_3(%arg0: i32) -> (i32, i32, i32) {
    %c0_i32 = arith.constant 0 : i32
    %c0_i32_0 = arith.constant 0 : i32
    %c0_i32_1 = arith.constant 0 : i32
    %c0_i32_2 = arith.constant 0 : i32
    return %c0_i32, %c0_i32_0, %c0_i32_1 : i32, i32, i32
  }
  func.func @transform_4(%arg0: i32) -> (i32, i32, i32) {
    %c0_i32 = arith.constant 0 : i32
    %c0_i32_0 = arith.constant 0 : i32
    %c0_i32_1 = arith.constant 0 : i32
    %c0_i32_2 = arith.constant 0 : i32
    return %c0_i32, %c0_i32_0, %c0_i32_1 : i32, i32, i32
  }
  func.func @transform_5(%arg0: i32) -> (i32, i32, i32) {
    %c0_i32 = arith.constant 0 : i32
    %c0_i32_0 = arith.constant 0 : i32
    %c0_i32_1 = arith.constant 0 : i32
    %c0_i32_2 = arith.constant 0 : i32
    return %c0_i32, %c0_i32_0, %c0_i32_1 : i32, i32, i32
  }
  func.func @transform_6(%arg0: i32) -> (i32, i32, i32) {
    %c0_i32 = arith.constant 0 : i32
    %c0_i32_0 = arith.constant 0 : i32
    %c0_i32_1 = arith.constant 0 : i32
    %c0_i32_2 = arith.constant 0 : i32
    return %c0_i32, %c0_i32_0, %c0_i32_1 : i32, i32, i32
  }
  func.func @transform_7(%arg0: i32) -> (i32, i32, i32) {
    %c0_i32 = arith.constant 0 : i32
    %c0_i32_0 = arith.constant 0 : i32
    %c0_i32_1 = arith.constant 0 : i32
    %c0_i32_2 = arith.constant 0 : i32
    return %c0_i32, %c0_i32_0, %c0_i32_1 : i32, i32, i32
  }
  func.func @transform_8(%arg0: i32) -> (i32, i32, i32) {
    %c0_i32 = arith.constant 0 : i32
    %c0_i32_0 = arith.constant 0 : i32
    %c0_i32_1 = arith.constant 0 : i32
    %c0_i32_2 = arith.constant 0 : i32
    return %c0_i32, %c0_i32_0, %c0_i32_1 : i32, i32, i32
  }
  func.func @transform_9(%arg0: i32) -> (i32, i32, i32) {
    %c0_i32 = arith.constant 0 : i32
    %c0_i32_0 = arith.constant 0 : i32
    %c0_i32_1 = arith.constant 0 : i32
    %c0_i32_2 = arith.constant 0 : i32
    return %c0_i32, %c0_i32_0, %c0_i32_1 : i32, i32, i32
  }
  func.func @transform_10(%arg0: i32) -> (i32, i32, i32) {
    %c0_i32 = arith.constant 0 : i32
    %c0_i32_0 = arith.constant 0 : i32
    %c0_i32_1 = arith.constant 0 : i32
    %c0_i32_2 = arith.constant 0 : i32
    return %c0_i32, %c0_i32_0, %c0_i32_1 : i32, i32, i32
  }
  func.func @transform_11(%arg0: i32) -> (i32, i32, i32) {
    %c0_i32 = arith.constant 0 : i32
    %c0_i32_0 = arith.constant 0 : i32
    %c0_i32_1 = arith.constant 0 : i32
    %c0_i32_2 = arith.constant 0 : i32
    return %c0_i32, %c0_i32_0, %c0_i32_1 : i32, i32, i32
  }
  func.func @transform_12(%arg0: i32) -> (i32, i32, i32) {
    %c0_i32 = arith.constant 0 : i32
    %c0_i32_0 = arith.constant 0 : i32
    %c0_i32_1 = arith.constant 0 : i32
    %c0_i32_2 = arith.constant 0 : i32
    return %c0_i32, %c0_i32_0, %c0_i32_1 : i32, i32, i32
  }
  func.func @transform_13(%arg0: i32) -> (i32, i32, i32) {
    %c0_i32 = arith.constant 0 : i32
    %c0_i32_0 = arith.constant 0 : i32
    %c0_i32_1 = arith.constant 0 : i32
    return %arg0, %c0_i32, %c0_i32_0 : i32, i32, i32
  }
}

</mosaic_0001>

<llo_original>
// kernel: tpu_custom_call.1
$region0: #{tpu_custom_call.1}
  #allocation0 [shape = 'u32[]', space=smem, size = 0x4, offset = 0x4, fixed_abs, tag = 'smem constant byte address 0x4 - core index']
  #allocation1 [shape = 'u32[72,128]{1,0:T(1,128)}', space=vmem, size = 0x9000, scoped, tag = 'internal scratch']
  %s0 = inlined_call_operand.hbm [shape: f32[2,8,32], index: 0, kind: input, shape index: {}]
  %s1 = inlined_call_operand.vmem [shape: bf16[2,3,32,32], index: 1, kind: input, shape index: {}]
  %s2 = inlined_call_operand.hbm [shape: f32[2,3,1,32], index: 2, kind: input, shape index: {}]
  %s3 = inlined_call_operand.vmem [shape: bf16[2,32,32], index: 3, kind: input, shape index: {}]
  %s4 = inlined_call_operand.vmem [shape: f32[2,1,32], index: 4, kind: input, shape index: {}]
  %s5 = inlined_call_operand.hbm [shape: f32[2,1,32], index: 5, kind: input, shape index: {}]
  %s6 = inlined_call_operand.vmem [shape: f32[2,1,32], index: 6, kind: input, shape index: {}]
  %s7 = inlined_call_operand.vmem [shape: bf16[2,32,128], index: 7, kind: input, shape index: {}]
  %s8 = inlined_call_operand.vmem [shape: f32[2,1,128], index: 8, kind: input, shape index: {}]
  %s9 = inlined_call_operand.vmem [shape: bf16[2,128,32], index: 9, kind: input, shape index: {}]
  %s10 = inlined_call_operand.vmem [shape: f32[2,1,32], index: 10, kind: input, shape index: {}]
  %s11 = inlined_call_operand.hbm [shape: f32[2,1,32], index: 11, kind: input, shape index: {}]
  %s12 = inlined_call_operand.vmem [shape: f32[2,1,32], index: 12, kind: input, shape index: {}]
  %s13 = inlined_call_operand.hbm [shape: bf16[2,8,32], index: 13, kind: output, shape index: {}]
  %s14 = sld [smem:[#allocation0]]
  $region101: #{tpu_custom_call.1} parent=0
    _
  %s16 = ssub.s32 1, %s14
  %s17 = scalar_select 0, %s16, %s14
  $region1: #{tpu_custom_call.1} parent=0
    #allocation2 [shape = 'u8[8192]{0}', space=vmem, size = 0x2000, scoped, tag = 'input window, operand 0']
    #allocation3 [shape = 's32[2]{0}', space=sflag, size = 0x8, scoped, tag = 'scoped memory for tpu_custom_call.1']
    #allocation4 [shape = 's32[2]{0}', space=sflag, size = 0x8, scoped, tag = 'scoped memory for tpu_custom_call.1']
    #allocation5 [shape = 'u8[3072]{0}', space=vmem, size = 0xc00, scoped, tag = 'input window, operand 2, single buffered']
    #allocation6 [shape = 's32[1]{0}', space=sflag, size = 0x4, scoped, tag = 'scoped memory for tpu_custom_call.1']
    #allocation7 [shape = 'u8[1024]{0}', space=vmem, size = 0x400, scoped, tag = 'input window, operand 5, single buffered']
    #allocation8 [shape = 'u8[1024]{0}', space=vmem, size = 0x400, scoped, tag = 'input window, operand 11, single buffered']
    #allocation9 [shape = 's32[1]{0}', space=sflag, size = 0x4, scoped, tag = 'scoped memory for tpu_custom_call.1']
    #allocation10 [shape = 'u8[4096]{0}', space=vmem, size = 0x1000, scoped, tag = 'output window, operand 0']
    %18 = vsyncpa [#allocation3], 0
    %s19 = scalar_lea.sflag [#allocation3], 1
    %20 = vsyncpa %s19, 0
    %21 = vsyncpa [#allocation6], 0
    %22 = vsyncpa [#allocation9], 0
    %23 = vsyncpa [#allocation4], 0
    %s24 = scalar_lea.sflag [#allocation4], 1
    %25 = vsyncpa %s24, 0
    loop: start=0, step=1, limit=4
    $region2: #{tpu_custom_call.1} parent=1 // loop_pre_header
      _
    $region3: #{tpu_custom_call.1} parent=1 // loop_header
      %s27 = sphi 0, %s31
      %p28 = scmp.ge.s32.totalorder %s27, 4
      %s37 = sphi 0, %s39
      %s40 = sphi 0, %s37
      %s41 = sphi 0, %s40
      %s57 = sphi 0, %s41
      %s61 = sphi 0, %s61
      %s63 = sphi 0, %s61
      %s64 = sphi 0, %s63
      %s78 = sphi 0, %s64
      %s82 = sphi 0, %s82
      %s84 = sphi 0, %s82
      %s85 = sphi 0, %s84
      %s99 = sphi 0, %s85
      %s103 = sphi 0, %s103
      %s105 = sphi 0, %s103
      %s106 = sphi 0, %s105
      %s120 = sphi 0, %s106
      %s124 = sphi 0, %s124
      %s126 = sphi 0, %s124
      %s127 = sphi 0, %s126
      %s141 = sphi 0, %s127
      %s145 = sphi 0, %s145
      %s147 = sphi 0, %s145
      %s148 = sphi 0, %s147
      %s162 = sphi 0, %s148
      %s166 = sphi 0, %s166
      %s168 = sphi 0, %s166
      %s169 = sphi 0, %s168
      %s183 = sphi 0, %s169
      %s187 = sphi 0, %s187
      %s189 = sphi 0, %s187
      %s190 = sphi 0, %s189
      %s204 = sphi 0, %s190
      %s208 = sphi 0, %s208
      %s210 = sphi 0, %s208
      %s211 = sphi 0, %s210
      %s225 = sphi 0, %s211
      %s229 = sphi 0, %s229
      %s231 = sphi 0, %s229
      %s232 = sphi 0, %s231
      %s246 = sphi 0, %s232
      %s250 = sphi 0, %s250
      %s252 = sphi 0, %s250
      %s253 = sphi 0, %s252
      %s267 = sphi 0, %s253
      %s271 = sphi 0, %s271
      %s273 = sphi 0, %s271
      %s274 = sphi 0, %s273
      %s288 = sphi 0, %s274
      %s292 = sphi 0, %s292
      %s294 = sphi 0, %s292
      %s295 = sphi 0, %s294
      %s309 = sphi 0, %s295
      %s315 = sphi 0, %s317
      %s318 = sphi 0, %s315
      %s319 = sphi 0, %s318
      %s335 = sphi 0, %s319
    $region4: #{tpu_custom_call.1} parent=1 // loop_header_branch
      %30 = sbr.rel (%p28) target = $region8
    $region5: #{tpu_custom_call.1} parent=1 // loop_body
      %s32 = ssub.s32 %s27, 1
      %s33 = ssub.s32 %s27, 2
      %s34 = sadd.s32 %s27, 1
      %s35 = ssub.s32 %s27, %s34
      %p36 = scmp.eq.s32.totalorder %s35, 0
      %s38 = sadd.s32 %s37, 1
      %s39 = scalar_select %p36, %s37, %s38
      %p42 = pneg %p36
      %p43 = scmp.eq.s32.totalorder %s27, 1
      %p44 = por %p42, %p43
      %p45 = scmp.ne.s32.totalorder %s37, %s40
      %p46 = scmp.eq.s32.totalorder %s27, 0
      %p47 = por %p45, %p46
      %p48 = scmp.ne.s32.totalorder %s37, %s40
      %p49 = scmp.eq.s32.totalorder %s32, 1
      %p50 = por %p48, %p49
      %p51 = scmp.ne.s32.totalorder %s40, %s41
      %p52 = scmp.eq.s32.totalorder %s32, 0
      %p53 = por %p51, %p52
      %p54 = scmp.ne.s32.totalorder %s40, %s41
      %p55 = scmp.eq.s32.totalorder %s33, 1
      %p56 = por %p54, %p55
      %p58 = scmp.ne.s32.totalorder %s41, %s57
      %p59 = scmp.eq.s32.totalorder %s33, 0
      %p60 = por %p58, %p59
      %s62 = sadd.s32 %s61, 1
      %p65 = scmp.eq.s32.totalorder %s27, 1
      %p66 = scmp.ne.s32.totalorder %s61, %s63
      %p67 = scmp.eq.s32.totalorder %s27, 0
      %p68 = por %p66, %p67
      %p69 = scmp.ne.s32.totalorder %s61, %s63
      %p70 = scmp.eq.s32.totalorder %s32, 1
      %p71 = por %p69, %p70
      %p72 = scmp.ne.s32.totalorder %s63, %s64
      %p73 = scmp.eq.s32.totalorder %s32, 0
      %p74 = por %p72, %p73
      %p75 = scmp.ne.s32.totalorder %s63, %s64
      %p76 = scmp.eq.s32.totalorder %s33, 1
      %p77 = por %p75, %p76
      %p79 = scmp.ne.s32.totalorder %s64, %s78
      %p80 = scmp.eq.s32.totalorder %s33, 0
      %p81 = por %p79, %p80
      %s83 = sadd.s32 %s82, 1
      %p86 = scmp.eq.s32.totalorder %s27, 1
      %p87 = scmp.ne.s32.totalorder %s82, %s84
      %p88 = scmp.eq.s32.totalorder %s27, 0
      %p89 = por %p87, %p88
      %p90 = scmp.ne.s32.totalorder %s82, %s84
      %p91 = scmp.eq.s32.totalorder %s32, 1
      %p92 = por %p90, %p91
      %p93 = scmp.ne.s32.totalorder %s84, %s85
      %p94 = scmp.eq.s32.totalorder %s32, 0
      %p95 = por %p93, %p94
      %p96 = scmp.ne.s32.totalorder %s84, %s85
      %p97 = scmp.eq.s32.totalorder %s33, 1
      %p98 = por %p96, %p97
      %p100 = scmp.ne.s32.totalorder %s85, %s99
      %p101 = scmp.eq.s32.totalorder %s33, 0
      %p102 = por %p100, %p101
      %s104 = sadd.s32 %s103, 1
      %p107 = scmp.eq.s32.totalorder %s27, 1
      %p108 = scmp.ne.s32.totalorder %s103, %s105
      %p109 = scmp.eq.s32.totalorder %s27, 0
      %p110 = por %p108, %p109
      %p111 = scmp.ne.s32.totalorder %s103, %s105
      %p112 = scmp.eq.s32.totalorder %s32, 1
      %p113 = por %p111, %p112
      %p114 = scmp.ne.s32.totalorder %s105, %s106
      %p115 = scmp.eq.s32.totalorder %s32, 0
      %p116 = por %p114, %p115
      %p117 = scmp.ne.s32.totalorder %s105, %s106
      %p118 = scmp.eq.s32.totalorder %s33, 1
      %p119 = por %p117, %p118
      %p121 = scmp.ne.s32.totalorder %s106, %s120
      %p122 = scmp.eq.s32.totalorder %s33, 0
      %p123 = por %p121, %p122
      %s125 = sadd.s32 %s124, 1
      %p128 = scmp.eq.s32.totalorder %s27, 1
      %p129 = scmp.ne.s32.totalorder %s124, %s126
      %p130 = scmp.eq.s32.totalorder %s27, 0
      %p131 = por %p129, %p130
      %p132 = scmp.ne.s32.totalorder %s124, %s126
      %p133 = scmp.eq.s32.totalorder %s32, 1
      %p134 = por %p132, %p133
      %p135 = scmp.ne.s32.totalorder %s126, %s127
      %p136 = scmp.eq.s32.totalorder %s32, 0
      %p137 = por %p135, %p136
      %p138 = scmp.ne.s32.totalorder %s126, %s127
      %p139 = scmp.eq.s32.totalorder %s33, 1
      %p140 = por %p138, %p139
      %p142 = scmp.ne.s32.totalorder %s127, %s141
      %p143 = scmp.eq.s32.totalorder %s33, 0
      %p144 = por %p142, %p143
      %s146 = sadd.s32 %s145, 1
      %p149 = scmp.eq.s32.totalorder %s27, 1
      %p150 = scmp.ne.s32.totalorder %s145, %s147
      %p151 = scmp.eq.s32.totalorder %s27, 0
      %p152 = por %p150, %p151
      %p153 = scmp.ne.s32.totalorder %s145, %s147
      %p154 = scmp.eq.s32.totalorder %s32, 1
      %p155 = por %p153, %p154
      %p156 = scmp.ne.s32.totalorder %s147, %s148
      %p157 = scmp.eq.s32.totalorder %s32, 0
      %p158 = por %p156, %p157
      %p159 = scmp.ne.s32.totalorder %s147, %s148
      %p160 = scmp.eq.s32.totalorder %s33, 1
      %p161 = por %p159, %p160
      %p163 = scmp.ne.s32.totalorder %s148, %s162
      %p164 = scmp.eq.s32.totalorder %s33, 0
      %p165 = por %p163, %p164
      %s167 = sadd.s32 %s166, 1
      %p170 = scmp.eq.s32.totalorder %s27, 1
      %p171 = scmp.ne.s32.totalorder %s166, %s168
      %p172 = scmp.eq.s32.totalorder %s27, 0
      %p173 = por %p171, %p172
      %p174 = scmp.ne.s32.totalorder %s166, %s168
      %p175 = scmp.eq.s32.totalorder %s32, 1
      %p176 = por %p174, %p175
      %p177 = scmp.ne.s32.totalorder %s168, %s169
      %p178 = scmp.eq.s32.totalorder %s32, 0
      %p179 = por %p177, %p178
      %p180 = scmp.ne.s32.totalorder %s168, %s169
      %p181 = scmp.eq.s32.totalorder %s33, 1
      %p182 = por %p180, %p181
      %p184 = scmp.ne.s32.totalorder %s169, %s183
      %p185 = scmp.eq.s32.totalorder %s33, 0
      %p186 = por %p184, %p185
      %s188 = sadd.s32 %s187, 1
      %p191 = scmp.eq.s32.totalorder %s27, 1
      %p192 = scmp.ne.s32.totalorder %s187, %s189
      %p193 = scmp.eq.s32.totalorder %s27, 0
      %p194 = por %p192, %p193
      %p195 = scmp.ne.s32.totalorder %s187, %s189
      %p196 = scmp.eq.s32.totalorder %s32, 1
      %p197 = por %p195, %p196
      %p198 = scmp.ne.s32.totalorder %s189, %s190
      %p199 = scmp.eq.s32.totalorder %s32, 0
      %p200 = por %p198, %p199
      %p201 = scmp.ne.s32.totalorder %s189, %s190
      %p202 = scmp.eq.s32.totalorder %s33, 1
      %p203 = por %p201, %p202
      %p205 = scmp.ne.s32.totalorder %s190, %s204
      %p206 = scmp.eq.s32.totalorder %s33, 0
      %p207 = por %p205, %p206
      %s209 = sadd.s32 %s208, 1
      %p212 = scmp.eq.s32.totalorder %s27, 1
      %p213 = scmp.ne.s32.totalorder %s208, %s210
      %p214 = scmp.eq.s32.totalorder %s27, 0
      %p215 = por %p213, %p214
      %p216 = scmp.ne.s32.totalorder %s208, %s210
      %p217 = scmp.eq.s32.totalorder %s32, 1
      %p218 = por %p216, %p217
      %p219 = scmp.ne.s32.totalorder %s210, %s211
      %p220 = scmp.eq.s32.totalorder %s32, 0
      %p221 = por %p219, %p220
      %p222 = scmp.ne.s32.totalorder %s210, %s211
      %p223 = scmp.eq.s32.totalorder %s33, 1
      %p224 = por %p222, %p223
      %p226 = scmp.ne.s32.totalorder %s211, %s225
      %p227 = scmp.eq.s32.totalorder %s33, 0
      %p228 = por %p226, %p227
      %s230 = sadd.s32 %s229, 1
      %p233 = scmp.eq.s32.totalorder %s27, 1
      %p234 = scmp.ne.s32.totalorder %s229, %s231
      %p235 = scmp.eq.s32.totalorder %s27, 0
      %p236 = por %p234, %p235
      %p237 = scmp.ne.s32.totalorder %s229, %s231
      %p238 = scmp.eq.s32.totalorder %s32, 1
      %p239 = por %p237, %p238
      %p240 = scmp.ne.s32.totalorder %s231, %s232
      %p241 = scmp.eq.s32.totalorder %s32, 0
      %p242 = por %p240, %p241
      %p243 = scmp.ne.s32.totalorder %s231, %s232
      %p244 = scmp.eq.s32.totalorder %s33, 1
      %p245 = por %p243, %p244
      %p247 = scmp.ne.s32.totalorder %s232, %s246
      %p248 = scmp.eq.s32.totalorder %s33, 0
      %p249 = por %p247, %p248
      %s251 = sadd.s32 %s250, 1
      %p254 = scmp.eq.s32.totalorder %s27, 1
      %p255 = scmp.ne.s32.totalorder %s250, %s252
      %p256 = scmp.eq.s32.totalorder %s27, 0
      %p257 = por %p255, %p256
      %p258 = scmp.ne.s32.totalorder %s250, %s252
      %p259 = scmp.eq.s32.totalorder %s32, 1
      %p260 = por %p258, %p259
      %p261 = scmp.ne.s32.totalorder %s252, %s253
      %p262 = scmp.eq.s32.totalorder %s32, 0
      %p263 = por %p261, %p262
      %p264 = scmp.ne.s32.totalorder %s252, %s253
      %p265 = scmp.eq.s32.totalorder %s33, 1
      %p266 = por %p264, %p265
      %p268 = scmp.ne.s32.totalorder %s253, %s267
      %p269 = scmp.eq.s32.totalorder %s33, 0
      %p270 = por %p268, %p269
      %s272 = sadd.s32 %s271, 1
      %p275 = scmp.eq.s32.totalorder %s27, 1
      %p276 = scmp.ne.s32.totalorder %s271, %s273
      %p277 = scmp.eq.s32.totalorder %s27, 0
      %p278 = por %p276, %p277
      %p279 = scmp.ne.s32.totalorder %s271, %s273
      %p280 = scmp.eq.s32.totalorder %s32, 1
      %p281 = por %p279, %p280
      %p282 = scmp.ne.s32.totalorder %s273, %s274
      %p283 = scmp.eq.s32.totalorder %s32, 0
      %p284 = por %p282, %p283
      %p285 = scmp.ne.s32.totalorder %s273, %s274
      %p286 = scmp.eq.s32.totalorder %s33, 1
      %p287 = por %p285, %p286
      %p289 = scmp.ne.s32.totalorder %s274, %s288
      %p290 = scmp.eq.s32.totalorder %s33, 0
      %p291 = por %p289, %p290
      %s293 = sadd.s32 %s292, 1
      %p296 = scmp.eq.s32.totalorder %s27, 1
      %p297 = scmp.ne.s32.totalorder %s292, %s294
      %p298 = scmp.eq.s32.totalorder %s27, 0
      %p299 = por %p297, %p298
      %p300 = scmp.ne.s32.totalorder %s292, %s294
      %p301 = scmp.eq.s32.totalorder %s32, 1
      %p302 = por %p300, %p301
      %p303 = scmp.ne.s32.totalorder %s294, %s295
      %p304 = scmp.eq.s32.totalorder %s32, 0
      %p305 = por %p303, %p304
      %p306 = scmp.ne.s32.totalorder %s294, %s295
      %p307 = scmp.eq.s32.totalorder %s33, 1
      %p308 = por %p306, %p307
      %p310 = scmp.ne.s32.totalorder %s295, %s309
      %p311 = scmp.eq.s32.totalorder %s33, 0
      %p312 = por %p310, %p311
      %s313 = ssub.s32 %s27, %s34
      %p314 = scmp.eq.s32.totalorder %s313, 0
      %s316 = sadd.s32 %s315, 1
      %s317 = scalar_select %p314, %s315, %s316
      %p320 = pneg %p314
      %p321 = scmp.eq.s32.totalorder %s27, 1
      %p322 = por %p320, %p321
      %p323 = scmp.ne.s32.totalorder %s315, %s318
      %p324 = scmp.eq.s32.totalorder %s27, 0
      %p325 = por %p323, %p324
      %p326 = scmp.ne.s32.totalorder %s315, %s318
      %p327 = scmp.eq.s32.totalorder %s32, 1
      %p328 = por %p326, %p327
      %p329 = scmp.ne.s32.totalorder %s318, %s319
      %p330 = scmp.eq.s32.totalorder %s32, 0
      %p331 = por %p329, %p330
      %p332 = scmp.ne.s32.totalorder %s318, %s319
      %p333 = scmp.eq.s32.totalorder %s33, 1
      %p334 = por %p332, %p333
      %p336 = scmp.ne.s32.totalorder %s319, %s335
      %p337 = scmp.eq.s32.totalorder %s33, 0
      %p338 = por %p336, %p337
      %p339 = scmp.le.s32.totalorder 1, %s27
      %p340 = scmp.lt.s32.totalorder %s27, 3
      %p341 = pnand %p339, %p340
      %p342 = pneg %p341
      // Predicated region
      $region9: #{tpu_custom_call.1} parent=5 // pred_check
        _
      $region10: #{tpu_custom_call.1} parent=5 // pred_check_branch
        %344 = sbr.rel (%p341) target = $region12
      $region11: #{tpu_custom_call.1} parent=5 // pred_region
        %s345 = ssub.s32 %s27, 1
        // Predicated region
        $region13: #{tpu_custom_call.1} parent=11 // pred_check
          %p346 = pneg %p74
        $region14: #{tpu_custom_call.1} parent=11 // pred_check_branch
          %348 = sbr.rel (%p346) target = $region16
        $region15: #{tpu_custom_call.1} parent=11 // pred_region
          _
        $region16: #{tpu_custom_call.1} parent=11 // pred_fallthru
          _
        // Predicated region
        $region17: #{tpu_custom_call.1} parent=11 // pred_check
          %p349 = pneg %p95
        $region18: #{tpu_custom_call.1} parent=11 // pred_check_branch
          %351 = sbr.rel (%p349) target = $region20
        $region19: #{tpu_custom_call.1} parent=11 // pred_region
          %353 = vsyncadd [#allocation6], 0
          %s354 = sshll.u32 %s2, 4
          %s355 = int_to_ptr.hbm [resolvable:$true] %s354
          %s356 = sshll.u32 [#allocation5], 4
          %s357 = int_to_ptr.vmem [resolvable:$true] %s356
          %362 = dma.hbm_to_vmem [thread:$0]  %s355, 96, %s357, [#allocation6], 16, 16, 1
        $region20: #{tpu_custom_call.1} parent=11 // pred_fallthru
          _
        // Predicated region
        $region21: #{tpu_custom_call.1} parent=11 // pred_check
          %p363 = pneg %p116
        $region22: #{tpu_custom_call.1} parent=11 // pred_check_branch
          %365 = sbr.rel (%p363) target = $region24
        $region23: #{tpu_custom_call.1} parent=11 // pred_region
          _
        $region24: #{tpu_custom_call.1} parent=11 // pred_fallthru
          _
        // Predicated region
        $region25: #{tpu_custom_call.1} parent=11 // pred_check
          %p366 = pneg %p137
        $region26: #{tpu_custom_call.1} parent=11 // pred_check_branch
          %368 = sbr.rel (%p366) target = $region28
        $region27: #{tpu_custom_call.1} parent=11 // pred_region
          _
        $region28: #{tpu_custom_call.1} parent=11 // pred_fallthru
          _
        // Predicated region
        $region29: #{tpu_custom_call.1} parent=11 // pred_check
          %p369 = pneg %p158
        $region30: #{tpu_custom_call.1} parent=11 // pred_check_branch
          %371 = sbr.rel (%p369) target = $region32
        $region31: #{tpu_custom_call.1} parent=11 // pred_region
          %373 = vsyncadd [#allocation6], 0
          %s374 = sshll.u32 %s5, 4
          %s375 = int_to_ptr.hbm [resolvable:$true] %s374
          %s376 = sshll.u32 [#allocation7], 4
          %s377 = int_to_ptr.vmem [resolvable:$true] %s376
          %382 = dma.hbm_to_vmem [thread:$0]  %s375, 32, %s377, [#allocation6], 16, 16, 1
        $region32: #{tpu_custom_call.1} parent=11 // pred_fallthru
          _
        // Predicated region
        $region33: #{tpu_custom_call.1} parent=11 // pred_check
          %p383 = pneg %p179
        $region34: #{tpu_custom_call.1} parent=11 // pred_check_branch
          %385 = sbr.rel (%p383) target = $region36
        $region35: #{tpu_custom_call.1} parent=11 // pred_region
          _
        $region36: #{tpu_custom_call.1} parent=11 // pred_fallthru
          _
        // Predicated region
        $region37: #{tpu_custom_call.1} parent=11 // pred_check
          %p386 = pneg %p200
        $region38: #{tpu_custom_call.1} parent=11 // pred_check_branch
          %388 = sbr.rel (%p386) target = $region40
        $region39: #{tpu_custom_call.1} parent=11 // pred_region
          _
        $region40: #{tpu_custom_call.1} parent=11 // pred_fallthru
          _
        // Predicated region
        $region41: #{tpu_custom_call.1} parent=11 // pred_check
          %p389 = pneg %p221
        $region42: #{tpu_custom_call.1} parent=11 // pred_check_branch
          %391 = sbr.rel (%p389) target = $region44
        $region43: #{tpu_custom_call.1} parent=11 // pred_region
          _
        $region44: #{tpu_custom_call.1} parent=11 // pred_fallthru
          _
        // Predicated region
        $region45: #{tpu_custom_call.1} parent=11 // pred_check
          %p392 = pneg %p242
        $region46: #{tpu_custom_call.1} parent=11 // pred_check_branch
          %394 = sbr.rel (%p392) target = $region48
        $region47: #{tpu_custom_call.1} parent=11 // pred_region
          _
        $region48: #{tpu_custom_call.1} parent=11 // pred_fallthru
          _
        // Predicated region
        $region49: #{tpu_custom_call.1} parent=11 // pred_check
          %p395 = pneg %p263
        $region50: #{tpu_custom_call.1} parent=11 // pred_check_branch
          %397 = sbr.rel (%p395) target = $region52
        $region51: #{tpu_custom_call.1} parent=11 // pred_region
          _
        $region52: #{tpu_custom_call.1} parent=11 // pred_fallthru
          _
        // Predicated region
        $region53: #{tpu_custom_call.1} parent=11 // pred_check
          %p398 = pneg %p284
        $region54: #{tpu_custom_call.1} parent=11 // pred_check_branch
          %400 = sbr.rel (%p398) target = $region56
        $region55: #{tpu_custom_call.1} parent=11 // pred_region
          %402 = vsyncadd [#allocation9], 0
          %s403 = sshll.u32 %s11, 4
          %s404 = int_to_ptr.hbm [resolvable:$true] %s403
          %s405 = sshll.u32 [#allocation8], 4
          %s406 = int_to_ptr.vmem [resolvable:$true] %s405
          %411 = dma.hbm_to_vmem [thread:$0]  %s404, 32, %s406, [#allocation9], 16, 16, 1
        $region56: #{tpu_custom_call.1} parent=11 // pred_fallthru
          _
        // Predicated region
        $region57: #{tpu_custom_call.1} parent=11 // pred_check
          %p412 = pneg %p305
        $region58: #{tpu_custom_call.1} parent=11 // pred_check_branch
          %414 = sbr.rel (%p412) target = $region60
        $region59: #{tpu_custom_call.1} parent=11 // pred_region
          _
        $region60: #{tpu_custom_call.1} parent=11 // pred_fallthru
          _
      $region12: #{tpu_custom_call.1} parent=5 // pred_fallthru
        _
      %p415 = scmp.lt.s32.totalorder %s27, 2
      // Predicated region
      $region61: #{tpu_custom_call.1} parent=5 // pred_check
        %p416 = pneg %p415
      $region62: #{tpu_custom_call.1} parent=5 // pred_check_branch
        %418 = sbr.rel (%p416) target = $region64
      $region63: #{tpu_custom_call.1} parent=5 // pred_region
        // Predicated region
        $region65: #{tpu_custom_call.1} parent=63 // pred_check
          %p419 = pneg %p47
        $region66: #{tpu_custom_call.1} parent=63 // pred_check_branch
          %421 = sbr.rel (%p419) target = $region68
        $region67: #{tpu_custom_call.1} parent=63 // pred_region
          %s422 = sand.u32 %s37, 1
          %s423 = scalar_lea.sflag [#allocation3], %s422
          %s424 = sand.u32 %s37, 1
          %s425 = smul.addr %s424, 8
          %s426 = scalar_lea.vmem [#allocation2], %s425
          %428 = vsyncadd %s423, 0
          %s429 = smul.addr %s27, 8
          %s430 = scalar_lea.hbm %s0, %s429
          %s432 = sshll.u32 %s430, 4
          %s433 = int_to_ptr.hbm [resolvable:$true] %s432
          %s434 = sshll.u32 %s426, 4
          %s435 = int_to_ptr.vmem [resolvable:$true] %s434
          %437 = dma.hbm_to_vmem [thread:$0]  %s433, 128, %s435, %s423
        $region68: #{tpu_custom_call.1} parent=63 // pred_fallthru
          _
      $region64: #{tpu_custom_call.1} parent=5 // pred_fallthru
        _
      %p438 = scmp.le.s32.totalorder 1, %s27
      %p439 = scmp.lt.s32.totalorder %s27, 3
      %p440 = pnand %p438, %p439
      %p441 = pneg %p440
      // Predicated region
      $region69: #{tpu_custom_call.1} parent=5 // pred_check
        _
      $region70: #{tpu_custom_call.1} parent=5 // pred_check_branch
        %443 = sbr.rel (%p440) target = $region72
      $region71: #{tpu_custom_call.1} parent=5 // pred_region
        %s444 = ssub.s32 %s27, 1
        %s445 = sand.u32 %s40, 1
        %s446 = scalar_lea.sflag [#allocation3], %s445
        %s447 = sand.u32 %s40, 1
        %s448 = smul.addr %s447, 8
        %s449 = scalar_lea.vmem [#allocation2], %s448
        // Predicated region
        $region73: #{tpu_custom_call.1} parent=71 // pred_check
          %p450 = pneg %p53
        $region74: #{tpu_custom_call.1} parent=71 // pred_check_branch
          %452 = sbr.rel (%p450) target = $region76
        $region75: #{tpu_custom_call.1} parent=71 // pred_region
          %454 = dma.done %s446, 128
        $region76: #{tpu_custom_call.1} parent=71 // pred_fallthru
          _
        // Predicated region
        $region77: #{tpu_custom_call.1} parent=71 // pred_check
          %p455 = pneg %p95
        $region78: #{tpu_custom_call.1} parent=71 // pred_check_branch
          %457 = sbr.rel (%p455) target = $region80
        $region79: #{tpu_custom_call.1} parent=71 // pred_region
          %459 = dma.done [#allocation6], 96
        $region80: #{tpu_custom_call.1} parent=71 // pred_fallthru
          _
        // Predicated region
        $region81: #{tpu_custom_call.1} parent=71 // pred_check
          %p460 = pneg %p158
        $region82: #{tpu_custom_call.1} parent=71 // pred_check_branch
          %462 = sbr.rel (%p460) target = $region84
        $region83: #{tpu_custom_call.1} parent=71 // pred_region
          %464 = dma.done [#allocation6], 32
        $region84: #{tpu_custom_call.1} parent=71 // pred_fallthru
          _
        // Predicated region
        $region85: #{tpu_custom_call.1} parent=71 // pred_check
          %p465 = pneg %p284
        $region86: #{tpu_custom_call.1} parent=71 // pred_check_branch
          %467 = sbr.rel (%p465) target = $region88
        $region87: #{tpu_custom_call.1} parent=71 // pred_region
          %469 = dma.done [#allocation9], 32
        $region88: #{tpu_custom_call.1} parent=71 // pred_fallthru
          _
        %s470 = sand.u32 %s40, 1
        %s471 = scalar_lea.sflag [#allocation3], %s470
        %s472 = sand.u32 %s40, 1
        %s473 = smul.addr %s472, 8
        %s474 = scalar_lea.vmem [#allocation2], %s473
        %p475 = pneg %p53
        %p476 = pneg %p50
        %p477 = pneg %p74
        %p478 = pneg %p71
        %p479 = pneg %p95
        %p480 = pneg %p92
        %p481 = pneg %p116
        %p482 = pneg %p113
        %p483 = pneg %p137
        %p484 = pneg %p134
        %p485 = pneg %p158
        %p486 = pneg %p155
        %p487 = pneg %p179
        %p488 = pneg %p176
        %p489 = pneg %p200
        %p490 = pneg %p197
        %p491 = pneg %p221
        %p492 = pneg %p218
        %p493 = pneg %p242
        %p494 = pneg %p239
        %p495 = pneg %p263
        %p496 = pneg %p260
        %p497 = pneg %p284
        %p498 = pneg %p281
        %p499 = pneg %p305
        %p500 = pneg %p302
        %p501 = pneg %p331
        %p502 = pneg %p328
        %s503 = sand.u32 %s318, 1
        %s504 = scalar_lea.sflag [#allocation4], %s503
        %s505 = sand.u32 %s318, 1
        %s506 = smul.addr %s505, 4
        %s507 = scalar_lea.vmem [#allocation10], %s506
        %v509 = vld [vmem:[%s449] sm:$0xff]
        %v510 = vpack.c.bf16 %v509, %v509
        %v511 = vld [vmem:[%s1] sm:$0xf]
        %v512 = vld [vmem:[%s1 + $0x4] sm:$0xf]
        %v513 = vld [vmem:[%s1 + $0x8] sm:$0xf]
        %v514 = vld [vmem:[%s1 + $0xc] sm:$0xf]
        %v515 = vld [vmem:[#allocation5] sm:$0x1]
        %v517 = vperm.slane %v515, 0
        %v523 = vunpack.c.l.b16 %v511
        %v524 = vunpack.c.l.b16 %v512
        %v525 = vunpack.c.l.b16 %v513
        %v526 = vunpack.c.l.b16 %v514
        %v527 = vpack.c.b16 %v524, %v523
        %v528 = vpack.c.b16 %v526, %v525
        %vm531 = vcmask 261120
        %v533 = vsel %vm531, %v510, 0
        %535 = vmatpush.bf16.msra.mxu0 0
        %536 = vmatpush.bf16.msra.mxu0 0
        %537 = vmatpush.bf16.msra.mxu0 0
        %538 = vmatpush.bf16.msra.mxu0 0
        %539 = vmatpush.bf16.msra.mxu0 0
        %540 = vmatpush.bf16.msra.mxu0 0
        %541 = vmatpush.bf16.msra.mxu0 %v528
        %542 = vmatpush.bf16.msra.mxu0 %v527
        %543 = vmatmul.bf16.gmra.mxu0 %v533
        %v544 = vpop.f32.mrf.mxu0
        %v545 = vadd.f32 %v517, %v544
        %v546 = vpop.f32.mrf.mxu0
        %547 = vdwg.mxu0
        %s548 = scalar_lea.vmem %s1, 16
        %v549 = vld [vmem:[%s548] sm:$0xf]
        %v550 = vld [vmem:[%s548 + $0x4] sm:$0xf]
        %v551 = vld [vmem:[%s548 + $0x8] sm:$0xf]
        %v552 = vld [vmem:[%s548 + $0xc] sm:$0xf]
        %s553 = scalar_lea.vmem [#allocation5], 1
        %v554 = vld [vmem:[%s553] sm:$0x1]
        %v556 = vperm.slane %v554, 0
        %v562 = vunpack.c.l.b16 %v549
        %v563 = vunpack.c.l.b16 %v550
        %v564 = vunpack.c.l.b16 %v551
        %v565 = vunpack.c.l.b16 %v552
        %v566 = vpack.c.b16 %v563, %v562
        %v567 = vpack.c.b16 %v565, %v564
        %570 = vmatpush.bf16.msra.mxu0 0
        %571 = vmatpush.bf16.msra.mxu0 0
        %572 = vmatpush.bf16.msra.mxu0 0
        %573 = vmatpush.bf16.msra.mxu0 0
        %574 = vmatpush.bf16.msra.mxu0 0
        %575 = vmatpush.bf16.msra.mxu0 0
        %576 = vmatpush.bf16.msra.mxu0 %v567
        %577 = vmatpush.bf16.msra.mxu0 %v566
        %578 = vmatmul.bf16.gmra.mxu0 %v533
        %v579 = vpop.f32.mrf.mxu0
        %v580 = vadd.f32 %v556, %v579
        %v581 = vpop.f32.mrf.mxu0
        %582 = vdwg.mxu0
        %s583 = scalar_lea.vmem %s1, 32
        %v584 = vld [vmem:[%s583] sm:$0xf]
        %v585 = vld [vmem:[%s583 + $0x4] sm:$0xf]
        %v586 = vld [vmem:[%s583 + $0x8] sm:$0xf]
        %v587 = vld [vmem:[%s583 + $0xc] sm:$0xf]
        %s588 = scalar_lea.vmem [#allocation5], 2
        %v589 = vld [vmem:[%s588] sm:$0x1]
        %v591 = vperm.slane %v589, 0
        %v597 = vunpack.c.l.b16 %v584
        %v598 = vunpack.c.l.b16 %v585
        %v599 = vunpack.c.l.b16 %v586
        %v600 = vunpack.c.l.b16 %v587
        %v601 = vpack.c.b16 %v598, %v597
        %v602 = vpack.c.b16 %v600, %v599
        %605 = vmatpush.bf16.msra.mxu0 0
        %606 = vmatpush.bf16.msra.mxu0 0
        %607 = vmatpush.bf16.msra.mxu0 0
        %608 = vmatpush.bf16.msra.mxu0 0
        %609 = vmatpush.bf16.msra.mxu0 0
        %610 = vmatpush.bf16.msra.mxu0 0
        %611 = vmatpush.bf16.msra.mxu0 %v602
        %612 = vmatpush.bf16.msra.mxu0 %v601
        %613 = vmatmul.bf16.gmra.mxu0 %v533
        %v614 = vpop.f32.mrf.mxu0
        %v615 = vadd.f32 %v591, %v614
        %v616 = vpop.f32.mrf.mxu0
        %617 = vdwg.mxu0
        %619 = vrot.lane.b32.xlu0 %v545, 120
        %v620 = vpop.permute.xlu0 %619
        %621 = vrot.lane.b32.xlu0 %v545, 112
        %v622 = vpop.permute.xlu0 %621
        %623 = vrot.lane.b32.xlu0 %v545, 104
        %v624 = vpop.permute.xlu0 %623
        %626 = vrot.lane.b32.xlu0 %v580, 120
        %v627 = vpop.permute.xlu0 %626
        %629 = vrot.lane.b32.xlu0 %v580, 112
        %v630 = vpop.permute.xlu0 %629
        %632 = vrot.lane.b32.xlu0 %v580, 104
        %v633 = vpop.permute.xlu0 %632
        %636 = vrot.lane.b32.xlu0 %v615, 120
        %v637 = vpop.permute.xlu0 %636
        %639 = vrot.lane.b32.xlu0 %v615, 112
        %v640 = vpop.permute.xlu0 %639
        %642 = vrot.lane.b32.xlu0 %v615, 104
        %v643 = vpop.permute.xlu0 %642
        %645 = vxpose.xlu0.b32.start [1/16] %v580, 128
        %646 = vxpose.xlu0.b32.cont [2/16] 0.0, 128
        %647 = vxpose.xlu0.b32.cont [3/16] 0.0, 128
        %648 = vxpose.xlu0.b32.cont [4/16] 0.0, 128
        %649 = vxpose.xlu0.b32.cont [5/16] 0.0, 128
        %650 = vxpose.xlu0.b32.cont [6/16] 0.0, 128
        %651 = vxpose.xlu0.b32.cont [7/16] 0.0, 128
        %652 = vxpose.xlu0.b32.cont [8/16] 0.0, 128
        %653 = vxpose.xlu0.b32.cont [9/16] 0.0, 128
        %654 = vxpose.xlu0.b32.cont [10/16] 0.0, 128
        %655 = vxpose.xlu0.b32.cont [11/16] 0.0, 128
        %656 = vxpose.xlu0.b32.cont [12/16] 0.0, 128
        %657 = vxpose.xlu0.b32.cont [13/16] 0.0, 128
        %658 = vxpose.xlu0.b32.cont [14/16] 0.0, 128
        %659 = vxpose.xlu0.b32.cont [15/16] 0.0, 128
        %660 = vxpose.xlu0.b32.end [16/16] 0.0, 128
        %v661 = vpop.trf.xlu0
        %v662 = vpop.trf.xlu0
        %v663 = vpop.trf.xlu0
        %v664 = vpop.trf.xlu0
        %v665 = vpop.trf.xlu0
        %v666 = vpop.trf.xlu0
        %v667 = vpop.trf.xlu0
        %v668 = vpop.trf.xlu0
        %v669 = vpop.trf.xlu0
        %v670 = vpop.trf.xlu0
        %v671 = vpop.trf.xlu0
        %v672 = vpop.trf.xlu0
        %v673 = vpop.trf.xlu0
        %v674 = vpop.trf.xlu0
        %v675 = vpop.trf.xlu0
        %v676 = vpop.trf.xlu0
        %677 = vxpose.xlu0.b32.start [1/16] %v627, 128
        %678 = vxpose.xlu0.b32.cont [2/16] 0.0, 128
        %679 = vxpose.xlu0.b32.cont [3/16] 0.0, 128
        %680 = vxpose.xlu0.b32.cont [4/16] 0.0, 128
        %681 = vxpose.xlu0.b32.cont [5/16] 0.0, 128
        %682 = vxpose.xlu0.b32.cont [6/16] 0.0, 128
        %683 = vxpose.xlu0.b32.cont [7/16] 0.0, 128
        %684 = vxpose.xlu0.b32.cont [8/16] 0.0, 128
        %685 = vxpose.xlu0.b32.cont [9/16] 0.0, 128
        %686 = vxpose.xlu0.b32.cont [10/16] 0.0, 128
        %687 = vxpose.xlu0.b32.cont [11/16] 0.0, 128
        %688 = vxpose.xlu0.b32.cont [12/16] 0.0, 128
        %689 = vxpose.xlu0.b32.cont [13/16] 0.0, 128
        %690 = vxpose.xlu0.b32.cont [14/16] 0.0, 128
        %691 = vxpose.xlu0.b32.cont [15/16] 0.0, 128
        %692 = vxpose.xlu0.b32.end [16/16] 0.0, 128
        %v693 = vpop.trf.xlu0
        %v694 = vpop.trf.xlu0
        %v695 = vpop.trf.xlu0
        %v696 = vpop.trf.xlu0
        %v697 = vpop.trf.xlu0
        %v698 = vpop.trf.xlu0
        %v699 = vpop.trf.xlu0
        %v700 = vpop.trf.xlu0
        %v701 = vpop.trf.xlu0
        %v702 = vpop.trf.xlu0
        %v703 = vpop.trf.xlu0
        %v704 = vpop.trf.xlu0
        %v705 = vpop.trf.xlu0
        %v706 = vpop.trf.xlu0
        %v707 = vpop.trf.xlu0
        %v708 = vpop.trf.xlu0
        %709 = vxpose.xlu0.b32.start [1/16] %v630, 128
        %710 = vxpose.xlu0.b32.cont [2/16] 0.0, 128
        %711 = vxpose.xlu0.b32.cont [3/16] 0.0, 128
        %712 = vxpose.xlu0.b32.cont [4/16] 0.0, 128
        %713 = vxpose.xlu0.b32.cont [5/16] 0.0, 128
        %714 = vxpose.xlu0.b32.cont [6/16] 0.0, 128
        %715 = vxpose.xlu0.b32.cont [7/16] 0.0, 128
        %716 = vxpose.xlu0.b32.cont [8/16] 0.0, 128
        %717 = vxpose.xlu0.b32.cont [9/16] 0.0, 128
        %718 = vxpose.xlu0.b32.cont [10/16] 0.0, 128
        %719 = vxpose.xlu0.b32.cont [11/16] 0.0, 128
        %720 = vxpose.xlu0.b32.cont [12/16] 0.0, 128
        %721 = vxpose.xlu0.b32.cont [13/16] 0.0, 128
        %722 = vxpose.xlu0.b32.cont [14/16] 0.0, 128
        %723 = vxpose.xlu0.b32.cont [15/16] 0.0, 128
        %724 = vxpose.xlu0.b32.end [16/16] 0.0, 128
        %v725 = vpop.trf.xlu0
        %v726 = vpop.trf.xlu0
        %v727 = vpop.trf.xlu0
        %v728 = vpop.trf.xlu0
        %v729 = vpop.trf.xlu0
        %v730 = vpop.trf.xlu0
        %v731 = vpop.trf.xlu0
        %v732 = vpop.trf.xlu0
        %v733 = vpop.trf.xlu0
        %v734 = vpop.trf.xlu0
        %v735 = vpop.trf.xlu0
        %v736 = vpop.trf.xlu0
        %v737 = vpop.trf.xlu0
        %v738 = vpop.trf.xlu0
        %v739 = vpop.trf.xlu0
        %v740 = vpop.trf.xlu0
        %741 = vxpose.xlu0.b32.start [1/16] %v633, 128
        %742 = vxpose.xlu0.b32.cont [2/16] 0.0, 128
        %743 = vxpose.xlu0.b32.cont [3/16] 0.0, 128
        %744 = vxpose.xlu0.b32.cont [4/16] 0.0, 128
        %745 = vxpose.xlu0.b32.cont [5/16] 0.0, 128
        %746 = vxpose.xlu0.b32.cont [6/16] 0.0, 128
        %747 = vxpose.xlu0.b32.cont [7/16] 0.0, 128
        %748 = vxpose.xlu0.b32.cont [8/16] 0.0, 128
        %749 = vxpose.xlu0.b32.cont [9/16] 0.0, 128
        %750 = vxpose.xlu0.b32.cont [10/16] 0.0, 128
        %751 = vxpose.xlu0.b32.cont [11/16] 0.0, 128
        %752 = vxpose.xlu0.b32.cont [12/16] 0.0, 128
        %753 = vxpose.xlu0.b32.cont [13/16] 0.0, 128
        %754 = vxpose.xlu0.b32.cont [14/16] 0.0, 128
        %755 = vxpose.xlu0.b32.cont [15/16] 0.0, 128
        %756 = vxpose.xlu0.b32.end [16/16] 0.0, 128
        %v757 = vpop.trf.xlu0
        %v758 = vpop.trf.xlu0
        %v759 = vpop.trf.xlu0
        %v760 = vpop.trf.xlu0
        %v761 = vpop.trf.xlu0
        %v762 = vpop.trf.xlu0
        %v763 = vpop.trf.xlu0
        %v764 = vpop.trf.xlu0
        %v765 = vpop.trf.xlu0
        %v766 = vpop.trf.xlu0
        %v767 = vpop.trf.xlu0
        %v768 = vpop.trf.xlu0
        %v769 = vpop.trf.xlu0
        %v770 = vpop.trf.xlu0
        %v771 = vpop.trf.xlu0
        %v772 = vpop.trf.xlu0
        %vm773 = vcmask 64512
        %v774 = vsel %vm773, %v545, 0
        %776 = vmatpush.msra.mxu0 0.0
        %777 = vmatpush.msra.mxu0 0.0
        %778 = vmatpush.msra.mxu0 0.0
        %779 = vmatpush.msra.mxu0 0.0
        %780 = vmatpush.msra.mxu0 0.0
        %781 = vmatpush.msra.mxu0 0.0
        %782 = vmatpush.msra.mxu0 0.0
        %783 = vmatpush.msra.mxu0 0.0
        %784 = vmatpush.msra.mxu0 0.0
        %785 = vmatpush.msra.mxu0 0.0
        %786 = vmatpush.msra.mxu0 0.0
        %787 = vmatpush.msra.mxu0 0.0
        %788 = vmatpush.msra.mxu0 0.0
        %789 = vmatpush.msra.mxu0 0.0
        %790 = vmatpush.msra.mxu0 0.0
        %791 = vmatpush.msra.mxu0 %v661
        %792 = vmatmul.f32.gmra.mxu0 %v774
        %v793 = vpop.f32.mrf.mxu0
        %v794 = vadd.f32 0.0, %v793
        %795 = vdwg.mxu0
        %v796 = vsel %vm773, %v620, 0
        %798 = vmatpush.msra.mxu0 0.0
        %799 = vmatpush.msra.mxu0 0.0
        %800 = vmatpush.msra.mxu0 0.0
        %801 = vmatpush.msra.mxu0 0.0
        %802 = vmatpush.msra.mxu0 0.0
        %803 = vmatpush.msra.mxu0 0.0
        %804 = vmatpush.msra.mxu0 0.0
        %805 = vmatpush.msra.mxu0 0.0
        %806 = vmatpush.msra.mxu0 0.0
        %807 = vmatpush.msra.mxu0 0.0
        %808 = vmatpush.msra.mxu0 0.0
        %809 = vmatpush.msra.mxu0 0.0
        %810 = vmatpush.msra.mxu0 0.0
        %811 = vmatpush.msra.mxu0 0.0
        %812 = vmatpush.msra.mxu0 0.0
        %813 = vmatpush.msra.mxu0 %v693
        %814 = vmatmul.f32.gmra.mxu0 %v796
        %v815 = vpop.f32.mrf.mxu0
        %v816 = vadd.f32 0.0, %v815
        %817 = vdwg.mxu0
        %v818 = vsel %vm773, %v622, 0
        %820 = vmatpush.msra.mxu0 0.0
        %821 = vmatpush.msra.mxu0 0.0
        %822 = vmatpush.msra.mxu0 0.0
        %823 = vmatpush.msra.mxu0 0.0
        %824 = vmatpush.msra.mxu0 0.0
        %825 = vmatpush.msra.mxu0 0.0
        %826 = vmatpush.msra.mxu0 0.0
        %827 = vmatpush.msra.mxu0 0.0
        %828 = vmatpush.msra.mxu0 0.0
        %829 = vmatpush.msra.mxu0 0.0
        %830 = vmatpush.msra.mxu0 0.0
        %831 = vmatpush.msra.mxu0 0.0
        %832 = vmatpush.msra.mxu0 0.0
        %833 = vmatpush.msra.mxu0 0.0
        %834 = vmatpush.msra.mxu0 0.0
        %835 = vmatpush.msra.mxu0 %v725
        %836 = vmatmul.f32.gmra.mxu0 %v818
        %v837 = vpop.f32.mrf.mxu0
        %v838 = vadd.f32 0.0, %v837
        %839 = vdwg.mxu0
        %v840 = vsel %vm773, %v624, 0
        %842 = vmatpush.msra.mxu0 0.0
        %843 = vmatpush.msra.mxu0 0.0
        %844 = vmatpush.msra.mxu0 0.0
        %845 = vmatpush.msra.mxu0 0.0
        %846 = vmatpush.msra.mxu0 0.0
        %847 = vmatpush.msra.mxu0 0.0
        %848 = vmatpush.msra.mxu0 0.0
        %849 = vmatpush.msra.mxu0 0.0
        %850 = vmatpush.msra.mxu0 0.0
        %851 = vmatpush.msra.mxu0 0.0
        %852 = vmatpush.msra.mxu0 0.0
        %853 = vmatpush.msra.mxu0 0.0
        %854 = vmatpush.msra.mxu0 0.0
        %855 = vmatpush.msra.mxu0 0.0
        %856 = vmatpush.msra.mxu0 0.0
        %857 = vmatpush.msra.mxu0 %v757
        %858 = vmatmul.f32.gmra.mxu0 %v840
        %v859 = vpop.f32.mrf.mxu0
        %v860 = vadd.f32 0.0, %v859
        %861 = vdwg.mxu0
        %v862 = vmul.f32 %v794, 0.17677669
        %v863 = vmul.f32 %v816, 0.17677669
        %v864 = vmul.f32 %v838, 0.17677669
        %v865 = vmul.f32 %v860, 0.17677669
        %v866 = vsel %vm773, %v862, -inf
        %867 = vmax.xlane.f32.xlu0 %v866
        %v868 = vpop.xlane.xlu0 %867
        %v869 = vsel %vm773, %v863, -inf
        %870 = vmax.xlane.f32.xlu0 %v869
        %v871 = vpop.xlane.xlu0 %870
        %v872 = vsel %vm773, %v864, -inf
        %873 = vmax.xlane.f32.xlu0 %v872
        %v874 = vpop.xlane.xlu0 %873
        %v875 = vsel %vm773, %v865, -inf
        %876 = vmax.xlane.f32.xlu0 %v875
        %v877 = vpop.xlane.xlu0 %876
        %v878 = vsub.f32 %v862, %v868
        %v879 = vsub.f32 %v863, %v871
        %v880 = vsub.f32 %v864, %v874
        %v881 = vsub.f32 %v865, %v877
        %v882 = vmul.f32 %v878, 1.442695
        %v883 = vpow.pop %v882
        %v884 = vmul.f32 %v879, 1.442695
        %v885 = vpow.pop %v884
        %v886 = vmul.f32 %v880, 1.442695
        %v887 = vpow.pop %v886
        %v888 = vmul.f32 %v881, 1.442695
        %v889 = vpow.pop %v888
        %v890 = vsel %vm773, %v883, 0.0
        %891 = vadd.xlane.f32.xlu0 %v890
        %v892 = vpop.xlane.xlu0 %891
        %v893 = vsel %vm773, %v885, 0.0
        %894 = vadd.xlane.f32.xlu0 %v893
        %v895 = vpop.xlane.xlu0 %894
        %v896 = vsel %vm773, %v887, 0.0
        %897 = vadd.xlane.f32.xlu0 %v896
        %v898 = vpop.xlane.xlu0 %897
        %v899 = vsel %vm773, %v889, 0.0
        %900 = vadd.xlane.f32.xlu0 %v899
        %v901 = vpop.xlane.xlu0 %900
        %v902 = vrcp.pop %v892
        %v903 = vrcp.pop %v895
        %v904 = vrcp.pop %v898
        %v905 = vrcp.pop %v901
        %v906 = vmul.f32 %v883, %v902
        %v907 = vmul.f32 %v885, %v903
        %v908 = vmul.f32 %v887, %v904
        %v909 = vmul.f32 %v889, %v905
        %910 = vxpose.xlu0.b32.start [1/16] %v615, 128
        %911 = vxpose.xlu0.b32.cont [2/16] 0.0, 128
        %912 = vxpose.xlu0.b32.cont [3/16] 0.0, 128
        %913 = vxpose.xlu0.b32.cont [4/16] 0.0, 128
        %914 = vxpose.xlu0.b32.cont [5/16] 0.0, 128
        %915 = vxpose.xlu0.b32.cont [6/16] 0.0, 128
        %916 = vxpose.xlu0.b32.cont [7/16] 0.0, 128
        %917 = vxpose.xlu0.b32.cont [8/16] 0.0, 128
        %918 = vxpose.xlu0.b32.cont [9/16] 0.0, 128
        %919 = vxpose.xlu0.b32.cont [10/16] 0.0, 128
        %920 = vxpose.xlu0.b32.cont [11/16] 0.0, 128
        %921 = vxpose.xlu0.b32.cont [12/16] 0.0, 128
        %922 = vxpose.xlu0.b32.cont [13/16] 0.0, 128
        %923 = vxpose.xlu0.b32.cont [14/16] 0.0, 128
        %924 = vxpose.xlu0.b32.cont [15/16] 0.0, 128
        %925 = vxpose.xlu0.b32.end [16/16] 0.0, 128
        %v926 = vpop.trf.xlu0
        %v927 = vpop.trf.xlu0
        %v928 = vpop.trf.xlu0
        %v929 = vpop.trf.xlu0
        %v930 = vpop.trf.xlu0
        %v931 = vpop.trf.xlu0
        %v932 = vpop.trf.xlu0
        %v933 = vpop.trf.xlu0
        %v934 = vpop.trf.xlu0
        %v935 = vpop.trf.xlu0
        %v936 = vpop.trf.xlu0
        %v937 = vpop.trf.xlu0
        %v938 = vpop.trf.xlu0
        %v939 = vpop.trf.xlu0
        %v940 = vpop.trf.xlu0
        %v941 = vpop.trf.xlu0
        %942 = vxpose.xlu0.b32.start [1/16] %v637, 128
        %943 = vxpose.xlu0.b32.cont [2/16] 0.0, 128
        %944 = vxpose.xlu0.b32.cont [3/16] 0.0, 128
        %945 = vxpose.xlu0.b32.cont [4/16] 0.0, 128
        %946 = vxpose.xlu0.b32.cont [5/16] 0.0, 128
        %947 = vxpose.xlu0.b32.cont [6/16] 0.0, 128
        %948 = vxpose.xlu0.b32.cont [7/16] 0.0, 128
        %949 = vxpose.xlu0.b32.cont [8/16] 0.0, 128
        %950 = vxpose.xlu0.b32.cont [9/16] 0.0, 128
        %951 = vxpose.xlu0.b32.cont [10/16] 0.0, 128
        %952 = vxpose.xlu0.b32.cont [11/16] 0.0, 128
        %953 = vxpose.xlu0.b32.cont [12/16] 0.0, 128
        %954 = vxpose.xlu0.b32.cont [13/16] 0.0, 128
        %955 = vxpose.xlu0.b32.cont [14/16] 0.0, 128
        %956 = vxpose.xlu0.b32.cont [15/16] 0.0, 128
        %957 = vxpose.xlu0.b32.end [16/16] 0.0, 128
        %v958 = vpop.trf.xlu0
        %v959 = vpop.trf.xlu0
        %v960 = vpop.trf.xlu0
        %v961 = vpop.trf.xlu0
        %v962 = vpop.trf.xlu0
        %v963 = vpop.trf.xlu0
        %v964 = vpop.trf.xlu0
        %v965 = vpop.trf.xlu0
        %v966 = vpop.trf.xlu0
        %v967 = vpop.trf.xlu0
        %v968 = vpop.trf.xlu0
        %v969 = vpop.trf.xlu0
        %v970 = vpop.trf.xlu0
        %v971 = vpop.trf.xlu0
        %v972 = vpop.trf.xlu0
        %v973 = vpop.trf.xlu0
        %974 = vxpose.xlu0.b32.start [1/16] %v640, 128
        %975 = vxpose.xlu0.b32.cont [2/16] 0.0, 128
        %976 = vxpose.xlu0.b32.cont [3/16] 0.0, 128
        %977 = vxpose.xlu0.b32.cont [4/16] 0.0, 128
        %978 = vxpose.xlu0.b32.cont [5/16] 0.0, 128
        %979 = vxpose.xlu0.b32.cont [6/16] 0.0, 128
        %980 = vxpose.xlu0.b32.cont [7/16] 0.0, 128
        %981 = vxpose.xlu0.b32.cont [8/16] 0.0, 128
        %982 = vxpose.xlu0.b32.cont [9/16] 0.0, 128
        %983 = vxpose.xlu0.b32.cont [10/16] 0.0, 128
        %984 = vxpose.xlu0.b32.cont [11/16] 0.0, 128
        %985 = vxpose.xlu0.b32.cont [12/16] 0.0, 128
        %986 = vxpose.xlu0.b32.cont [13/16] 0.0, 128
        %987 = vxpose.xlu0.b32.cont [14/16] 0.0, 128
        %988 = vxpose.xlu0.b32.cont [15/16] 0.0, 128
        %989 = vxpose.xlu0.b32.end [16/16] 0.0, 128
        %v990 = vpop.trf.xlu0
        %v991 = vpop.trf.xlu0
        %v992 = vpop.trf.xlu0
        %v993 = vpop.trf.xlu0
        %v994 = vpop.trf.xlu0
        %v995 = vpop.trf.xlu0
        %v996 = vpop.trf.xlu0
        %v997 = vpop.trf.xlu0
        %v998 = vpop.trf.xlu0
        %v999 = vpop.trf.xlu0
        %v1000 = vpop.trf.xlu0
        %v1001 = vpop.trf.xlu0
        %v1002 = vpop.trf.xlu0
        %v1003 = vpop.trf.xlu0
        %v1004 = vpop.trf.xlu0
        %v1005 = vpop.trf.xlu0
        %1006 = vxpose.xlu0.b32.start [1/16] %v643, 128
        %1007 = vxpose.xlu0.b32.cont [2/16] 0.0, 128
        %1008 = vxpose.xlu0.b32.cont [3/16] 0.0, 128
        %1009 = vxpose.xlu0.b32.cont [4/16] 0.0, 128
        %1010 = vxpose.xlu0.b32.cont [5/16] 0.0, 128
        %1011 = vxpose.xlu0.b32.cont [6/16] 0.0, 128
        %1012 = vxpose.xlu0.b32.cont [7/16] 0.0, 128
        %1013 = vxpose.xlu0.b32.cont [8/16] 0.0, 128
        %1014 = vxpose.xlu0.b32.cont [9/16] 0.0, 128
        %1015 = vxpose.xlu0.b32.cont [10/16] 0.0, 128
        %1016 = vxpose.xlu0.b32.cont [11/16] 0.0, 128
        %1017 = vxpose.xlu0.b32.cont [12/16] 0.0, 128
        %1018 = vxpose.xlu0.b32.cont [13/16] 0.0, 128
        %1019 = vxpose.xlu0.b32.cont [14/16] 0.0, 128
        %1020 = vxpose.xlu0.b32.cont [15/16] 0.0, 128
        %1021 = vxpose.xlu0.b32.end [16/16] 0.0, 128
        %v1022 = vpop.trf.xlu0
        %v1023 = vpop.trf.xlu0
        %v1024 = vpop.trf.xlu0
        %v1025 = vpop.trf.xlu0
        %v1026 = vpop.trf.xlu0
        %v1027 = vpop.trf.xlu0
        %v1028 = vpop.trf.xlu0
        %v1029 = vpop.trf.xlu0
        %v1030 = vpop.trf.xlu0
        %v1031 = vpop.trf.xlu0
        %v1032 = vpop.trf.xlu0
        %v1033 = vpop.trf.xlu0
        %v1034 = vpop.trf.xlu0
        %v1035 = vpop.trf.xlu0
        %v1036 = vpop.trf.xlu0
        %v1037 = vpop.trf.xlu0
        %v1039 = vsel %vm773, %v926, 0
        %v1042 = vsel %vm773, %v906, 0
        %1044 = vmatpush.xpose.msra.mxu0 0.0
        %1045 = vmatpush.xpose.msra.mxu0 0.0
        %1046 = vmatpush.xpose.msra.mxu0 0.0
        %1047 = vmatpush.xpose.msra.mxu0 0.0
        %1048 = vmatpush.xpose.msra.mxu0 0.0
        %1049 = vmatpush.xpose.msra.mxu0 0.0
        %1050 = vmatpush.xpose.msra.mxu0 0.0
        %1051 = vmatpush.xpose.msra.mxu0 0.0
        %1052 = vmatpush.xpose.msra.mxu0 0.0
        %1053 = vmatpush.xpose.msra.mxu0 0.0
        %1054 = vmatpush.xpose.msra.mxu0 0.0
        %1055 = vmatpush.xpose.msra.mxu0 0.0
        %1056 = vmatpush.xpose.msra.mxu0 0.0
        %1057 = vmatpush.xpose.msra.mxu0 0.0
        %1058 = vmatpush.xpose.msra.mxu0 0.0
        %1059 = vmatpush.xpose.msra.mxu0 %v1042
        %1060 = vmatmul.f32.gmra.mxu0 %v1039
        %v1061 = vpop.f32.mrf.mxu0
        %v1062 = vadd.f32 0.0, %v1061
        %1063 = vdwg.mxu0
        %v1065 = vsel %vm773, %v958, 0
        %v1068 = vsel %vm773, %v907, 0
        %1070 = vmatpush.xpose.msra.mxu0 0.0
        %1071 = vmatpush.xpose.msra.mxu0 0.0
        %1072 = vmatpush.xpose.msra.mxu0 0.0
        %1073 = vmatpush.xpose.msra.mxu0 0.0
        %1074 = vmatpush.xpose.msra.mxu0 0.0
        %1075 = vmatpush.xpose.msra.mxu0 0.0
        %1076 = vmatpush.xpose.msra.mxu0 0.0
        %1077 = vmatpush.xpose.msra.mxu0 0.0
        %1078 = vmatpush.xpose.msra.mxu0 0.0
        %1079 = vmatpush.xpose.msra.mxu0 0.0
        %1080 = vmatpush.xpose.msra.mxu0 0.0
        %1081 = vmatpush.xpose.msra.mxu0 0.0
        %1082 = vmatpush.xpose.msra.mxu0 0.0
        %1083 = vmatpush.xpose.msra.mxu0 0.0
        %1084 = vmatpush.xpose.msra.mxu0 0.0
        %1085 = vmatpush.xpose.msra.mxu0 %v1068
        %1086 = vmatmul.f32.gmra.mxu0 %v1065
        %v1087 = vpop.f32.mrf.mxu0
        %v1088 = vadd.f32 0.0, %v1087
        %1089 = vdwg.mxu0
        %v1091 = vsel %vm773, %v990, 0
        %v1094 = vsel %vm773, %v908, 0
        %1096 = vmatpush.xpose.msra.mxu0 0.0
        %1097 = vmatpush.xpose.msra.mxu0 0.0
        %1098 = vmatpush.xpose.msra.mxu0 0.0
        %1099 = vmatpush.xpose.msra.mxu0 0.0
        %1100 = vmatpush.xpose.msra.mxu0 0.0
        %1101 = vmatpush.xpose.msra.mxu0 0.0
        %1102 = vmatpush.xpose.msra.mxu0 0.0
        %1103 = vmatpush.xpose.msra.mxu0 0.0
        %1104 = vmatpush.xpose.msra.mxu0 0.0
        %1105 = vmatpush.xpose.msra.mxu0 0.0
        %1106 = vmatpush.xpose.msra.mxu0 0.0
        %1107 = vmatpush.xpose.msra.mxu0 0.0
        %1108 = vmatpush.xpose.msra.mxu0 0.0
        %1109 = vmatpush.xpose.msra.mxu0 0.0
        %1110 = vmatpush.xpose.msra.mxu0 0.0
        %1111 = vmatpush.xpose.msra.mxu0 %v1094
        %1112 = vmatmul.f32.gmra.mxu0 %v1091
        %v1113 = vpop.f32.mrf.mxu0
        %v1114 = vadd.f32 0.0, %v1113
        %1115 = vdwg.mxu0
        %v1117 = vsel %vm773, %v1022, 0
        %v1120 = vsel %vm773, %v909, 0
        %1122 = vmatpush.xpose.msra.mxu0 0.0
        %1123 = vmatpush.xpose.msra.mxu0 0.0
        %1124 = vmatpush.xpose.msra.mxu0 0.0
        %1125 = vmatpush.xpose.msra.mxu0 0.0
        %1126 = vmatpush.xpose.msra.mxu0 0.0
        %1127 = vmatpush.xpose.msra.mxu0 0.0
        %1128 = vmatpush.xpose.msra.mxu0 0.0
        %1129 = vmatpush.xpose.msra.mxu0 0.0
        %1130 = vmatpush.xpose.msra.mxu0 0.0
        %1131 = vmatpush.xpose.msra.mxu0 0.0
        %1132 = vmatpush.xpose.msra.mxu0 0.0
        %1133 = vmatpush.xpose.msra.mxu0 0.0
        %1134 = vmatpush.xpose.msra.mxu0 0.0
        %1135 = vmatpush.xpose.msra.mxu0 0.0
        %1136 = vmatpush.xpose.msra.mxu0 0.0
        %1137 = vmatpush.xpose.msra.mxu0 %v1120
        %1138 = vmatmul.f32.gmra.mxu0 %v1117
        %v1139 = vpop.f32.mrf.mxu0
        %v1140 = vadd.f32 0.0, %v1139
        %1141 = vdwg.mxu0
        %1142 = vxpose.xlu0.b32.start [1/16] %v1062, 128
        %1143 = vxpose.xlu0.b32.cont [2/16] 0.0, 128
        %1144 = vxpose.xlu0.b32.cont [3/16] 0.0, 128
        %1145 = vxpose.xlu0.b32.cont [4/16] 0.0, 128
        %1146 = vxpose.xlu0.b32.cont [5/16] 0.0, 128
        %1147 = vxpose.xlu0.b32.cont [6/16] 0.0, 128
        %1148 = vxpose.xlu0.b32.cont [7/16] 0.0, 128
        %1149 = vxpose.xlu0.b32.cont [8/16] 0.0, 128
        %1150 = vxpose.xlu0.b32.cont [9/16] 0.0, 128
        %1151 = vxpose.xlu0.b32.cont [10/16] 0.0, 128
        %1152 = vxpose.xlu0.b32.cont [11/16] 0.0, 128
        %1153 = vxpose.xlu0.b32.cont [12/16] 0.0, 128
        %1154 = vxpose.xlu0.b32.cont [13/16] 0.0, 128
        %1155 = vxpose.xlu0.b32.cont [14/16] 0.0, 128
        %1156 = vxpose.xlu0.b32.cont [15/16] 0.0, 128
        %1157 = vxpose.xlu0.b32.end [16/16] 0.0, 128
        %v1158 = vpop.trf.xlu0
        %v1159 = vpop.trf.xlu0
        %v1160 = vpop.trf.xlu0
        %v1161 = vpop.trf.xlu0
        %v1162 = vpop.trf.xlu0
        %v1163 = vpop.trf.xlu0
        %v1164 = vpop.trf.xlu0
        %v1165 = vpop.trf.xlu0
        %v1166 = vpop.trf.xlu0
        %v1167 = vpop.trf.xlu0
        %v1168 = vpop.trf.xlu0
        %v1169 = vpop.trf.xlu0
        %v1170 = vpop.trf.xlu0
        %v1171 = vpop.trf.xlu0
        %v1172 = vpop.trf.xlu0
        %v1173 = vpop.trf.xlu0
        %1174 = vxpose.xlu0.b32.start [1/16] %v1088, 128
        %1175 = vxpose.xlu0.b32.cont [2/16] 0.0, 128
        %1176 = vxpose.xlu0.b32.cont [3/16] 0.0, 128
        %1177 = vxpose.xlu0.b32.cont [4/16] 0.0, 128
        %1178 = vxpose.xlu0.b32.cont [5/16] 0.0, 128
        %1179 = vxpose.xlu0.b32.cont [6/16] 0.0, 128
        %1180 = vxpose.xlu0.b32.cont [7/16] 0.0, 128
        %1181 = vxpose.xlu0.b32.cont [8/16] 0.0, 128
        %1182 = vxpose.xlu0.b32.cont [9/16] 0.0, 128
        %1183 = vxpose.xlu0.b32.cont [10/16] 0.0, 128
        %1184 = vxpose.xlu0.b32.cont [11/16] 0.0, 128
        %1185 = vxpose.xlu0.b32.cont [12/16] 0.0, 128
        %1186 = vxpose.xlu0.b32.cont [13/16] 0.0, 128
        %1187 = vxpose.xlu0.b32.cont [14/16] 0.0, 128
        %1188 = vxpose.xlu0.b32.cont [15/16] 0.0, 128
        %1189 = vxpose.xlu0.b32.end [16/16] 0.0, 128
        %v1190 = vpop.trf.xlu0
        %v1191 = vpop.trf.xlu0
        %v1192 = vpop.trf.xlu0
        %v1193 = vpop.trf.xlu0
        %v1194 = vpop.trf.xlu0
        %v1195 = vpop.trf.xlu0
        %v1196 = vpop.trf.xlu0
        %v1197 = vpop.trf.xlu0
        %v1198 = vpop.trf.xlu0
        %v1199 = vpop.trf.xlu0
        %v1200 = vpop.trf.xlu0
        %v1201 = vpop.trf.xlu0
        %v1202 = vpop.trf.xlu0
        %v1203 = vpop.trf.xlu0
        %v1204 = vpop.trf.xlu0
        %v1205 = vpop.trf.xlu0
        %1206 = vxpose.xlu0.b32.start [1/16] %v1114, 128
        %1207 = vxpose.xlu0.b32.cont [2/16] 0.0, 128
        %1208 = vxpose.xlu0.b32.cont [3/16] 0.0, 128
        %1209 = vxpose.xlu0.b32.cont [4/16] 0.0, 128
        %1210 = vxpose.xlu0.b32.cont [5/16] 0.0, 128
        %1211 = vxpose.xlu0.b32.cont [6/16] 0.0, 128
        %1212 = vxpose.xlu0.b32.cont [7/16] 0.0, 128
        %1213 = vxpose.xlu0.b32.cont [8/16] 0.0, 128
        %1214 = vxpose.xlu0.b32.cont [9/16] 0.0, 128
        %1215 = vxpose.xlu0.b32.cont [10/16] 0.0, 128
        %1216 = vxpose.xlu0.b32.cont [11/16] 0.0, 128
        %1217 = vxpose.xlu0.b32.cont [12/16] 0.0, 128
        %1218 = vxpose.xlu0.b32.cont [13/16] 0.0, 128
        %1219 = vxpose.xlu0.b32.cont [14/16] 0.0, 128
        %1220 = vxpose.xlu0.b32.cont [15/16] 0.0, 128
        %1221 = vxpose.xlu0.b32.end [16/16] 0.0, 128
        %v1222 = vpop.trf.xlu0
        %v1223 = vpop.trf.xlu0
        %v1224 = vpop.trf.xlu0
        %v1225 = vpop.trf.xlu0
        %v1226 = vpop.trf.xlu0
        %v1227 = vpop.trf.xlu0
        %v1228 = vpop.trf.xlu0
        %v1229 = vpop.trf.xlu0
        %v1230 = vpop.trf.xlu0
        %v1231 = vpop.trf.xlu0
        %v1232 = vpop.trf.xlu0
        %v1233 = vpop.trf.xlu0
        %v1234 = vpop.trf.xlu0
        %v1235 = vpop.trf.xlu0
        %v1236 = vpop.trf.xlu0
        %v1237 = vpop.trf.xlu0
        %1238 = vxpose.xlu0.b32.start [1/16] %v1140, 128
        %1239 = vxpose.xlu0.b32.cont [2/16] 0.0, 128
        %1240 = vxpose.xlu0.b32.cont [3/16] 0.0, 128
        %1241 = vxpose.xlu0.b32.cont [4/16] 0.0, 128
        %1242 = vxpose.xlu0.b32.cont [5/16] 0.0, 128
        %1243 = vxpose.xlu0.b32.cont [6/16] 0.0, 128
        %1244 = vxpose.xlu0.b32.cont [7/16] 0.0, 128
        %1245 = vxpose.xlu0.b32.cont [8/16] 0.0, 128
        %1246 = vxpose.xlu0.b32.cont [9/16] 0.0, 128
        %1247 = vxpose.xlu0.b32.cont [10/16] 0.0, 128
        %1248 = vxpose.xlu0.b32.cont [11/16] 0.0, 128
        %1249 = vxpose.xlu0.b32.cont [12/16] 0.0, 128
        %1250 = vxpose.xlu0.b32.cont [13/16] 0.0, 128
        %1251 = vxpose.xlu0.b32.cont [14/16] 0.0, 128
        %1252 = vxpose.xlu0.b32.cont [15/16] 0.0, 128
        %1253 = vxpose.xlu0.b32.end [16/16] 0.0, 128
        %v1254 = vpop.trf.xlu0
        %v1255 = vpop.trf.xlu0
        %v1256 = vpop.trf.xlu0
        %v1257 = vpop.trf.xlu0
        %v1258 = vpop.trf.xlu0
        %v1259 = vpop.trf.xlu0
        %v1260 = vpop.trf.xlu0
        %v1261 = vpop.trf.xlu0
        %v1262 = vpop.trf.xlu0
        %v1263 = vpop.trf.xlu0
        %v1264 = vpop.trf.xlu0
        %v1265 = vpop.trf.xlu0
        %v1266 = vpop.trf.xlu0
        %v1267 = vpop.trf.xlu0
        %v1268 = vpop.trf.xlu0
        %v1269 = vpop.trf.xlu0
        %v1270 = vrot.slane %v1222, 4
        %vm1271 = vcmask 1047556
        %v1272 = vsel %vm1271, %v1270, %v1158
        %v1273 = vrot.slane %v1158, 4
        %v1274 = vsel %vm1271, %v1222, %v1273
        %v1276 = vunpack.c.l.s4 1983009808
        %v1277 = vunpack.c.0.s8 %v1276
        %v1278 = vperm.slane %v1272, %v1277
        %v1280 = vunpack.c.l.s4 1983009808
        %v1281 = vunpack.c.0.s8 %v1280
        %v1282 = vperm.slane %v1274, %v1281
        %v1283 = vrot.slane %v1254, 4
        %v1284 = vsel %vm1271, %v1283, %v1190
        %v1285 = vrot.slane %v1190, 4
        %v1286 = vsel %vm1271, %v1254, %v1285
        %v1288 = vunpack.c.l.s4 1983009808
        %v1289 = vunpack.c.0.s8 %v1288
        %v1290 = vperm.slane %v1284, %v1289
        %v1292 = vunpack.c.l.s4 1983009808
        %v1293 = vunpack.c.0.s8 %v1292
        %v1294 = vperm.slane %v1286, %v1293
        %v1295 = vrot.slane %v1290, 4
        %v1296 = vsel %vm1271, %v1295, %v1278
        %v1297 = vrot.slane %v1278, 4
        %v1298 = vsel %vm1271, %v1290, %v1297
        %v1300 = vunpack.c.l.s4 1934713408
        %v1301 = vunpack.c.0.s8 %v1300
        %v1302 = vperm.slane %v1296, %v1301
        %v1304 = vunpack.c.l.s4 1934713408
        %v1305 = vunpack.c.0.s8 %v1304
        %v1306 = vperm.slane %v1298, %v1305
        %v1307 = vrot.slane %v1294, 4
        %v1308 = vsel %vm1271, %v1307, %v1282
        %v1309 = vrot.slane %v1282, 4
        %v1310 = vsel %vm1271, %v1294, %v1309
        %v1312 = vunpack.c.l.s4 1934713408
        %v1313 = vunpack.c.0.s8 %v1312
        %v1314 = vperm.slane %v1308, %v1313
        %v1316 = vunpack.c.l.s4 1934713408
        %v1317 = vunpack.c.0.s8 %v1316
        %v1318 = vperm.slane %v1310, %v1317
        %v1319 = vrot.slane %v1302, 4
        %v1320 = vsel %vm1271, 0.0, %v1319
        %v1321 = vrot.slane %v1306, 4
        %v1322 = vsel %vm1271, 0.0, %v1321
        %v1323 = vrot.slane %v1314, 4
        %v1324 = vsel %vm1271, 0.0, %v1323
        %v1325 = vrot.slane %v1318, 4
        %v1326 = vsel %vm1271, 0.0, %v1325
        %v1327 = vsel %vm1271, %v1321, %v1302
        %v1329 = vunpack.c.l.s4 1983009808
        %v1330 = vunpack.c.0.s8 %v1329
        %v1331 = vperm.slane %v1327, %v1330
        %v1332 = vrot.slane %v1322, 4
        %v1333 = vsel %vm1271, %v1332, %v1320
        %v1335 = vunpack.c.l.s4 1983009808
        %v1336 = vunpack.c.0.s8 %v1335
        %v1337 = vperm.slane %v1333, %v1336
        %v1338 = vsel %vm1271, %v1325, %v1314
        %v1340 = vunpack.c.l.s4 1983009808
        %v1341 = vunpack.c.0.s8 %v1340
        %v1342 = vperm.slane %v1338, %v1341
        %v1343 = vrot.slane %v1326, 4
        %v1344 = vsel %vm1271, %v1343, %v1324
        %v1346 = vunpack.c.l.s4 1983009808
        %v1347 = vunpack.c.0.s8 %v1346
        %v1348 = vperm.slane %v1344, %v1347
        %v1349 = vrot.slane %v1337, 4
        %v1350 = vsel %vm1271, %v1349, %v1331
        %v1351 = vrot.slane %v1331, 4
        %v1352 = vsel %vm1271, %v1337, %v1351
        %v1354 = vunpack.c.l.s4 1934713408
        %v1355 = vunpack.c.0.s8 %v1354
        %v1356 = vperm.slane %v1350, %v1355
        %v1358 = vunpack.c.l.s4 1934713408
        %v1359 = vunpack.c.0.s8 %v1358
        %v1360 = vperm.slane %v1352, %v1359
        %v1361 = vrot.slane %v1348, 4
        %v1362 = vsel %vm1271, %v1361, %v1342
        %v1363 = vrot.slane %v1342, 4
        %v1364 = vsel %vm1271, %v1348, %v1363
        %v1366 = vunpack.c.l.s4 1934713408
        %v1367 = vunpack.c.0.s8 %v1366
        %v1368 = vperm.slane %v1362, %v1367
        %v1370 = vunpack.c.l.s4 1934713408
        %v1371 = vunpack.c.0.s8 %v1370
        %v1372 = vperm.slane %v1364, %v1371
        %v1373 = vrot.slane %v1368, 4
        %v1374 = vsel %vm1271, %v1373, %v1356
        %v1375 = vrot.slane %v1356, 4
        %v1376 = vsel %vm1271, %v1368, %v1375
        %v1377 = vrot.slane %v1372, 4
        %v1378 = vsel %vm1271, %v1377, %v1360
        %v1379 = vrot.slane %v1360, 4
        %v1380 = vsel %vm1271, %v1372, %v1379
        %1382 = vrot.lane.b32.xlu0 %v1376, 8
        %v1383 = vpop.permute.xlu0 %1382
        %1386 = vrot.lane.b32.xlu0 %v1378, 16
        %v1387 = vpop.permute.xlu0 %1386
        %1390 = vrot.lane.b32.xlu0 %v1380, 24
        %v1391 = vpop.permute.xlu0 %1390
        %v1393 = vsel %vm773, %v1374, %v1383
        %vm1394 = vcmask 130048
        %v1395 = vsel %vm1394, %v1393, %v1387
        %vm1396 = vcmask 195584
        %v1397 = vsel %vm1396, %v1395, %v1391
        %v1398 = vpack.c.bf16 %v1397, %v1397
        %v1399 = vld [vmem:[%s3] sm:$0xf]
        %v1400 = vld [vmem:[%s3 + $0x4] sm:$0xf]
        %v1401 = vld [vmem:[%s3 + $0x8] sm:$0xf]
        %v1402 = vld [vmem:[%s3 + $0xc] sm:$0xf]
        %v1403 = vld [vmem:[%s4] sm:$0x1]
        %v1405 = vperm.slane %v1403, 0
        %v1411 = vunpack.c.l.b16 %v1399
        %v1412 = vunpack.c.l.b16 %v1400
        %v1413 = vunpack.c.l.b16 %v1401
        %v1414 = vunpack.c.l.b16 %v1402
        %v1415 = vpack.c.b16 %v1412, %v1411
        %v1416 = vpack.c.b16 %v1414, %v1413
        %v1420 = vsel %vm531, %v1398, 0
        %1422 = vmatpush.bf16.msra.mxu0 0
        %1423 = vmatpush.bf16.msra.mxu0 0
        %1424 = vmatpush.bf16.msra.mxu0 0
        %1425 = vmatpush.bf16.msra.mxu0 0
        %1426 = vmatpush.bf16.msra.mxu0 0
        %1427 = vmatpush.bf16.msra.mxu0 0
        %1428 = vmatpush.bf16.msra.mxu0 %v1416
        %1429 = vmatpush.bf16.msra.mxu0 %v1415
        %1430 = vmatmul.bf16.gmra.mxu0 %v1420
        %v1431 = vpop.f32.mrf.mxu0
        %v1432 = vadd.f32 %v1405, %v1431
        %v1433 = vpop.f32.mrf.mxu0
        %1434 = vdwg.mxu0
        %v1435 = vadd.f32 %v1432, %v509
        %v1436 = vld [vmem:[#allocation7] sm:$0x1]
        %v1437 = vld [vmem:[%s6] sm:$0x1]
        %v1438 = vsel %vm531, %v1435, 0.0
        %1439 = vadd.xlane.f32.xlu0 %v1438
        %v1440 = vpop.xlane.xlu0 %1439
        %v1441 = vrcp.pop 32.0
        %v1442 = vmul.f32 32.0, %v1441
        %v1443 = vsub.f32 1.0, %v1442
        %v1444 = vmul.f32 %v1441, %v1443
        %v1445 = vadd.f32 %v1441, %v1444
        %vm1446 = vweird.f32 %v1441
        %v1447 = vsel %vm1446, %v1441, %v1445
        %v1448 = vmul.f32 %v1440, %v1447
        %v1449 = vsub.f32 %v1435, %v1448
        %v1450 = vmul.f32 %v1449, %v1449
        %v1451 = vsel %vm531, %v1450, 0.0
        %1452 = vadd.xlane.f32.xlu0 %v1451
        %v1453 = vpop.xlane.xlu0 %1452
        %v1454 = vmul.f32 %v1453, %v1447
        %v1455 = vadd.f32 %v1454, 1e-05
        %v1456 = vrsqrt.pop %v1455
        %v1457 = vmul.f32 %v1456, %v1455
        %v1458 = vmul.f32 %v1457, %v1456
        %v1459 = vmul.f32 0.5, %v1458
        %v1460 = vsub.f32 1.5, %v1459
        %v1461 = vmul.f32 %v1456, %v1460
        %vm1462 = vweird.f32 %v1455
        %vm1463 = vweird.f32 %v1456
        %vm1464 = vmor %vm1462, %vm1463
        %v1465 = vsel %vm1464, %v1456, %v1461
        %v1466 = vmul.f32 %v1449, %v1465
        %v1468 = vperm.slane %v1436, 0
        %v1470 = vmul.f32 %v1466, %v1468
        %v1472 = vperm.slane %v1437, 0
        %v1474 = vadd.f32 %v1470, %v1472
        %v1475 = vpack.c.bf16 %v1474, %v1474
        %v1476 = vld [vmem:[%s7] sm:$0xf]
        %v1477 = vld [vmem:[%s7 + $0x4] sm:$0xf]
        %v1478 = vld [vmem:[%s7 + $0x8] sm:$0xf]
        %v1479 = vld [vmem:[%s7 + $0xc] sm:$0xf]
        %v1480 = vld [vmem:[%s8] sm:$0x1]
        %v1482 = vperm.slane %v1480, 0
        %v1488 = vunpack.c.l.b16 %v1476
        %v1489 = vunpack.c.l.b16 %v1477
        %v1490 = vunpack.c.l.b16 %v1478
        %v1491 = vunpack.c.l.b16 %v1479
        %v1492 = vpack.c.b16 %v1489, %v1488
        %v1493 = vpack.c.b16 %v1491, %v1490
        %v1497 = vsel %vm531, %v1475, 0
        %1499 = vmatpush.bf16.msra.mxu0 0
        %1500 = vmatpush.bf16.msra.mxu0 0
        %1501 = vmatpush.bf16.msra.mxu0 0
        %1502 = vmatpush.bf16.msra.mxu0 0
        %1503 = vmatpush.bf16.msra.mxu0 0
        %1504 = vmatpush.bf16.msra.mxu0 0
        %1505 = vmatpush.bf16.msra.mxu0 %v1493
        %1506 = vmatpush.bf16.msra.mxu0 %v1492
        %1507 = vmatmul.bf16.gmra.mxu0 %v1497
        %v1508 = vpop.f32.mrf.mxu0
        %v1509 = vadd.f32 %v1482, %v1508
        %v1510 = vpop.f32.mrf.mxu0
        %1511 = vdwg.mxu0
        %v1512 = vmax.f32 %v1509, 0.0
        %v1513 = vpack.c.bf16 %v1512, %v1512
        %v1514 = vld [vmem:[%s9] sm:$0xf]
        %v1515 = vld [vmem:[%s9 + $0x4] sm:$0xf]
        %v1516 = vld [vmem:[%s9 + $0x8] sm:$0xf]
        %v1517 = vld [vmem:[%s9 + $0xc] sm:$0xf]
        %v1518 = vld [vmem:[%s9 + $0x10] sm:$0xf]
        %v1519 = vld [vmem:[%s9 + $0x14] sm:$0xf]
        %v1520 = vld [vmem:[%s9 + $0x18] sm:$0xf]
        %v1521 = vld [vmem:[%s9 + $0x1c] sm:$0xf]
        %v1522 = vld [vmem:[%s9 + $0x20] sm:$0xf]
        %v1523 = vld [vmem:[%s9 + $0x24] sm:$0xf]
        %v1524 = vld [vmem:[%s9 + $0x28] sm:$0xf]
        %v1525 = vld [vmem:[%s9 + $0x2c] sm:$0xf]
        %v1526 = vld [vmem:[%s9 + $0x30] sm:$0xf]
        %v1527 = vld [vmem:[%s9 + $0x34] sm:$0xf]
        %v1528 = vld [vmem:[%s9 + $0x38] sm:$0xf]
        %v1529 = vld [vmem:[%s9 + $0x3c] sm:$0xf]
        %v1530 = vld [vmem:[%s10] sm:$0x1]
        %v1532 = vperm.slane %v1530, 0
        %v1550 = vunpack.c.l.b16 %v1514
        %v1551 = vunpack.c.l.b16 %v1515
        %v1552 = vunpack.c.l.b16 %v1516
        %v1553 = vunpack.c.l.b16 %v1517
        %v1554 = vunpack.c.l.b16 %v1518
        %v1555 = vunpack.c.l.b16 %v1519
        %v1556 = vunpack.c.l.b16 %v1520
        %v1557 = vunpack.c.l.b16 %v1521
        %v1558 = vunpack.c.l.b16 %v1522
        %v1559 = vunpack.c.l.b16 %v1523
        %v1560 = vunpack.c.l.b16 %v1524
        %v1561 = vunpack.c.l.b16 %v1525
        %v1562 = vunpack.c.l.b16 %v1526
        %v1563 = vunpack.c.l.b16 %v1527
        %v1564 = vunpack.c.l.b16 %v1528
        %v1565 = vunpack.c.l.b16 %v1529
        %v1566 = vpack.c.b16 %v1551, %v1550
        %v1567 = vpack.c.b16 %v1553, %v1552
        %v1568 = vpack.c.b16 %v1555, %v1554
        %v1569 = vpack.c.b16 %v1557, %v1556
        %v1570 = vpack.c.b16 %v1559, %v1558
        %v1571 = vpack.c.b16 %v1561, %v1560
        %v1572 = vpack.c.b16 %v1563, %v1562
        %v1573 = vpack.c.b16 %v1565, %v1564
        %1582 = vmatpush.bf16.msra.mxu0 %v1573
        %1583 = vmatpush.bf16.msra.mxu0 %v1572
        %1584 = vmatpush.bf16.msra.mxu0 %v1571
        %1585 = vmatpush.bf16.msra.mxu0 %v1570
        %1586 = vmatpush.bf16.msra.mxu0 %v1569
        %1587 = vmatpush.bf16.msra.mxu0 %v1568
        %1588 = vmatpush.bf16.msra.mxu0 %v1567
        %1589 = vmatpush.bf16.msra.mxu0 %v1566
        %1590 = vmatmul.bf16.gmra.mxu0 %v1513
        %v1591 = vpop.f32.mrf.mxu0
        %v1592 = vadd.f32 %v1532, %v1591
        %v1593 = vpop.f32.mrf.mxu0
        %1594 = vdwg.mxu0
        %v1595 = vadd.f32 %v1592, %v1474
        %v1596 = vld [vmem:[#allocation8] sm:$0x1]
        %v1597 = vld [vmem:[%s12] sm:$0x1]
        %v1598 = vsel %vm531, %v1595, 0.0
        %1599 = vadd.xlane.f32.xlu0 %v1598
        %v1600 = vpop.xlane.xlu0 %1599
        %v1601 = vmul.f32 %v1600, %v1447
        %v1602 = vsub.f32 %v1595, %v1601
        %v1603 = vmul.f32 %v1602, %v1602
        %v1604 = vsel %vm531, %v1603, 0.0
        %1605 = vadd.xlane.f32.xlu0 %v1604
        %v1606 = vpop.xlane.xlu0 %1605
        %v1607 = vmul.f32 %v1606, %v1447
        %v1608 = vadd.f32 %v1607, 1e-05
        %v1609 = vrsqrt.pop %v1608
        %v1610 = vmul.f32 %v1609, %v1608
        %v1611 = vmul.f32 %v1610, %v1609
        %v1612 = vmul.f32 0.5, %v1611
        %v1613 = vsub.f32 1.5, %v1612
        %v1614 = vmul.f32 %v1609, %v1613
        %vm1615 = vweird.f32 %v1608
        %vm1616 = vweird.f32 %v1609
        %vm1617 = vmor %vm1615, %vm1616
        %v1618 = vsel %vm1617, %v1609, %v1614
        %v1619 = vmul.f32 %v1602, %v1618
        %v1621 = vperm.slane %v1596, 0
        %v1623 = vmul.f32 %v1619, %v1621
        %v1625 = vperm.slane %v1597, 0
        %v1627 = vadd.f32 %v1623, %v1625
        %v1628 = vpack.c.bf16 %v1627, %v1627
        %s1629 = scalar_lea.vmem %s1, 48
        %v1630 = vld [vmem:[%s1629] sm:$0xf]
        %v1631 = vld [vmem:[%s1629 + $0x4] sm:$0xf]
        %v1632 = vld [vmem:[%s1629 + $0x8] sm:$0xf]
        %v1633 = vld [vmem:[%s1629 + $0xc] sm:$0xf]
        %s1634 = scalar_lea.vmem [#allocation5], 3
        %v1635 = vld [vmem:[%s1634] sm:$0x1]
        %v1637 = vperm.slane %v1635, 0
        %v1643 = vunpack.c.l.b16 %v1630
        %v1644 = vunpack.c.l.b16 %v1631
        %v1645 = vunpack.c.l.b16 %v1632
        %v1646 = vunpack.c.l.b16 %v1633
        %v1647 = vpack.c.b16 %v1644, %v1643
        %v1648 = vpack.c.b16 %v1646, %v1645
        %v1652 = vsel %vm531, %v1628, 0
        %1654 = vmatpush.bf16.msra.mxu0 0
        %1655 = vmatpush.bf16.msra.mxu0 0
        %1656 = vmatpush.bf16.msra.mxu0 0
        %1657 = vmatpush.bf16.msra.mxu0 0
        %1658 = vmatpush.bf16.msra.mxu0 0
        %1659 = vmatpush.bf16.msra.mxu0 0
        %1660 = vmatpush.bf16.msra.mxu0 %v1648
        %1661 = vmatpush.bf16.msra.mxu0 %v1647
        %1662 = vmatmul.bf16.gmra.mxu0 %v1652
        %v1663 = vpop.f32.mrf.mxu0
        %v1664 = vadd.f32 %v1637, %v1663
        %v1665 = vpop.f32.mrf.mxu0
        %1666 = vdwg.mxu0
        %s1667 = scalar_lea.vmem %s1, 64
        %v1668 = vld [vmem:[%s1667] sm:$0xf]
        %v1669 = vld [vmem:[%s1667 + $0x4] sm:$0xf]
        %v1670 = vld [vmem:[%s1667 + $0x8] sm:$0xf]
        %v1671 = vld [vmem:[%s1667 + $0xc] sm:$0xf]
        %s1672 = scalar_lea.vmem [#allocation5], 4
        %v1673 = vld [vmem:[%s1672] sm:$0x1]
        %v1675 = vperm.slane %v1673, 0
        %v1681 = vunpack.c.l.b16 %v1668
        %v1682 = vunpack.c.l.b16 %v1669
        %v1683 = vunpack.c.l.b16 %v1670
        %v1684 = vunpack.c.l.b16 %v1671
        %v1685 = vpack.c.b16 %v1682, %v1681
        %v1686 = vpack.c.b16 %v1684, %v1683
        %1689 = vmatpush.bf16.msra.mxu0 0
        %1690 = vmatpush.bf16.msra.mxu0 0
        %1691 = vmatpush.bf16.msra.mxu0 0
        %1692 = vmatpush.bf16.msra.mxu0 0
        %1693 = vmatpush.bf16.msra.mxu0 0
        %1694 = vmatpush.bf16.msra.mxu0 0
        %1695 = vmatpush.bf16.msra.mxu0 %v1686
        %1696 = vmatpush.bf16.msra.mxu0 %v1685
        %1697 = vmatmul.bf16.gmra.mxu0 %v1652
        %v1698 = vpop.f32.mrf.mxu0
        %v1699 = vadd.f32 %v1675, %v1698
        %v1700 = vpop.f32.mrf.mxu0
        %1701 = vdwg.mxu0
        %s1702 = scalar_lea.vmem %s1, 80
        %v1703 = vld [vmem:[%s1702] sm:$0xf]
        %v1704 = vld [vmem:[%s1702 + $0x4] sm:$0xf]
        %v1705 = vld [vmem:[%s1702 + $0x8] sm:$0xf]
        %v1706 = vld [vmem:[%s1702 + $0xc] sm:$0xf]
        %s1707 = scalar_lea.vmem [#allocation5], 5
        %v1708 = vld [vmem:[%s1707] sm:$0x1]
        %v1710 = vperm.slane %v1708, 0
        %v1716 = vunpack.c.l.b16 %v1703
        %v1717 = vunpack.c.l.b16 %v1704
        %v1718 = vunpack.c.l.b16 %v1705
        %v1719 = vunpack.c.l.b16 %v1706
        %v1720 = vpack.c.b16 %v1717, %v1716
        %v1721 = vpack.c.b16 %v1719, %v1718
        %1724 = vmatpush.bf16.msra.mxu0 0
        %1725 = vmatpush.bf16.msra.mxu0 0
        %1726 = vmatpush.bf16.msra.mxu0 0
        %1727 = vmatpush.bf16.msra.mxu0 0
        %1728 = vmatpush.bf16.msra.mxu0 0
        %1729 = vmatpush.bf16.msra.mxu0 0
        %1730 = vmatpush.bf16.msra.mxu0 %v1721
        %1731 = vmatpush.bf16.msra.mxu0 %v1720
        %1732 = vmatmul.bf16.gmra.mxu0 %v1652
        %v1733 = vpop.f32.mrf.mxu0
        %v1734 = vadd.f32 %v1710, %v1733
        %v1735 = vpop.f32.mrf.mxu0
        %1736 = vdwg.mxu0
        %1738 = vrot.lane.b32.xlu0 %v1664, 120
        %v1739 = vpop.permute.xlu0 %1738
        %1740 = vrot.lane.b32.xlu0 %v1664, 112
        %v1741 = vpop.permute.xlu0 %1740
        %1742 = vrot.lane.b32.xlu0 %v1664, 104
        %v1743 = vpop.permute.xlu0 %1742
        %1745 = vrot.lane.b32.xlu0 %v1699, 120
        %v1746 = vpop.permute.xlu0 %1745
        %1748 = vrot.lane.b32.xlu0 %v1699, 112
        %v1749 = vpop.permute.xlu0 %1748
        %1751 = vrot.lane.b32.xlu0 %v1699, 104
        %v1752 = vpop.permute.xlu0 %1751
        %1755 = vrot.lane.b32.xlu0 %v1734, 120
        %v1756 = vpop.permute.xlu0 %1755
        %1758 = vrot.lane.b32.xlu0 %v1734, 112
        %v1759 = vpop.permute.xlu0 %1758
        %1761 = vrot.lane.b32.xlu0 %v1734, 104
        %v1762 = vpop.permute.xlu0 %1761
        %1764 = vxpose.xlu0.b32.start [1/16] %v1699, 128
        %1765 = vxpose.xlu0.b32.cont [2/16] 0.0, 128
        %1766 = vxpose.xlu0.b32.cont [3/16] 0.0, 128
        %1767 = vxpose.xlu0.b32.cont [4/16] 0.0, 128
        %1768 = vxpose.xlu0.b32.cont [5/16] 0.0, 128
        %1769 = vxpose.xlu0.b32.cont [6/16] 0.0, 128
        %1770 = vxpose.xlu0.b32.cont [7/16] 0.0, 128
        %1771 = vxpose.xlu0.b32.cont [8/16] 0.0, 128
        %1772 = vxpose.xlu0.b32.cont [9/16] 0.0, 128
        %1773 = vxpose.xlu0.b32.cont [10/16] 0.0, 128
        %1774 = vxpose.xlu0.b32.cont [11/16] 0.0, 128
        %1775 = vxpose.xlu0.b32.cont [12/16] 0.0, 128
        %1776 = vxpose.xlu0.b32.cont [13/16] 0.0, 128
        %1777 = vxpose.xlu0.b32.cont [14/16] 0.0, 128
        %1778 = vxpose.xlu0.b32.cont [15/16] 0.0, 128
        %1779 = vxpose.xlu0.b32.end [16/16] 0.0, 128
        %v1780 = vpop.trf.xlu0
        %v1781 = vpop.trf.xlu0
        %v1782 = vpop.trf.xlu0
        %v1783 = vpop.trf.xlu0
        %v1784 = vpop.trf.xlu0
        %v1785 = vpop.trf.xlu0
        %v1786 = vpop.trf.xlu0
        %v1787 = vpop.trf.xlu0
        %v1788 = vpop.trf.xlu0
        %v1789 = vpop.trf.xlu0
        %v1790 = vpop.trf.xlu0
        %v1791 = vpop.trf.xlu0
        %v1792 = vpop.trf.xlu0
        %v1793 = vpop.trf.xlu0
        %v1794 = vpop.trf.xlu0
        %v1795 = vpop.trf.xlu0
        %1796 = vxpose.xlu0.b32.start [1/16] %v1746, 128
        %1797 = vxpose.xlu0.b32.cont [2/16] 0.0, 128
        %1798 = vxpose.xlu0.b32.cont [3/16] 0.0, 128
        %1799 = vxpose.xlu0.b32.cont [4/16] 0.0, 128
        %1800 = vxpose.xlu0.b32.cont [5/16] 0.0, 128
        %1801 = vxpose.xlu0.b32.cont [6/16] 0.0, 128
        %1802 = vxpose.xlu0.b32.cont [7/16] 0.0, 128
        %1803 = vxpose.xlu0.b32.cont [8/16] 0.0, 128
        %1804 = vxpose.xlu0.b32.cont [9/16] 0.0, 128
        %1805 = vxpose.xlu0.b32.cont [10/16] 0.0, 128
        %1806 = vxpose.xlu0.b32.cont [11/16] 0.0, 128
        %1807 = vxpose.xlu0.b32.cont [12/16] 0.0, 128
        %1808 = vxpose.xlu0.b32.cont [13/16] 0.0, 128
        %1809 = vxpose.xlu0.b32.cont [14/16] 0.0, 128
        %1810 = vxpose.xlu0.b32.cont [15/16] 0.0, 128
        %1811 = vxpose.xlu0.b32.end [16/16] 0.0, 128
        %v1812 = vpop.trf.xlu0
        %v1813 = vpop.trf.xlu0
        %v1814 = vpop.trf.xlu0
        %v1815 = vpop.trf.xlu0
        %v1816 = vpop.trf.xlu0
        %v1817 = vpop.trf.xlu0
        %v1818 = vpop.trf.xlu0
        %v1819 = vpop.trf.xlu0
        %v1820 = vpop.trf.xlu0
        %v1821 = vpop.trf.xlu0
        %v1822 = vpop.trf.xlu0
        %v1823 = vpop.trf.xlu0
        %v1824 = vpop.trf.xlu0
        %v1825 = vpop.trf.xlu0
        %v1826 = vpop.trf.xlu0
        %v1827 = vpop.trf.xlu0
        %1828 = vxpose.xlu0.b32.start [1/16] %v1749, 128
        %1829 = vxpose.xlu0.b32.cont [2/16] 0.0, 128
        %1830 = vxpose.xlu0.b32.cont [3/16] 0.0, 128
        %1831 = vxpose.xlu0.b32.cont [4/16] 0.0, 128
        %1832 = vxpose.xlu0.b32.cont [5/16] 0.0, 128
        %1833 = vxpose.xlu0.b32.cont [6/16] 0.0, 128
        %1834 = vxpose.xlu0.b32.cont [7/16] 0.0, 128
        %1835 = vxpose.xlu0.b32.cont [8/16] 0.0, 128
        %1836 = vxpose.xlu0.b32.cont [9/16] 0.0, 128
        %1837 = vxpose.xlu0.b32.cont [10/16] 0.0, 128
        %1838 = vxpose.xlu0.b32.cont [11/16] 0.0, 128
        %1839 = vxpose.xlu0.b32.cont [12/16] 0.0, 128
        %1840 = vxpose.xlu0.b32.cont [13/16] 0.0, 128
        %1841 = vxpose.xlu0.b32.cont [14/16] 0.0, 128
        %1842 = vxpose.xlu0.b32.cont [15/16] 0.0, 128
        %1843 = vxpose.xlu0.b32.end [16/16] 0.0, 128
        %v1844 = vpop.trf.xlu0
        %v1845 = vpop.trf.xlu0
        %v1846 = vpop.trf.xlu0
        %v1847 = vpop.trf.xlu0
        %v1848 = vpop.trf.xlu0
        %v1849 = vpop.trf.xlu0
        %v1850 = vpop.trf.xlu0
        %v1851 = vpop.trf.xlu0
        %v1852 = vpop.trf.xlu0
        %v1853 = vpop.trf.xlu0
        %v1854 = vpop.trf.xlu0
        %v1855 = vpop.trf.xlu0
        %v1856 = vpop.trf.xlu0
        %v1857 = vpop.trf.xlu0
        %v1858 = vpop.trf.xlu0
        %v1859 = vpop.trf.xlu0
        %1860 = vxpose.xlu0.b32.start [1/16] %v1752, 128
        %1861 = vxpose.xlu0.b32.cont [2/16] 0.0, 128
        %1862 = vxpose.xlu0.b32.cont [3/16] 0.0, 128
        %1863 = vxpose.xlu0.b32.cont [4/16] 0.0, 128
        %1864 = vxpose.xlu0.b32.cont [5/16] 0.0, 128
        %1865 = vxpose.xlu0.b32.cont [6/16] 0.0, 128
        %1866 = vxpose.xlu0.b32.cont [7/16] 0.0, 128
        %1867 = vxpose.xlu0.b32.cont [8/16] 0.0, 128
        %1868 = vxpose.xlu0.b32.cont [9/16] 0.0, 128
        %1869 = vxpose.xlu0.b32.cont [10/16] 0.0, 128
        %1870 = vxpose.xlu0.b32.cont [11/16] 0.0, 128
        %1871 = vxpose.xlu0.b32.cont [12/16] 0.0, 128
        %1872 = vxpose.xlu0.b32.cont [13/16] 0.0, 128
        %1873 = vxpose.xlu0.b32.cont [14/16] 0.0, 128
        %1874 = vxpose.xlu0.b32.cont [15/16] 0.0, 128
        %1875 = vxpose.xlu0.b32.end [16/16] 0.0, 128
        %v1876 = vpop.trf.xlu0
        %v1877 = vpop.trf.xlu0
        %v1878 = vpop.trf.xlu0
        %v1879 = vpop.trf.xlu0
        %v1880 = vpop.trf.xlu0
        %v1881 = vpop.trf.xlu0
        %v1882 = vpop.trf.xlu0
        %v1883 = vpop.trf.xlu0
        %v1884 = vpop.trf.xlu0
        %v1885 = vpop.trf.xlu0
        %v1886 = vpop.trf.xlu0
        %v1887 = vpop.trf.xlu0
        %v1888 = vpop.trf.xlu0
        %v1889 = vpop.trf.xlu0
        %v1890 = vpop.trf.xlu0
        %v1891 = vpop.trf.xlu0
        %v1892 = vsel %vm773, %v1664, 0
        %1894 = vmatpush.msra.mxu0 0.0
        %1895 = vmatpush.msra.mxu0 0.0
        %1896 = vmatpush.msra.mxu0 0.0
        %1897 = vmatpush.msra.mxu0 0.0
        %1898 = vmatpush.msra.mxu0 0.0
        %1899 = vmatpush.msra.mxu0 0.0
        %1900 = vmatpush.msra.mxu0 0.0
        %1901 = vmatpush.msra.mxu0 0.0
        %1902 = vmatpush.msra.mxu0 0.0
        %1903 = vmatpush.msra.mxu0 0.0
        %1904 = vmatpush.msra.mxu0 0.0
        %1905 = vmatpush.msra.mxu0 0.0
        %1906 = vmatpush.msra.mxu0 0.0
        %1907 = vmatpush.msra.mxu0 0.0
        %1908 = vmatpush.msra.mxu0 0.0
        %1909 = vmatpush.msra.mxu0 %v1780
        %1910 = vmatmul.f32.gmra.mxu0 %v1892
        %v1911 = vpop.f32.mrf.mxu0
        %v1912 = vadd.f32 0.0, %v1911
        %1913 = vdwg.mxu0
        %v1914 = vsel %vm773, %v1739, 0
        %1916 = vmatpush.msra.mxu0 0.0
        %1917 = vmatpush.msra.mxu0 0.0
        %1918 = vmatpush.msra.mxu0 0.0
        %1919 = vmatpush.msra.mxu0 0.0
        %1920 = vmatpush.msra.mxu0 0.0
        %1921 = vmatpush.msra.mxu0 0.0
        %1922 = vmatpush.msra.mxu0 0.0
        %1923 = vmatpush.msra.mxu0 0.0
        %1924 = vmatpush.msra.mxu0 0.0
        %1925 = vmatpush.msra.mxu0 0.0
        %1926 = vmatpush.msra.mxu0 0.0
        %1927 = vmatpush.msra.mxu0 0.0
        %1928 = vmatpush.msra.mxu0 0.0
        %1929 = vmatpush.msra.mxu0 0.0
        %1930 = vmatpush.msra.mxu0 0.0
        %1931 = vmatpush.msra.mxu0 %v1812
        %1932 = vmatmul.f32.gmra.mxu0 %v1914
        %v1933 = vpop.f32.mrf.mxu0
        %v1934 = vadd.f32 0.0, %v1933
        %1935 = vdwg.mxu0
        %v1936 = vsel %vm773, %v1741, 0
        %1938 = vmatpush.msra.mxu0 0.0
        %1939 = vmatpush.msra.mxu0 0.0
        %1940 = vmatpush.msra.mxu0 0.0
        %1941 = vmatpush.msra.mxu0 0.0
        %1942 = vmatpush.msra.mxu0 0.0
        %1943 = vmatpush.msra.mxu0 0.0
        %1944 = vmatpush.msra.mxu0 0.0
        %1945 = vmatpush.msra.mxu0 0.0
        %1946 = vmatpush.msra.mxu0 0.0
        %1947 = vmatpush.msra.mxu0 0.0
        %1948 = vmatpush.msra.mxu0 0.0
        %1949 = vmatpush.msra.mxu0 0.0
        %1950 = vmatpush.msra.mxu0 0.0
        %1951 = vmatpush.msra.mxu0 0.0
        %1952 = vmatpush.msra.mxu0 0.0
        %1953 = vmatpush.msra.mxu0 %v1844
        %1954 = vmatmul.f32.gmra.mxu0 %v1936
        %v1955 = vpop.f32.mrf.mxu0
        %v1956 = vadd.f32 0.0, %v1955
        %1957 = vdwg.mxu0
        %v1958 = vsel %vm773, %v1743, 0
        %1960 = vmatpush.msra.mxu0 0.0
        %1961 = vmatpush.msra.mxu0 0.0
        %1962 = vmatpush.msra.mxu0 0.0
        %1963 = vmatpush.msra.mxu0 0.0
        %1964 = vmatpush.msra.mxu0 0.0
        %1965 = vmatpush.msra.mxu0 0.0
        %1966 = vmatpush.msra.mxu0 0.0
        %1967 = vmatpush.msra.mxu0 0.0
        %1968 = vmatpush.msra.mxu0 0.0
        %1969 = vmatpush.msra.mxu0 0.0
        %1970 = vmatpush.msra.mxu0 0.0
        %1971 = vmatpush.msra.mxu0 0.0
        %1972 = vmatpush.msra.mxu0 0.0
        %1973 = vmatpush.msra.mxu0 0.0
        %1974 = vmatpush.msra.mxu0 0.0
        %1975 = vmatpush.msra.mxu0 %v1876
        %1976 = vmatmul.f32.gmra.mxu0 %v1958
        %v1977 = vpop.f32.mrf.mxu0
        %v1978 = vadd.f32 0.0, %v1977
        %1979 = vdwg.mxu0
        %v1980 = vmul.f32 %v1912, 0.17677669
        %v1981 = vmul.f32 %v1934, 0.17677669
        %v1982 = vmul.f32 %v1956, 0.17677669
        %v1983 = vmul.f32 %v1978, 0.17677669
        %v1984 = vsel %vm773, %v1980, -inf
        %1985 = vmax.xlane.f32.xlu0 %v1984
        %v1986 = vpop.xlane.xlu0 %1985
        %v1987 = vsel %vm773, %v1981, -inf
        %1988 = vmax.xlane.f32.xlu0 %v1987
        %v1989 = vpop.xlane.xlu0 %1988
        %v1990 = vsel %vm773, %v1982, -inf
        %1991 = vmax.xlane.f32.xlu0 %v1990
        %v1992 = vpop.xlane.xlu0 %1991
        %v1993 = vsel %vm773, %v1983, -inf
        %1994 = vmax.xlane.f32.xlu0 %v1993
        %v1995 = vpop.xlane.xlu0 %1994
        %v1996 = vsub.f32 %v1980, %v1986
        %v1997 = vsub.f32 %v1981, %v1989
        %v1998 = vsub.f32 %v1982, %v1992
        %v1999 = vsub.f32 %v1983, %v1995
        %v2000 = vmul.f32 %v1996, 1.442695
        %v2001 = vpow.pop %v2000
        %v2002 = vmul.f32 %v1997, 1.442695
        %v2003 = vpow.pop %v2002
        %v2004 = vmul.f32 %v1998, 1.442695
        %v2005 = vpow.pop %v2004
        %v2006 = vmul.f32 %v1999, 1.442695
        %v2007 = vpow.pop %v2006
        %v2008 = vsel %vm773, %v2001, 0.0
        %2009 = vadd.xlane.f32.xlu0 %v2008
        %v2010 = vpop.xlane.xlu0 %2009
        %v2011 = vsel %vm773, %v2003, 0.0
        %2012 = vadd.xlane.f32.xlu0 %v2011
        %v2013 = vpop.xlane.xlu0 %2012
        %v2014 = vsel %vm773, %v2005, 0.0
        %2015 = vadd.xlane.f32.xlu0 %v2014
        %v2016 = vpop.xlane.xlu0 %2015
        %v2017 = vsel %vm773, %v2007, 0.0
        %2018 = vadd.xlane.f32.xlu0 %v2017
        %v2019 = vpop.xlane.xlu0 %2018
        %v2020 = vrcp.pop %v2010
        %v2021 = vrcp.pop %v2013
        %v2022 = vrcp.pop %v2016
        %v2023 = vrcp.pop %v2019
        %v2024 = vmul.f32 %v2001, %v2020
        %v2025 = vmul.f32 %v2003, %v2021
        %v2026 = vmul.f32 %v2005, %v2022
        %v2027 = vmul.f32 %v2007, %v2023
        %2028 = vxpose.xlu0.b32.start [1/16] %v1734, 128
        %2029 = vxpose.xlu0.b32.cont [2/16] 0.0, 128
        %2030 = vxpose.xlu0.b32.cont [3/16] 0.0, 128
        %2031 = vxpose.xlu0.b32.cont [4/16] 0.0, 128
        %2032 = vxpose.xlu0.b32.cont [5/16] 0.0, 128
        %2033 = vxpose.xlu0.b32.cont [6/16] 0.0, 128
        %2034 = vxpose.xlu0.b32.cont [7/16] 0.0, 128
        %2035 = vxpose.xlu0.b32.cont [8/16] 0.0, 128
        %2036 = vxpose.xlu0.b32.cont [9/16] 0.0, 128
        %2037 = vxpose.xlu0.b32.cont [10/16] 0.0, 128
        %2038 = vxpose.xlu0.b32.cont [11/16] 0.0, 128
        %2039 = vxpose.xlu0.b32.cont [12/16] 0.0, 128
        %2040 = vxpose.xlu0.b32.cont [13/16] 0.0, 128
        %2041 = vxpose.xlu0.b32.cont [14/16] 0.0, 128
        %2042 = vxpose.xlu0.b32.cont [15/16] 0.0, 128
        %2043 = vxpose.xlu0.b32.end [16/16] 0.0, 128
        %v2044 = vpop.trf.xlu0
        %v2045 = vpop.trf.xlu0
        %v2046 = vpop.trf.xlu0
        %v2047 = vpop.trf.xlu0
        %v2048 = vpop.trf.xlu0
        %v2049 = vpop.trf.xlu0
        %v2050 = vpop.trf.xlu0
        %v2051 = vpop.trf.xlu0
        %v2052 = vpop.trf.xlu0
        %v2053 = vpop.trf.xlu0
        %v2054 = vpop.trf.xlu0
        %v2055 = vpop.trf.xlu0
        %v2056 = vpop.trf.xlu0
        %v2057 = vpop.trf.xlu0
        %v2058 = vpop.trf.xlu0
        %v2059 = vpop.trf.xlu0
        %2060 = vxpose.xlu0.b32.start [1/16] %v1756, 128
        %2061 = vxpose.xlu0.b32.cont [2/16] 0.0, 128
        %2062 = vxpose.xlu0.b32.cont [3/16] 0.0, 128
        %2063 = vxpose.xlu0.b32.cont [4/16] 0.0, 128
        %2064 = vxpose.xlu0.b32.cont [5/16] 0.0, 128
        %2065 = vxpose.xlu0.b32.cont [6/16] 0.0, 128
        %2066 = vxpose.xlu0.b32.cont [7/16] 0.0, 128
        %2067 = vxpose.xlu0.b32.cont [8/16] 0.0, 128
        %2068 = vxpose.xlu0.b32.cont [9/16] 0.0, 128
        %2069 = vxpose.xlu0.b32.cont [10/16] 0.0, 128
        %2070 = vxpose.xlu0.b32.cont [11/16] 0.0, 128
        %2071 = vxpose.xlu0.b32.cont [12/16] 0.0, 128
        %2072 = vxpose.xlu0.b32.cont [13/16] 0.0, 128
        %2073 = vxpose.xlu0.b32.cont [14/16] 0.0, 128
        %2074 = vxpose.xlu0.b32.cont [15/16] 0.0, 128
        %2075 = vxpose.xlu0.b32.end [16/16] 0.0, 128
        %v2076 = vpop.trf.xlu0
        %v2077 = vpop.trf.xlu0
        %v2078 = vpop.trf.xlu0
        %v2079 = vpop.trf.xlu0
        %v2080 = vpop.trf.xlu0
        %v2081 = vpop.trf.xlu0
        %v2082 = vpop.trf.xlu0
        %v2083 = vpop.trf.xlu0
        %v2084 = vpop.trf.xlu0
        %v2085 = vpop.trf.xlu0
        %v2086 = vpop.trf.xlu0
        %v2087 = vpop.trf.xlu0
        %v2088 = vpop.trf.xlu0
        %v2089 = vpop.trf.xlu0
        %v2090 = vpop.trf.xlu0
        %v2091 = vpop.trf.xlu0
        %2092 = vxpose.xlu0.b32.start [1/16] %v1759, 128
        %2093 = vxpose.xlu0.b32.cont [2/16] 0.0, 128
        %2094 = vxpose.xlu0.b32.cont [3/16] 0.0, 128
        %2095 = vxpose.xlu0.b32.cont [4/16] 0.0, 128
        %2096 = vxpose.xlu0.b32.cont [5/16] 0.0, 128
        %2097 = vxpose.xlu0.b32.cont [6/16] 0.0, 128
        %2098 = vxpose.xlu0.b32.cont [7/16] 0.0, 128
        %2099 = vxpose.xlu0.b32.cont [8/16] 0.0, 128
        %2100 = vxpose.xlu0.b32.cont [9/16] 0.0, 128
        %2101 = vxpose.xlu0.b32.cont [10/16] 0.0, 128
        %2102 = vxpose.xlu0.b32.cont [11/16] 0.0, 128
        %2103 = vxpose.xlu0.b32.cont [12/16] 0.0, 128
        %2104 = vxpose.xlu0.b32.cont [13/16] 0.0, 128
        %2105 = vxpose.xlu0.b32.cont [14/16] 0.0, 128
        %2106 = vxpose.xlu0.b32.cont [15/16] 0.0, 128
        %2107 = vxpose.xlu0.b32.end [16/16] 0.0, 128
        %v2108 = vpop.trf.xlu0
        %v2109 = vpop.trf.xlu0
        %v2110 = vpop.trf.xlu0
        %v2111 = vpop.trf.xlu0
        %v2112 = vpop.trf.xlu0
        %v2113 = vpop.trf.xlu0
        %v2114 = vpop.trf.xlu0
        %v2115 = vpop.trf.xlu0
        %v2116 = vpop.trf.xlu0
        %v2117 = vpop.trf.xlu0
        %v2118 = vpop.trf.xlu0
        %v2119 = vpop.trf.xlu0
        %v2120 = vpop.trf.xlu0
        %v2121 = vpop.trf.xlu0
        %v2122 = vpop.trf.xlu0
        %v2123 = vpop.trf.xlu0
        %2124 = vxpose.xlu0.b32.start [1/16] %v1762, 128
        %2125 = vxpose.xlu0.b32.cont [2/16] 0.0, 128
        %2126 = vxpose.xlu0.b32.cont [3/16] 0.0, 128
        %2127 = vxpose.xlu0.b32.cont [4/16] 0.0, 128
        %2128 = vxpose.xlu0.b32.cont [5/16] 0.0, 128
        %2129 = vxpose.xlu0.b32.cont [6/16] 0.0, 128
        %2130 = vxpose.xlu0.b32.cont [7/16] 0.0, 128
        %2131 = vxpose.xlu0.b32.cont [8/16] 0.0, 128
        %2132 = vxpose.xlu0.b32.cont [9/16] 0.0, 128
        %2133 = vxpose.xlu0.b32.cont [10/16] 0.0, 128
        %2134 = vxpose.xlu0.b32.cont [11/16] 0.0, 128
        %2135 = vxpose.xlu0.b32.cont [12/16] 0.0, 128
        %2136 = vxpose.xlu0.b32.cont [13/16] 0.0, 128
        %2137 = vxpose.xlu0.b32.cont [14/16] 0.0, 128
        %2138 = vxpose.xlu0.b32.cont [15/16] 0.0, 128
        %2139 = vxpose.xlu0.b32.end [16/16] 0.0, 128
        %v2140 = vpop.trf.xlu0
        %v2141 = vpop.trf.xlu0
        %v2142 = vpop.trf.xlu0
        %v2143 = vpop.trf.xlu0
        %v2144 = vpop.trf.xlu0
        %v2145 = vpop.trf.xlu0
        %v2146 = vpop.trf.xlu0
        %v2147 = vpop.trf.xlu0
        %v2148 = vpop.trf.xlu0
        %v2149 = vpop.trf.xlu0
        %v2150 = vpop.trf.xlu0
        %v2151 = vpop.trf.xlu0
        %v2152 = vpop.trf.xlu0
        %v2153 = vpop.trf.xlu0
        %v2154 = vpop.trf.xlu0
        %v2155 = vpop.trf.xlu0
        %v2157 = vsel %vm773, %v2044, 0
        %v2160 = vsel %vm773, %v2024, 0
        %2162 = vmatpush.xpose.msra.mxu0 0.0
        %2163 = vmatpush.xpose.msra.mxu0 0.0
        %2164 = vmatpush.xpose.msra.mxu0 0.0
        %2165 = vmatpush.xpose.msra.mxu0 0.0
        %2166 = vmatpush.xpose.msra.mxu0 0.0
        %2167 = vmatpush.xpose.msra.mxu0 0.0
        %2168 = vmatpush.xpose.msra.mxu0 0.0
        %2169 = vmatpush.xpose.msra.mxu0 0.0
        %2170 = vmatpush.xpose.msra.mxu0 0.0
        %2171 = vmatpush.xpose.msra.mxu0 0.0
        %2172 = vmatpush.xpose.msra.mxu0 0.0
        %2173 = vmatpush.xpose.msra.mxu0 0.0
        %2174 = vmatpush.xpose.msra.mxu0 0.0
        %2175 = vmatpush.xpose.msra.mxu0 0.0
        %2176 = vmatpush.xpose.msra.mxu0 0.0
        %2177 = vmatpush.xpose.msra.mxu0 %v2160
        %2178 = vmatmul.f32.gmra.mxu0 %v2157
        %v2179 = vpop.f32.mrf.mxu0
        %v2180 = vadd.f32 0.0, %v2179
        %2181 = vdwg.mxu0
        %v2183 = vsel %vm773, %v2076, 0
        %v2186 = vsel %vm773, %v2025, 0
        %2188 = vmatpush.xpose.msra.mxu0 0.0
        %2189 = vmatpush.xpose.msra.mxu0 0.0
        %2190 = vmatpush.xpose.msra.mxu0 0.0
        %2191 = vmatpush.xpose.msra.mxu0 0.0
        %2192 = vmatpush.xpose.msra.mxu0 0.0
        %2193 = vmatpush.xpose.msra.mxu0 0.0
        %2194 = vmatpush.xpose.msra.mxu0 0.0
        %2195 = vmatpush.xpose.msra.mxu0 0.0
        %2196 = vmatpush.xpose.msra.mxu0 0.0
        %2197 = vmatpush.xpose.msra.mxu0 0.0
        %2198 = vmatpush.xpose.msra.mxu0 0.0
        %2199 = vmatpush.xpose.msra.mxu0 0.0
        %2200 = vmatpush.xpose.msra.mxu0 0.0
        %2201 = vmatpush.xpose.msra.mxu0 0.0
        %2202 = vmatpush.xpose.msra.mxu0 0.0
        %2203 = vmatpush.xpose.msra.mxu0 %v2186
        %2204 = vmatmul.f32.gmra.mxu0 %v2183
        %v2205 = vpop.f32.mrf.mxu0
        %v2206 = vadd.f32 0.0, %v2205
        %2207 = vdwg.mxu0
        %v2209 = vsel %vm773, %v2108, 0
        %v2212 = vsel %vm773, %v2026, 0
        %2214 = vmatpush.xpose.msra.mxu0 0.0
        %2215 = vmatpush.xpose.msra.mxu0 0.0
        %2216 = vmatpush.xpose.msra.mxu0 0.0
        %2217 = vmatpush.xpose.msra.mxu0 0.0
        %2218 = vmatpush.xpose.msra.mxu0 0.0
        %2219 = vmatpush.xpose.msra.mxu0 0.0
        %2220 = vmatpush.xpose.msra.mxu0 0.0
        %2221 = vmatpush.xpose.msra.mxu0 0.0
        %2222 = vmatpush.xpose.msra.mxu0 0.0
        %2223 = vmatpush.xpose.msra.mxu0 0.0
        %2224 = vmatpush.xpose.msra.mxu0 0.0
        %2225 = vmatpush.xpose.msra.mxu0 0.0
        %2226 = vmatpush.xpose.msra.mxu0 0.0
        %2227 = vmatpush.xpose.msra.mxu0 0.0
        %2228 = vmatpush.xpose.msra.mxu0 0.0
        %2229 = vmatpush.xpose.msra.mxu0 %v2212
        %2230 = vmatmul.f32.gmra.mxu0 %v2209
        %v2231 = vpop.f32.mrf.mxu0
        %v2232 = vadd.f32 0.0, %v2231
        %2233 = vdwg.mxu0
        %v2235 = vsel %vm773, %v2140, 0
        %v2238 = vsel %vm773, %v2027, 0
        %2240 = vmatpush.xpose.msra.mxu0 0.0
        %2241 = vmatpush.xpose.msra.mxu0 0.0
        %2242 = vmatpush.xpose.msra.mxu0 0.0
        %2243 = vmatpush.xpose.msra.mxu0 0.0
        %2244 = vmatpush.xpose.msra.mxu0 0.0
        %2245 = vmatpush.xpose.msra.mxu0 0.0
        %2246 = vmatpush.xpose.msra.mxu0 0.0
        %2247 = vmatpush.xpose.msra.mxu0 0.0
        %2248 = vmatpush.xpose.msra.mxu0 0.0
        %2249 = vmatpush.xpose.msra.mxu0 0.0
        %2250 = vmatpush.xpose.msra.mxu0 0.0
        %2251 = vmatpush.xpose.msra.mxu0 0.0
        %2252 = vmatpush.xpose.msra.mxu0 0.0
        %2253 = vmatpush.xpose.msra.mxu0 0.0
        %2254 = vmatpush.xpose.msra.mxu0 0.0
        %2255 = vmatpush.xpose.msra.mxu0 %v2238
        %2256 = vmatmul.f32.gmra.mxu0 %v2235
        %v2257 = vpop.f32.mrf.mxu0
        %v2258 = vadd.f32 0.0, %v2257
        %2259 = vdwg.mxu0
        %2260 = vxpose.xlu0.b32.start [1/16] %v2180, 128
        %2261 = vxpose.xlu0.b32.cont [2/16] 0.0, 128
        %2262 = vxpose.xlu0.b32.cont [3/16] 0.0, 128
        %2263 = vxpose.xlu0.b32.cont [4/16] 0.0, 128
        %2264 = vxpose.xlu0.b32.cont [5/16] 0.0, 128
        %2265 = vxpose.xlu0.b32.cont [6/16] 0.0, 128
        %2266 = vxpose.xlu0.b32.cont [7/16] 0.0, 128
        %2267 = vxpose.xlu0.b32.cont [8/16] 0.0, 128
        %2268 = vxpose.xlu0.b32.cont [9/16] 0.0, 128
        %2269 = vxpose.xlu0.b32.cont [10/16] 0.0, 128
        %2270 = vxpose.xlu0.b32.cont [11/16] 0.0, 128
        %2271 = vxpose.xlu0.b32.cont [12/16] 0.0, 128
        %2272 = vxpose.xlu0.b32.cont [13/16] 0.0, 128
        %2273 = vxpose.xlu0.b32.cont [14/16] 0.0, 128
        %2274 = vxpose.xlu0.b32.cont [15/16] 0.0, 128
        %2275 = vxpose.xlu0.b32.end [16/16] 0.0, 128
        %v2276 = vpop.trf.xlu0
        %v2277 = vpop.trf.xlu0
        %v2278 = vpop.trf.xlu0
        %v2279 = vpop.trf.xlu0
        %v2280 = vpop.trf.xlu0
        %v2281 = vpop.trf.xlu0
        %v2282 = vpop.trf.xlu0
        %v2283 = vpop.trf.xlu0
        %v2284 = vpop.trf.xlu0
        %v2285 = vpop.trf.xlu0
        %v2286 = vpop.trf.xlu0
        %v2287 = vpop.trf.xlu0
        %v2288 = vpop.trf.xlu0
        %v2289 = vpop.trf.xlu0
        %v2290 = vpop.trf.xlu0
        %v2291 = vpop.trf.xlu0
        %2292 = vxpose.xlu0.b32.start [1/16] %v2206, 128
        %2293 = vxpose.xlu0.b32.cont [2/16] 0.0, 128
        %2294 = vxpose.xlu0.b32.cont [3/16] 0.0, 128
        %2295 = vxpose.xlu0.b32.cont [4/16] 0.0, 128
        %2296 = vxpose.xlu0.b32.cont [5/16] 0.0, 128
        %2297 = vxpose.xlu0.b32.cont [6/16] 0.0, 128
        %2298 = vxpose.xlu0.b32.cont [7/16] 0.0, 128
        %2299 = vxpose.xlu0.b32.cont [8/16] 0.0, 128
        %2300 = vxpose.xlu0.b32.cont [9/16] 0.0, 128
        %2301 = vxpose.xlu0.b32.cont [10/16] 0.0, 128
        %2302 = vxpose.xlu0.b32.cont [11/16] 0.0, 128
        %2303 = vxpose.xlu0.b32.cont [12/16] 0.0, 128
        %2304 = vxpose.xlu0.b32.cont [13/16] 0.0, 128
        %2305 = vxpose.xlu0.b32.cont [14/16] 0.0, 128
        %2306 = vxpose.xlu0.b32.cont [15/16] 0.0, 128
        %2307 = vxpose.xlu0.b32.end [16/16] 0.0, 128
        %v2308 = vpop.trf.xlu0
        %v2309 = vpop.trf.xlu0
        %v2310 = vpop.trf.xlu0
        %v2311 = vpop.trf.xlu0
        %v2312 = vpop.trf.xlu0
        %v2313 = vpop.trf.xlu0
        %v2314 = vpop.trf.xlu0
        %v2315 = vpop.trf.xlu0
        %v2316 = vpop.trf.xlu0
        %v2317 = vpop.trf.xlu0
        %v2318 = vpop.trf.xlu0
        %v2319 = vpop.trf.xlu0
        %v2320 = vpop.trf.xlu0
        %v2321 = vpop.trf.xlu0
        %v2322 = vpop.trf.xlu0
        %v2323 = vpop.trf.xlu0
        %2324 = vxpose.xlu0.b32.start [1/16] %v2232, 128
        %2325 = vxpose.xlu0.b32.cont [2/16] 0.0, 128
        %2326 = vxpose.xlu0.b32.cont [3/16] 0.0, 128
        %2327 = vxpose.xlu0.b32.cont [4/16] 0.0, 128
        %2328 = vxpose.xlu0.b32.cont [5/16] 0.0, 128
        %2329 = vxpose.xlu0.b32.cont [6/16] 0.0, 128
        %2330 = vxpose.xlu0.b32.cont [7/16] 0.0, 128
        %2331 = vxpose.xlu0.b32.cont [8/16] 0.0, 128
        %2332 = vxpose.xlu0.b32.cont [9/16] 0.0, 128
        %2333 = vxpose.xlu0.b32.cont [10/16] 0.0, 128
        %2334 = vxpose.xlu0.b32.cont [11/16] 0.0, 128
        %2335 = vxpose.xlu0.b32.cont [12/16] 0.0, 128
        %2336 = vxpose.xlu0.b32.cont [13/16] 0.0, 128
        %2337 = vxpose.xlu0.b32.cont [14/16] 0.0, 128
        %2338 = vxpose.xlu0.b32.cont [15/16] 0.0, 128
        %2339 = vxpose.xlu0.b32.end [16/16] 0.0, 128
        %v2340 = vpop.trf.xlu0
        %v2341 = vpop.trf.xlu0
        %v2342 = vpop.trf.xlu0
        %v2343 = vpop.trf.xlu0
        %v2344 = vpop.trf.xlu0
        %v2345 = vpop.trf.xlu0
        %v2346 = vpop.trf.xlu0
        %v2347 = vpop.trf.xlu0
        %v2348 = vpop.trf.xlu0
        %v2349 = vpop.trf.xlu0
        %v2350 = vpop.trf.xlu0
        %v2351 = vpop.trf.xlu0
        %v2352 = vpop.trf.xlu0
        %v2353 = vpop.trf.xlu0
        %v2354 = vpop.trf.xlu0
        %v2355 = vpop.trf.xlu0
        %2356 = vxpose.xlu0.b32.start [1/16] %v2258, 128
        %2357 = vxpose.xlu0.b32.cont [2/16] 0.0, 128
        %2358 = vxpose.xlu0.b32.cont [3/16] 0.0, 128
        %2359 = vxpose.xlu0.b32.cont [4/16] 0.0, 128
        %2360 = vxpose.xlu0.b32.cont [5/16] 0.0, 128
        %2361 = vxpose.xlu0.b32.cont [6/16] 0.0, 128
        %2362 = vxpose.xlu0.b32.cont [7/16] 0.0, 128
        %2363 = vxpose.xlu0.b32.cont [8/16] 0.0, 128
        %2364 = vxpose.xlu0.b32.cont [9/16] 0.0, 128
        %2365 = vxpose.xlu0.b32.cont [10/16] 0.0, 128
        %2366 = vxpose.xlu0.b32.cont [11/16] 0.0, 128
        %2367 = vxpose.xlu0.b32.cont [12/16] 0.0, 128
        %2368 = vxpose.xlu0.b32.cont [13/16] 0.0, 128
        %2369 = vxpose.xlu0.b32.cont [14/16] 0.0, 128
        %2370 = vxpose.xlu0.b32.cont [15/16] 0.0, 128
        %2371 = vxpose.xlu0.b32.end [16/16] 0.0, 128
        %v2372 = vpop.trf.xlu0
        %v2373 = vpop.trf.xlu0
        %v2374 = vpop.trf.xlu0
        %v2375 = vpop.trf.xlu0
        %v2376 = vpop.trf.xlu0
        %v2377 = vpop.trf.xlu0
        %v2378 = vpop.trf.xlu0
        %v2379 = vpop.trf.xlu0
        %v2380 = vpop.trf.xlu0
        %v2381 = vpop.trf.xlu0
        %v2382 = vpop.trf.xlu0
        %v2383 = vpop.trf.xlu0
        %v2384 = vpop.trf.xlu0
        %v2385 = vpop.trf.xlu0
        %v2386 = vpop.trf.xlu0
        %v2387 = vpop.trf.xlu0
        %v2388 = vrot.slane %v2340, 4
        %v2389 = vsel %vm1271, %v2388, %v2276
        %v2390 = vrot.slane %v2276, 4
        %v2391 = vsel %vm1271, %v2340, %v2390
        %v2393 = vunpack.c.l.s4 1983009808
        %v2394 = vunpack.c.0.s8 %v2393
        %v2395 = vperm.slane %v2389, %v2394
        %v2397 = vunpack.c.l.s4 1983009808
        %v2398 = vunpack.c.0.s8 %v2397
        %v2399 = vperm.slane %v2391, %v2398
        %v2400 = vrot.slane %v2372, 4
        %v2401 = vsel %vm1271, %v2400, %v2308
        %v2402 = vrot.slane %v2308, 4
        %v2403 = vsel %vm1271, %v2372, %v2402
        %v2405 = vunpack.c.l.s4 1983009808
        %v2406 = vunpack.c.0.s8 %v2405
        %v2407 = vperm.slane %v2401, %v2406
        %v2409 = vunpack.c.l.s4 1983009808
        %v2410 = vunpack.c.0.s8 %v2409
        %v2411 = vperm.slane %v2403, %v2410
        %v2412 = vrot.slane %v2407, 4
        %v2413 = vsel %vm1271, %v2412, %v2395
        %v2414 = vrot.slane %v2395, 4
        %v2415 = vsel %vm1271, %v2407, %v2414
        %v2417 = vunpack.c.l.s4 1934713408
        %v2418 = vunpack.c.0.s8 %v2417
        %v2419 = vperm.slane %v2413, %v2418
        %v2421 = vunpack.c.l.s4 1934713408
        %v2422 = vunpack.c.0.s8 %v2421
        %v2423 = vperm.slane %v2415, %v2422
        %v2424 = vrot.slane %v2411, 4
        %v2425 = vsel %vm1271, %v2424, %v2399
        %v2426 = vrot.slane %v2399, 4
        %v2427 = vsel %vm1271, %v2411, %v2426
        %v2429 = vunpack.c.l.s4 1934713408
        %v2430 = vunpack.c.0.s8 %v2429
        %v2431 = vperm.slane %v2425, %v2430
        %v2433 = vunpack.c.l.s4 1934713408
        %v2434 = vunpack.c.0.s8 %v2433
        %v2435 = vperm.slane %v2427, %v2434
        %v2436 = vrot.slane %v2419, 4
        %v2437 = vsel %vm1271, 0.0, %v2436
        %v2438 = vrot.slane %v2423, 4
        %v2439 = vsel %vm1271, 0.0, %v2438
        %v2440 = vrot.slane %v2431, 4
        %v2441 = vsel %vm1271, 0.0, %v2440
        %v2442 = vrot.slane %v2435, 4
        %v2443 = vsel %vm1271, 0.0, %v2442
        %v2444 = vsel %vm1271, %v2438, %v2419
        %v2446 = vunpack.c.l.s4 1983009808
        %v2447 = vunpack.c.0.s8 %v2446
        %v2448 = vperm.slane %v2444, %v2447
        %v2449 = vrot.slane %v2439, 4
        %v2450 = vsel %vm1271, %v2449, %v2437
        %v2452 = vunpack.c.l.s4 1983009808
        %v2453 = vunpack.c.0.s8 %v2452
        %v2454 = vperm.slane %v2450, %v2453
        %v2455 = vsel %vm1271, %v2442, %v2431
        %v2457 = vunpack.c.l.s4 1983009808
        %v2458 = vunpack.c.0.s8 %v2457
        %v2459 = vperm.slane %v2455, %v2458
        %v2460 = vrot.slane %v2443, 4
        %v2461 = vsel %vm1271, %v2460, %v2441
        %v2463 = vunpack.c.l.s4 1983009808
        %v2464 = vunpack.c.0.s8 %v2463
        %v2465 = vperm.slane %v2461, %v2464
        %v2466 = vrot.slane %v2454, 4
        %v2467 = vsel %vm1271, %v2466, %v2448
        %v2468 = vrot.slane %v2448, 4
        %v2469 = vsel %vm1271, %v2454, %v2468
        %v2471 = vunpack.c.l.s4 1934713408
        %v2472 = vunpack.c.0.s8 %v2471
        %v2473 = vperm.slane %v2467, %v2472
        %v2475 = vunpack.c.l.s4 1934713408
        %v2476 = vunpack.c.0.s8 %v2475
        %v2477 = vperm.slane %v2469, %v2476
        %v2478 = vrot.slane %v2465, 4
        %v2479 = vsel %vm1271, %v2478, %v2459
        %v2480 = vrot.slane %v2459, 4
        %v2481 = vsel %vm1271, %v2465, %v2480
        %v2483 = vunpack.c.l.s4 1934713408
        %v2484 = vunpack.c.0.s8 %v2483
        %v2485 = vperm.slane %v2479, %v2484
        %v2487 = vunpack.c.l.s4 1934713408
        %v2488 = vunpack.c.0.s8 %v2487
        %v2489 = vperm.slane %v2481, %v2488
        %v2490 = vrot.slane %v2485, 4
        %v2491 = vsel %vm1271, %v2490, %v2473
        %v2492 = vrot.slane %v2473, 4
        %v2493 = vsel %vm1271, %v2485, %v2492
        %v2494 = vrot.slane %v2489, 4
        %v2495 = vsel %vm1271, %v2494, %v2477
        %v2496 = vrot.slane %v2477, 4
        %v2497 = vsel %vm1271, %v2489, %v2496
        %2499 = vrot.lane.b32.xlu0 %v2493, 8
        %v2500 = vpop.permute.xlu0 %2499
        %2503 = vrot.lane.b32.xlu0 %v2495, 16
        %v2504 = vpop.permute.xlu0 %2503
        %2507 = vrot.lane.b32.xlu0 %v2497, 24
        %v2508 = vpop.permute.xlu0 %2507
        %v2510 = vsel %vm773, %v2491, %v2500
        %v2511 = vsel %vm1394, %v2510, %v2504
        %v2512 = vsel %vm1396, %v2511, %v2508
        %v2513 = vpack.c.bf16 %v2512, %v2512
        %s2514 = scalar_lea.vmem %s3, 16
        %v2515 = vld [vmem:[%s2514] sm:$0xf]
        %v2516 = vld [vmem:[%s2514 + $0x4] sm:$0xf]
        %v2517 = vld [vmem:[%s2514 + $0x8] sm:$0xf]
        %v2518 = vld [vmem:[%s2514 + $0xc] sm:$0xf]
        %s2519 = scalar_lea.vmem %s4, 1
        %v2520 = vld [vmem:[%s2519] sm:$0x1]
        %v2522 = vperm.slane %v2520, 0
        %v2528 = vunpack.c.l.b16 %v2515
        %v2529 = vunpack.c.l.b16 %v2516
        %v2530 = vunpack.c.l.b16 %v2517
        %v2531 = vunpack.c.l.b16 %v2518
        %v2532 = vpack.c.b16 %v2529, %v2528
        %v2533 = vpack.c.b16 %v2531, %v2530
        %v2537 = vsel %vm531, %v2513, 0
        %2539 = vmatpush.bf16.msra.mxu0 0
        %2540 = vmatpush.bf16.msra.mxu0 0
        %2541 = vmatpush.bf16.msra.mxu0 0
        %2542 = vmatpush.bf16.msra.mxu0 0
        %2543 = vmatpush.bf16.msra.mxu0 0
        %2544 = vmatpush.bf16.msra.mxu0 0
        %2545 = vmatpush.bf16.msra.mxu0 %v2533
        %2546 = vmatpush.bf16.msra.mxu0 %v2532
        %2547 = vmatmul.bf16.gmra.mxu0 %v2537
        %v2548 = vpop.f32.mrf.mxu0
        %v2549 = vadd.f32 %v2522, %v2548
        %v2550 = vpop.f32.mrf.mxu0
        %2551 = vdwg.mxu0
        %v2552 = vadd.f32 %v2549, %v1627
        %s2553 = scalar_lea.vmem [#allocation7], 1
        %v2554 = vld [vmem:[%s2553] sm:$0x1]
        %s2555 = scalar_lea.vmem %s6, 1
        %v2556 = vld [vmem:[%s2555] sm:$0x1]
        %v2557 = vsel %vm531, %v2552, 0.0
        %2558 = vadd.xlane.f32.xlu0 %v2557
        %v2559 = vpop.xlane.xlu0 %2558
        %v2560 = vmul.f32 %v2559, %v1447
        %v2561 = vsub.f32 %v2552, %v2560
        %v2562 = vmul.f32 %v2561, %v2561
        %v2563 = vsel %vm531, %v2562, 0.0
        %2564 = vadd.xlane.f32.xlu0 %v2563
        %v2565 = vpop.xlane.xlu0 %2564
        %v2566 = vmul.f32 %v2565, %v1447
        %v2567 = vadd.f32 %v2566, 1e-05
        %v2568 = vrsqrt.pop %v2567
        %v2569 = vmul.f32 %v2568, %v2567
        %v2570 = vmul.f32 %v2569, %v2568
        %v2571 = vmul.f32 0.5, %v2570
        %v2572 = vsub.f32 1.5, %v2571
        %v2573 = vmul.f32 %v2568, %v2572
        %vm2574 = vweird.f32 %v2567
        %vm2575 = vweird.f32 %v2568
        %vm2576 = vmor %vm2574, %vm2575
        %v2577 = vsel %vm2576, %v2568, %v2573
        %v2578 = vmul.f32 %v2561, %v2577
        %v2580 = vperm.slane %v2554, 0
        %v2582 = vmul.f32 %v2578, %v2580
        %v2584 = vperm.slane %v2556, 0
        %v2586 = vadd.f32 %v2582, %v2584
        %v2587 = vpack.c.bf16 %v2586, %v2586
        %s2588 = scalar_lea.vmem %s7, 16
        %v2589 = vld [vmem:[%s2588] sm:$0xf]
        %v2590 = vld [vmem:[%s2588 + $0x4] sm:$0xf]
        %v2591 = vld [vmem:[%s2588 + $0x8] sm:$0xf]
        %v2592 = vld [vmem:[%s2588 + $0xc] sm:$0xf]
        %s2593 = scalar_lea.vmem %s8, 1
        %v2594 = vld [vmem:[%s2593] sm:$0x1]
        %v2596 = vperm.slane %v2594, 0
        %v2602 = vunpack.c.l.b16 %v2589
        %v2603 = vunpack.c.l.b16 %v2590
        %v2604 = vunpack.c.l.b16 %v2591
        %v2605 = vunpack.c.l.b16 %v2592
        %v2606 = vpack.c.b16 %v2603, %v2602
        %v2607 = vpack.c.b16 %v2605, %v2604
        %v2611 = vsel %vm531, %v2587, 0
        %2613 = vmatpush.bf16.msra.mxu0 0
        %2614 = vmatpush.bf16.msra.mxu0 0
        %2615 = vmatpush.bf16.msra.mxu0 0
        %2616 = vmatpush.bf16.msra.mxu0 0
        %2617 = vmatpush.bf16.msra.mxu0 0
        %2618 = vmatpush.bf16.msra.mxu0 0
        %2619 = vmatpush.bf16.msra.mxu0 %v2607
        %2620 = vmatpush.bf16.msra.mxu0 %v2606
        %2621 = vmatmul.bf16.gmra.mxu0 %v2611
        %v2622 = vpop.f32.mrf.mxu0
        %v2623 = vadd.f32 %v2596, %v2622
        %v2624 = vpop.f32.mrf.mxu0
        %2625 = vdwg.mxu0
        %v2626 = vmax.f32 %v2623, 0.0
        %v2627 = vpack.c.bf16 %v2626, %v2626
        %s2628 = scalar_lea.vmem %s9, 64
        %v2629 = vld [vmem:[%s2628] sm:$0xf]
        %v2630 = vld [vmem:[%s2628 + $0x4] sm:$0xf]
        %v2631 = vld [vmem:[%s2628 + $0x8] sm:$0xf]
        %v2632 = vld [vmem:[%s2628 + $0xc] sm:$0xf]
        %v2633 = vld [vmem:[%s2628 + $0x10] sm:$0xf]
        %v2634 = vld [vmem:[%s2628 + $0x14] sm:$0xf]
        %v2635 = vld [vmem:[%s2628 + $0x18] sm:$0xf]
        %v2636 = vld [vmem:[%s2628 + $0x1c] sm:$0xf]
        %v2637 = vld [vmem:[%s2628 + $0x20] sm:$0xf]
        %v2638 = vld [vmem:[%s2628 + $0x24] sm:$0xf]
        %v2639 = vld [vmem:[%s2628 + $0x28] sm:$0xf]
        %v2640 = vld [vmem:[%s2628 + $0x2c] sm:$0xf]
        %v2641 = vld [vmem:[%s2628 + $0x30] sm:$0xf]
        %v2642 = vld [vmem:[%s2628 + $0x34] sm:$0xf]
        %v2643 = vld [vmem:[%s2628 + $0x38] sm:$0xf]
        %v2644 = vld [vmem:[%s2628 + $0x3c] sm:$0xf]
        %s2645 = scalar_lea.vmem %s10, 1
        %v2646 = vld [vmem:[%s2645] sm:$0x1]
        %v2648 = vperm.slane %v2646, 0
        %v2666 = vunpack.c.l.b16 %v2629
        %v2667 = vunpack.c.l.b16 %v2630
        %v2668 = vunpack.c.l.b16 %v2631
        %v2669 = vunpack.c.l.b16 %v2632
        %v2670 = vunpack.c.l.b16 %v2633
        %v2671 = vunpack.c.l.b16 %v2634
        %v2672 = vunpack.c.l.b16 %v2635
        %v2673 = vunpack.c.l.b16 %v2636
        %v2674 = vunpack.c.l.b16 %v2637
        %v2675 = vunpack.c.l.b16 %v2638
        %v2676 = vunpack.c.l.b16 %v2639
        %v2677 = vunpack.c.l.b16 %v2640
        %v2678 = vunpack.c.l.b16 %v2641
        %v2679 = vunpack.c.l.b16 %v2642
        %v2680 = vunpack.c.l.b16 %v2643
        %v2681 = vunpack.c.l.b16 %v2644
        %v2682 = vpack.c.b16 %v2667, %v2666
        %v2683 = vpack.c.b16 %v2669, %v2668
        %v2684 = vpack.c.b16 %v2671, %v2670
        %v2685 = vpack.c.b16 %v2673, %v2672
        %v2686 = vpack.c.b16 %v2675, %v2674
        %v2687 = vpack.c.b16 %v2677, %v2676
        %v2688 = vpack.c.b16 %v2679, %v2678
        %v2689 = vpack.c.b16 %v2681, %v2680
        %2698 = vmatpush.bf16.msra.mxu0 %v2689
        %2699 = vmatpush.bf16.msra.mxu0 %v2688
        %2700 = vmatpush.bf16.msra.mxu0 %v2687
        %2701 = vmatpush.bf16.msra.mxu0 %v2686
        %2702 = vmatpush.bf16.msra.mxu0 %v2685
        %2703 = vmatpush.bf16.msra.mxu0 %v2684
        %2704 = vmatpush.bf16.msra.mxu0 %v2683
        %2705 = vmatpush.bf16.msra.mxu0 %v2682
        %2706 = vmatmul.bf16.gmra.mxu0 %v2627
        %v2707 = vpop.f32.mrf.mxu0
        %v2708 = vadd.f32 %v2648, %v2707
        %v2709 = vpop.f32.mrf.mxu0
        %2710 = vdwg.mxu0
        %v2711 = vadd.f32 %v2708, %v2586
        %s2712 = scalar_lea.vmem [#allocation8], 1
        %v2713 = vld [vmem:[%s2712] sm:$0x1]
        %s2714 = scalar_lea.vmem %s12, 1
        %v2715 = vld [vmem:[%s2714] sm:$0x1]
        %v2716 = vsel %vm531, %v2711, 0.0
        %2717 = vadd.xlane.f32.xlu0 %v2716
        %v2718 = vpop.xlane.xlu0 %2717
        %v2719 = vmul.f32 %v2718, %v1447
        %v2720 = vsub.f32 %v2711, %v2719
        %v2721 = vmul.f32 %v2720, %v2720
        %v2722 = vsel %vm531, %v2721, 0.0
        %2723 = vadd.xlane.f32.xlu0 %v2722
        %v2724 = vpop.xlane.xlu0 %2723
        %v2725 = vmul.f32 %v2724, %v1447
        %v2726 = vadd.f32 %v2725, 1e-05
        %v2727 = vrsqrt.pop %v2726
        %v2728 = vmul.f32 %v2727, %v2726
        %v2729 = vmul.f32 %v2728, %v2727
        %v2730 = vmul.f32 0.5, %v2729
        %v2731 = vsub.f32 1.5, %v2730
        %v2732 = vmul.f32 %v2727, %v2731
        %vm2733 = vweird.f32 %v2726
        %vm2734 = vweird.f32 %v2727
        %vm2735 = vmor %vm2733, %vm2734
        %v2736 = vsel %vm2735, %v2727, %v2732
        %v2737 = vmul.f32 %v2720, %v2736
        %v2739 = vperm.slane %v2713, 0
        %v2741 = vmul.f32 %v2737, %v2739
        %v2743 = vperm.slane %v2715, 0
        %v2745 = vadd.f32 %v2741, %v2743
        %v2746 = vpack.c.bf16 %v2745, %v2745
        %vm2747 = vcmask 257024
        %2748 = vst.msk [vmem:[%s507] sm:$0xf] %vm2747, %v2746
        %s2749 = sand.u32 %s318, 1
        %s2750 = scalar_lea.sflag [#allocation4], %s2749
        %s2751 = sand.u32 %s318, 1
        %s2752 = smul.addr %s2751, 4
        %s2753 = scalar_lea.vmem [#allocation10], %s2752
        // Predicated region
        $region89: #{tpu_custom_call.1} parent=71 // pred_check
          %p2754 = pneg %p328
        $region90: #{tpu_custom_call.1} parent=71 // pred_check_branch
          %2756 = sbr.rel (%p2754) target = $region92
        $region91: #{tpu_custom_call.1} parent=71 // pred_region
          %2758 = vsyncadd %s2750, 0
          %s2759 = smul.addr %s32, 4
          %s2760 = scalar_lea.hbm %s13, %s2759
          %s2762 = sshll.u32 %s2753, 4
          %s2763 = int_to_ptr.vmem [resolvable:$true] %s2762
          %s2764 = sshll.u32 %s2760, 4
          %s2765 = int_to_ptr.hbm [resolvable:$true] %s2764
          %2767 = dma.vmem_to_hbm [thread:$0]  %s2763, 64, %s2765, %s2750
        $region92: #{tpu_custom_call.1} parent=71 // pred_fallthru
          _
      $region72: #{tpu_custom_call.1} parent=5 // pred_fallthru
        _
      %p2768 = scmp.le.s32.totalorder 2, %s27
      // Predicated region
      $region93: #{tpu_custom_call.1} parent=5 // pred_check
        %p2769 = pneg %p2768
      $region94: #{tpu_custom_call.1} parent=5 // pred_check_branch
        %2771 = sbr.rel (%p2769) target = $region96
      $region95: #{tpu_custom_call.1} parent=5 // pred_region
        %s2772 = ssub.s32 %s27, 2
        // Predicated region
        $region97: #{tpu_custom_call.1} parent=95 // pred_check
          %p2773 = pneg %p334
        $region98: #{tpu_custom_call.1} parent=95 // pred_check_branch
          %2775 = sbr.rel (%p2773) target = $region100
        $region99: #{tpu_custom_call.1} parent=95 // pred_region
          %s2776 = sand.u32 %s319, 1
          %s2777 = scalar_lea.sflag [#allocation4], %s2776
          %s2778 = sand.u32 %s319, 1
          %s2779 = smul.addr %s2778, 4
          %s2780 = scalar_lea.vmem [#allocation10], %s2779
          %2782 = dma.done %s2777, 64
        $region100: #{tpu_custom_call.1} parent=95 // pred_fallthru
          _
      $region96: #{tpu_custom_call.1} parent=5 // pred_fallthru
        _
    $region6: #{tpu_custom_call.1} parent=1 // loop_footer
      %s31 = sadd.s32 1, %s27
    $region7: #{tpu_custom_call.1} parent=1 // loop_footer_branch
      %26 = sbr.rel target = $region3
    $region8: #{tpu_custom_call.1} parent=1 // loop_exit
      _
    %2783 = vsyncpa [#allocation3], 1
    %s2784 = scalar_lea.sflag [#allocation3], 1
    %2785 = vsyncpa %s2784, 1
    %2786 = vsyncpa [#allocation6], 1
    %2787 = vsyncpa [#allocation9], 1
    %2788 = vsyncpa [#allocation4], 1
    %s2789 = scalar_lea.sflag [#allocation4], 1
    %2790 = vsyncpa %s2789, 1

</llo_original>
